<compile_context>
chip_gen: v7x
topology: tpu7x:2x2x1
jax: 0.10.0
libtpu: 0.0.40
codegen_flags: <defaults>
</compile_context>

<pallas_src>
import math

import jax
import jax.numpy as jnp
import numpy as np
from jax import lax
from jax.experimental import pallas as pl
from jax.experimental.pallas import tpu as pltpu

# ---- hyperparameters (match the PyTorch module defaults, small test shapes) --
VOCAB = 32
EMBED = 16
MAX_SEQ = 128          # positional-embedding table size
N_HEADS = 2
N_LAYERS = 2
FF = 64
POOL_OUT = 28
EPS = 1e-5             # LayerNorm eps (PyTorch default)
HEAD_DIM = EMBED // N_HEADS
VPAD = 128             # lane-dense padded vocab width for the final store

assert 3 * EMBED <= FF          # bias/LN slab rows are FF wide
assert VOCAB <= VPAD


def _bf16_dot(a, b):
    """(M,K)@(K,N) with bf16 MXU operands, f32 accumulation."""
    return jnp.dot(a.astype(jnp.bfloat16), b.astype(jnp.bfloat16),
                   preferred_element_type=jnp.float32)


def _bf16_dot_nt(a, b):
    """(M,K)x(N,K)->(M,N): contract last dims of both (no explicit transpose)."""
    return lax.dot_general(a.astype(jnp.bfloat16), b.astype(jnp.bfloat16),
                           (((1,), (1,)), ((), ())),
                           preferred_element_type=jnp.float32)


def _layernorm(x, w, b):
    mu = jnp.mean(x, axis=-1, keepdims=True)
    var = jnp.mean((x - mu) ** 2, axis=-1, keepdims=True)
    return (x - mu) * lax.rsqrt(var + EPS) * w + b


def adaptive_avg_pool_matrix(in_len, out_len):
    """Matrix P (out_len, in_len) s.t. P @ x == AdaptiveAvgPool1d(out_len)(x)."""
    P = np.zeros((out_len, in_len), dtype=np.float32)
    for i in range(out_len):
        start = (i * in_len) // out_len
        end = -((-(i + 1) * in_len) // out_len)   # ceil((i+1)*L/out)
        P[i, start:end] = 1.0 / (end - start)
    return P


def transformer_forward(x_emb, kparams):
    """x_emb: (B, S, E) f32 embeddings.  Returns logits (B, POOL_OUT, VOCAB)."""
    B, S, E = x_emb.shape
    (wqkv, wo, w1, w2, lvec, pool_blk, fc1w, fc2w, hvec) = kparams
    x_flat = x_emb.reshape(B * S, E)          # batch stacked on sublanes

    def kernel(x_ref, wqkv_ref, wo_ref, w1_ref, w2_ref, lvec_ref,
               pool_ref, fc1w_ref, fc2w_ref, hvec_ref, out_ref):
        x = x_ref[...]                        # (B*S, E) f32
        h = x
        for l in range(N_LAYERS):
            lv = lvec_ref[l]                  # (8, FF) f32 bias/LN slab
            bqkv = lv[0:1, 0:3 * EMBED]
            bo   = lv[1:2, 0:EMBED]
            b1   = lv[2:3, :]
            b2   = lv[3:4, 0:EMBED]
            ln1w = lv[4:5, 0:EMBED]
            ln1b = lv[5:6, 0:EMBED]
            ln2w = lv[6:7, 0:EMBED]
            ln2b = lv[7:8, 0:EMBED]

            # fused Q/K/V projection for the whole stacked batch (one MXU push);
            # the 1/sqrt(head_dim) scale is already folded into the Q columns.
            qkv = _bf16_dot(h, wqkv_ref[l]) + bqkv        # (B*S, 3E) f32
            q = qkv[:, 0:EMBED]
            k = qkv[:, EMBED:2 * EMBED]
            v = qkv[:, 2 * EMBED:3 * EMBED]

            # per-(batch, head) softmax attention on (S, S) blocks.
            # (heads stay as 2-D lane slices: a (S, H, hd) layout with hd=8
            #  minor dims would waste whole vregs on padding.)
            attn_rows = []
            for b in range(B):
                r = b * S
                heads = []
                for hh in range(N_HEADS):
                    c = hh * HEAD_DIM
                    qs = q[r:r + S, c:c + HEAD_DIM]
                    ks = k[r:r + S, c:c + HEAD_DIM]
                    vs = v[r:r + S, c:c + HEAD_DIM]
                    s = _bf16_dot_nt(qs, ks)              # (S, S) f32
                    s = s - jnp.max(s, axis=-1, keepdims=True)
                    p = jnp.exp(s)
                    p = p * pl.reciprocal(jnp.sum(p, axis=-1, keepdims=True),
                                          approx=True)
                    heads.append(_bf16_dot(p, vs))        # (S, head_dim)
                attn_rows.append(jnp.concatenate(heads, axis=-1))   # (S, E)
            attn = jnp.concatenate(attn_rows, axis=0)     # (B*S, E)
            # single output projection over the whole stacked batch
            attn = _bf16_dot(attn, wo_ref[l]) + bo
            h = _layernorm(h + attn, ln1w, ln1b)

            # feed-forward block (dropout = identity in eval mode)
            ff = _bf16_dot(h, w1_ref[l]) + b1
            ff = jnp.maximum(ff, 0.0)
            ff = _bf16_dot(ff, w2_ref[l]) + b2
            h = _layernorm(h + ff, ln2w, ln2b)

        # outer residual + adaptive-avg-pool (block-diag matmul) + MLP head
        y = h + x                                         # (B*S, E)
        pooled = _bf16_dot(pool_ref[...], y)              # (B*POOL_OUT, E)
        hv = hvec_ref[...]
        fc1b = hv[0:1, 0:FF]
        fc2b = hv[1:2, :]
        z = jnp.maximum(_bf16_dot(pooled, fc1w_ref[...]) + fc1b, 0.0)
        out_ref[...] = _bf16_dot(z, fc2w_ref[...]) + fc2b     # (B*POOL_OUT, VPAD)

    inputs = (x_flat, wqkv, wo, w1, w2, lvec, pool_blk, fc1w, fc2w, hvec)
    # Single grid step: everything fits VMEM many times over; a per-batch grid
    # would only add pipeline overhead on the single TensorCore of v5e/v6e.
    # NOTE: on v7x (2 TensorCores) a parallel batch axis / core_map split could
    # use both cores; left single-step for portability at these tiny shapes.
    in_specs = []
    for a in inputs:
        nd = a.ndim
        in_specs.append(pl.BlockSpec(a.shape, lambda *args, _n=nd: (0,) * _n))
    out_specs = pl.BlockSpec((B * POOL_OUT, VPAD), lambda i: (0, 0))

    out = pl.pallas_call(
        kernel,
        out_shape=jax.ShapeDtypeStruct((B * POOL_OUT, VPAD), jnp.float32),
        grid_spec=pltpu.PrefetchScalarGridSpec(
            num_scalar_prefetch=0,
            grid=(1,),
            in_specs=in_specs,
            out_specs=out_specs,
        ),
        compiler_params=pltpu.CompilerParams(
            dimension_semantics=("arbitrary",),
            vmem_limit_bytes=32 * 1024 * 1024),
    )(*inputs)

    # undo lane-dense padding / batch stacking with cheap wrapper ops
    return out.reshape(B, POOL_OUT, VPAD)[:, :, :VOCAB]


def init_raw_params(key):
    keys = iter(jax.random.split(key, 24))

    def nrm(shape, s=0.05):
        return jax.random.normal(next(keys), shape, jnp.float32) * s

    emb_table = nrm((VOCAB, EMBED), 1.0)
    pos_table = nrm((MAX_SEQ, EMBED), 1.0)

    raw = dict(
        wq=nrm((N_LAYERS, EMBED, EMBED)), bq=nrm((N_LAYERS, 1, EMBED)),
        wk=nrm((N_LAYERS, EMBED, EMBED)), bk=nrm((N_LAYERS, 1, EMBED)),
        wv=nrm((N_LAYERS, EMBED, EMBED)), bv=nrm((N_LAYERS, 1, EMBED)),
        wo=nrm((N_LAYERS, EMBED, EMBED)), bo=nrm((N_LAYERS, 1, EMBED)),
        w1=nrm((N_LAYERS, EMBED, FF)),    b1=nrm((N_LAYERS, 1, FF)),
        w2=nrm((N_LAYERS, FF, EMBED)),    b2=nrm((N_LAYERS, 1, EMBED)),
        ln1w=jnp.ones((N_LAYERS, 1, EMBED), jnp.float32),
        ln1b=jnp.zeros((N_LAYERS, 1, EMBED), jnp.float32),
        ln2w=jnp.ones((N_LAYERS, 1, EMBED), jnp.float32),
        ln2b=jnp.zeros((N_LAYERS, 1, EMBED), jnp.float32),
        fc1w=nrm((EMBED, FF)), fc1b=nrm((1, FF)),
        fc2w=nrm((FF, VOCAB)), fc2b=nrm((1, VOCAB)),
    )
    return emb_table, pos_table, raw


def pack_params(raw, batch, seq_len):
    """Fuse / repack raw (PyTorch-layout) params into the 9 kernel inputs."""
    scale = 1.0 / math.sqrt(HEAD_DIM)

    # fused QKV weight & bias; attention scale folded into the Q columns
    wqkv = jnp.concatenate([raw["wq"] * scale, raw["wk"], raw["wv"]],
                           axis=-1).astype(jnp.bfloat16)          # (L, E, 3E)
    bqkv = jnp.concatenate([raw["bq"] * scale, raw["bk"], raw["bv"]],
                           axis=-1)                               # (L, 1, 3E)
    wo = raw["wo"].astype(jnp.bfloat16)                           # (L, E, E)
    w1 = raw["w1"].astype(jnp.bfloat16)                           # (L, E, FF)
    w2 = raw["w2"].astype(jnp.bfloat16)                           # (L, FF, E)

    def row(v):                                                   # (L,1,w)->(L,1,FF)
        return jnp.pad(v, ((0, 0), (0, 0), (0, FF - v.shape[-1])))

    lvec = jnp.concatenate(
        [row(bqkv), row(raw["bo"]), row(raw["b1"]), row(raw["b2"]),
         row(raw["ln1w"]), row(raw["ln1b"]), row(raw["ln2w"]), row(raw["ln2b"])],
        axis=1)                                                   # (L, 8, FF) f32

    # block-diagonal pooling matrix over the batch-stacked sequence axis
    P = adaptive_avg_pool_matrix(seq_len, POOL_OUT)               # (28, S) np
    Pb = np.zeros((batch * POOL_OUT, batch * seq_len), np.float32)
    for b in range(batch):
        Pb[b * POOL_OUT:(b + 1) * POOL_OUT,
           b * seq_len:(b + 1) * seq_len] = P
    pool_blk = jnp.asarray(Pb).astype(jnp.bfloat16)               # (B*28, B*S)

    fc1w = raw["fc1w"].astype(jnp.bfloat16)                       # (E, FF)
    fc2w = jnp.pad(raw["fc2w"],
                   ((0, 0), (0, VPAD - VOCAB))).astype(jnp.bfloat16)  # (FF, VPAD)
    hvec = jnp.zeros((8, VPAD), jnp.float32)
    hvec = hvec.at[0, 0:FF].set(raw["fc1b"][0])
    hvec = hvec.at[1, 0:VOCAB].set(raw["fc2b"][0])

    return (wqkv, wo, w1, w2, lvec, pool_blk, fc1w, fc2w, hvec)


def reference_forward(x_emb, raw):
    """Pure-JAX f32 reference mirroring the PyTorch forward (eval mode)."""
    hd = HEAD_DIM
    scale = 1.0 / math.sqrt(hd)

    def ln(x, w, b):
        mu = jnp.mean(x, -1, keepdims=True)
        var = jnp.mean((x - mu) ** 2, -1, keepdims=True)
        return (x - mu) / jnp.sqrt(var + EPS) * w + b

    h = x_emb
    B, S, E = h.shape
    for l in range(N_LAYERS):
        q = h @ raw["wq"][l] + raw["bq"][l]
        k = h @ raw["wk"][l] + raw["bk"][l]
        v = h @ raw["wv"][l] + raw["bv"][l]
        qh = q.reshape(B, S, N_HEADS, hd).transpose(0, 2, 1, 3) * scale
        kh = k.reshape(B, S, N_HEADS, hd).transpose(0, 2, 1, 3)
        vh = v.reshape(B, S, N_HEADS, hd).transpose(0, 2, 1, 3)
        s = jnp.einsum("bhqd,bhkd->bhqk", qh, kh)
        p = jax.nn.softmax(s, axis=-1)
        o = jnp.einsum("bhqk,bhkd->bhqd", p, vh)
        o = o.transpose(0, 2, 1, 3).reshape(B, S, E)
        attn = o @ raw["wo"][l] + raw["bo"][l]
        h = ln(h + attn, raw["ln1w"][l], raw["ln1b"][l])
        ff = jnp.maximum(h @ raw["w1"][l] + raw["b1"][l], 0.0) @ raw["w2"][l] + raw["b2"][l]
        h = ln(h + ff, raw["ln2w"][l], raw["ln2b"][l])
    y = h + x_emb
    P = jnp.asarray(adaptive_avg_pool_matrix(S, POOL_OUT))
    pooled = jnp.einsum("ps,bse->bpe", P, y)
    z = jnp.maximum(pooled @ raw["fc1w"] + raw["fc1b"], 0.0)
    return z @ raw["fc2w"] + raw["fc2b"]


if __name__ == "__main__":
    key = jax.random.PRNGKey(0)
    B, S = 2, 64                          # S <= MAX_SEQ (pos-embedding table)
    k_tok, k_par = jax.random.split(key)
    tokens = jax.random.randint(k_tok, (B, S), 0, VOCAB, dtype=jnp.int32)

    emb_table, pos_table, raw = init_raw_params(k_par)

    # glue: embedding lookups (gather) in plain JAX
    # TODO(synk): token/positional embedding gathers stay outside the kernel.
    x_emb = emb_table[tokens] + pos_table[:S][None, :, :]     # (B, S, E) f32

    kparams = pack_params(raw, B, S)
    out = transformer_forward(x_emb, kparams)
    out = jax.block_until_ready(out)

    ref = reference_forward(x_emb, raw)
    # tolerance accounts for bf16 MXU operands (f32 accumulation) in the kernel
    np.testing.assert_allclose(np.asarray(out), np.asarray(ref),
                               atol=2e-2, rtol=2e-2)
    print("KERNEL_OK")
</pallas_src>

<mosaic_0001>
module attributes {stable_mosaic.version = 11 : i64} {
  func.func @kernel(%arg0: i32, %arg1: memref<128x16xf32, #tpu.memory_space<vmem>>, %arg2: memref<2x16x48xbf16, #tpu.memory_space<vmem>>, %arg3: memref<2x16x16xbf16, #tpu.memory_space<vmem>>, %arg4: memref<2x16x64xbf16, #tpu.memory_space<vmem>>, %arg5: memref<2x64x16xbf16, #tpu.memory_space<vmem>>, %arg6: memref<2x8x64xf32, #tpu.memory_space<vmem>>, %arg7: memref<56x128xbf16, #tpu.memory_space<vmem>>, %arg8: memref<16x64xbf16, #tpu.memory_space<vmem>>, %arg9: memref<64x128xbf16, #tpu.memory_space<vmem>>, %arg10: memref<8x128xf32, #tpu.memory_space<vmem>>, %arg11: memref<56x128xf32, #tpu.memory_space<vmem>>) attributes {dimension_semantics = [#tpu.dimension_semantics<arbitrary>], iteration_bounds = array<i64: 1>, scalar_prefetch = 0 : i64, scratch_operands = 0 : i64, tpu.core_type = #tpu.core_type<tc>, window_params = [{pipeline_mode = #tpu.pipeline_mode<synchronous>, transform_indices = @transform_0, window_bounds = array<i64: 128, 16>}, {pipeline_mode = #tpu.pipeline_mode<synchronous>, transform_indices = @transform_1, window_bounds = array<i64: 2, 16, 48>}, {pipeline_mode = #tpu.pipeline_mode<synchronous>, transform_indices = @transform_2, window_bounds = array<i64: 2, 16, 16>}, {pipeline_mode = #tpu.pipeline_mode<synchronous>, transform_indices = @transform_3, window_bounds = array<i64: 2, 16, 64>}, {pipeline_mode = #tpu.pipeline_mode<synchronous>, transform_indices = @transform_4, window_bounds = array<i64: 2, 64, 16>}, {pipeline_mode = #tpu.pipeline_mode<synchronous>, transform_indices = @transform_5, window_bounds = array<i64: 2, 8, 64>}, {pipeline_mode = #tpu.pipeline_mode<synchronous>, transform_indices = @transform_6, window_bounds = array<i64: 56, 128>}, {pipeline_mode = #tpu.pipeline_mode<synchronous>, transform_indices = @transform_7, window_bounds = array<i64: 16, 64>}, {pipeline_mode = #tpu.pipeline_mode<synchronous>, transform_indices = @transform_8, window_bounds = array<i64: 64, 128>}, {pipeline_mode = #tpu.pipeline_mode<synchronous>, transform_indices = @transform_9, window_bounds = array<i64: 8, 128>}, {pipeline_mode = #tpu.pipeline_mode<synchronous>, transform_indices = @transform_10, window_bounds = array<i64: 56, 128>}]} {
    %c0 = arith.constant 0 : index
    %c0_0 = arith.constant 0 : index
    %0 = vector.load %arg1[%c0, %c0_0] : memref<128x16xf32, #tpu.memory_space<vmem>>, vector<128x16xf32>
    %c0_1 = arith.constant 0 : index
    %c0_2 = arith.constant 0 : index
    %c0_3 = arith.constant 0 : index
    %1 = vector.load %arg6[%c0_1, %c0_2, %c0_3] : memref<2x8x64xf32, #tpu.memory_space<vmem>>, vector<1x8x64xf32>
    %2 = vector.shape_cast %1 : vector<1x8x64xf32> to vector<8x64xf32>
    %3 = vector.extract_strided_slice %2 {offsets = [0, 0], sizes = [1, 48], strides = [1, 1]} : vector<8x64xf32> to vector<1x48xf32>
    %4 = vector.extract_strided_slice %2 {offsets = [1, 0], sizes = [1, 16], strides = [1, 1]} : vector<8x64xf32> to vector<1x16xf32>
    %5 = vector.extract_strided_slice %2 {offsets = [2, 0], sizes = [1, 64], strides = [1, 1]} : vector<8x64xf32> to vector<1x64xf32>
    %6 = vector.extract_strided_slice %2 {offsets = [3, 0], sizes = [1, 16], strides = [1, 1]} : vector<8x64xf32> to vector<1x16xf32>
    %7 = vector.extract_strided_slice %2 {offsets = [4, 0], sizes = [1, 16], strides = [1, 1]} : vector<8x64xf32> to vector<1x16xf32>
    %8 = vector.extract_strided_slice %2 {offsets = [5, 0], sizes = [1, 16], strides = [1, 1]} : vector<8x64xf32> to vector<1x16xf32>
    %9 = vector.extract_strided_slice %2 {offsets = [6, 0], sizes = [1, 16], strides = [1, 1]} : vector<8x64xf32> to vector<1x16xf32>
    %10 = vector.extract_strided_slice %2 {offsets = [7, 0], sizes = [1, 16], strides = [1, 1]} : vector<8x64xf32> to vector<1x16xf32>
    %c0_4 = arith.constant 0 : index
    %c0_5 = arith.constant 0 : index
    %c0_6 = arith.constant 0 : index
    %11 = vector.load %arg2[%c0_4, %c0_5, %c0_6] : memref<2x16x48xbf16, #tpu.memory_space<vmem>>, vector<1x16x48xbf16>
    %12 = vector.shape_cast %11 : vector<1x16x48xbf16> to vector<16x48xbf16>
    %13 = arith.truncf %0 : vector<128x16xf32> to vector<128x16xbf16>
    %cst = arith.constant dense<0.000000e+00> : vector<128x48xf32>
    %14 = tpu.matmul %13, %12, %cst {dimension_numbers = #tpu.dot_dimension_numbers<[1], [0], [0], [1], [0, 0, 1, 1], [], []>} : vector<128x16xbf16>, vector<16x48xbf16>, vector<128x48xf32> -> vector<128x48xf32>
    %15 = vector.broadcast %3 : vector<1x48xf32> to vector<128x48xf32>
    %16 = arith.addf %14, %15 : vector<128x48xf32>
    %17 = vector.extract_strided_slice %16 {offsets = [0, 0], sizes = [128, 16], strides = [1, 1]} : vector<128x48xf32> to vector<128x16xf32>
    %18 = vector.extract_strided_slice %16 {offsets = [0, 16], sizes = [128, 16], strides = [1, 1]} : vector<128x48xf32> to vector<128x16xf32>
    %19 = vector.extract_strided_slice %16 {offsets = [0, 32], sizes = [128, 16], strides = [1, 1]} : vector<128x48xf32> to vector<128x16xf32>
    %20 = vector.extract_strided_slice %17 {offsets = [0, 0], sizes = [64, 8], strides = [1, 1]} : vector<128x16xf32> to vector<64x8xf32>
    %21 = vector.extract_strided_slice %18 {offsets = [0, 0], sizes = [64, 8], strides = [1, 1]} : vector<128x16xf32> to vector<64x8xf32>
    %22 = vector.extract_strided_slice %19 {offsets = [0, 0], sizes = [64, 8], strides = [1, 1]} : vector<128x16xf32> to vector<64x8xf32>
    %23 = arith.truncf %20 : vector<64x8xf32> to vector<64x8xbf16>
    %24 = arith.truncf %21 : vector<64x8xf32> to vector<64x8xbf16>
    %cst_7 = arith.constant dense<0.000000e+00> : vector<64x64xf32>
    %25 = tpu.matmul %23, %24, %cst_7 {dimension_numbers = #tpu.dot_dimension_numbers<[1], [1], [0], [0], [0, 0, 1, 0], [], []>} : vector<64x8xbf16>, vector<64x8xbf16>, vector<64x64xf32> -> vector<64x64xf32>
    %cst_8 = arith.constant dense<0xFF800000> : vector<64xf32>
    %26 = vector.multi_reduction <maximumf>, %25, %cst_8 [1] : vector<64x64xf32> to vector<64xf32>
    %27 = vector.shape_cast %26 : vector<64xf32> to vector<64x1xf32>
    %28 = vector.broadcast %27 : vector<64x1xf32> to vector<64x64xf32>
    %29 = arith.subf %25, %28 : vector<64x64xf32>
    %30 = math.exp %29 : vector<64x64xf32>
    %cst_9 = arith.constant dense<0.000000e+00> : vector<64xf32>
    %31 = vector.multi_reduction <add>, %30, %cst_9 [1] : vector<64x64xf32> to vector<64xf32>
    %32 = vector.shape_cast %31 : vector<64xf32> to vector<64x1xf32>
    %33 = tpu.reciprocal %32 {approx = true} : vector<64x1xf32> -> vector<64x1xf32>
    %34 = vector.broadcast %33 : vector<64x1xf32> to vector<64x64xf32>
    %35 = arith.mulf %30, %34 : vector<64x64xf32>
    %36 = arith.truncf %35 : vector<64x64xf32> to vector<64x64xbf16>
    %37 = arith.truncf %22 : vector<64x8xf32> to vector<64x8xbf16>
    %cst_10 = arith.constant dense<0.000000e+00> : vector<64x8xf32>
    %38 = tpu.matmul %36, %37, %cst_10 {dimension_numbers = #tpu.dot_dimension_numbers<[1], [0], [0], [1], [0, 0, 1, 1], [], []>} : vector<64x64xbf16>, vector<64x8xbf16>, vector<64x8xf32> -> vector<64x8xf32>
    %39 = vector.extract_strided_slice %17 {offsets = [0, 8], sizes = [64, 8], strides = [1, 1]} : vector<128x16xf32> to vector<64x8xf32>
    %40 = vector.extract_strided_slice %18 {offsets = [0, 8], sizes = [64, 8], strides = [1, 1]} : vector<128x16xf32> to vector<64x8xf32>
    %41 = vector.extract_strided_slice %19 {offsets = [0, 8], sizes = [64, 8], strides = [1, 1]} : vector<128x16xf32> to vector<64x8xf32>
    %42 = arith.truncf %39 : vector<64x8xf32> to vector<64x8xbf16>
    %43 = arith.truncf %40 : vector<64x8xf32> to vector<64x8xbf16>
    %cst_11 = arith.constant dense<0.000000e+00> : vector<64x64xf32>
    %44 = tpu.matmul %42, %43, %cst_11 {dimension_numbers = #tpu.dot_dimension_numbers<[1], [1], [0], [0], [0, 0, 1, 0], [], []>} : vector<64x8xbf16>, vector<64x8xbf16>, vector<64x64xf32> -> vector<64x64xf32>
    %cst_12 = arith.constant dense<0xFF800000> : vector<64xf32>
    %45 = vector.multi_reduction <maximumf>, %44, %cst_12 [1] : vector<64x64xf32> to vector<64xf32>
    %46 = vector.shape_cast %45 : vector<64xf32> to vector<64x1xf32>
    %47 = vector.broadcast %46 : vector<64x1xf32> to vector<64x64xf32>
    %48 = arith.subf %44, %47 : vector<64x64xf32>
    %49 = math.exp %48 : vector<64x64xf32>
    %cst_13 = arith.constant dense<0.000000e+00> : vector<64xf32>
    %50 = vector.multi_reduction <add>, %49, %cst_13 [1] : vector<64x64xf32> to vector<64xf32>
    %51 = vector.shape_cast %50 : vector<64xf32> to vector<64x1xf32>
    %52 = tpu.reciprocal %51 {approx = true} : vector<64x1xf32> -> vector<64x1xf32>
    %53 = vector.broadcast %52 : vector<64x1xf32> to vector<64x64xf32>
    %54 = arith.mulf %49, %53 : vector<64x64xf32>
    %55 = arith.truncf %54 : vector<64x64xf32> to vector<64x64xbf16>
    %56 = arith.truncf %41 : vector<64x8xf32> to vector<64x8xbf16>
    %cst_14 = arith.constant dense<0.000000e+00> : vector<64x8xf32>
    %57 = tpu.matmul %55, %56, %cst_14 {dimension_numbers = #tpu.dot_dimension_numbers<[1], [0], [0], [1], [0, 0, 1, 1], [], []>} : vector<64x64xbf16>, vector<64x8xbf16>, vector<64x8xf32> -> vector<64x8xf32>
    %58 = tpu.concatenate %38, %57 in 1 : vector<64x8xf32>, vector<64x8xf32> -> vector<64x16xf32>
    %59 = vector.extract_strided_slice %17 {offsets = [64, 0], sizes = [64, 8], strides = [1, 1]} : vector<128x16xf32> to vector<64x8xf32>
    %60 = vector.extract_strided_slice %18 {offsets = [64, 0], sizes = [64, 8], strides = [1, 1]} : vector<128x16xf32> to vector<64x8xf32>
    %61 = vector.extract_strided_slice %19 {offsets = [64, 0], sizes = [64, 8], strides = [1, 1]} : vector<128x16xf32> to vector<64x8xf32>
    %62 = arith.truncf %59 : vector<64x8xf32> to vector<64x8xbf16>
    %63 = arith.truncf %60 : vector<64x8xf32> to vector<64x8xbf16>
    %cst_15 = arith.constant dense<0.000000e+00> : vector<64x64xf32>
    %64 = tpu.matmul %62, %63, %cst_15 {dimension_numbers = #tpu.dot_dimension_numbers<[1], [1], [0], [0], [0, 0, 1, 0], [], []>} : vector<64x8xbf16>, vector<64x8xbf16>, vector<64x64xf32> -> vector<64x64xf32>
    %cst_16 = arith.constant dense<0xFF800000> : vector<64xf32>
    %65 = vector.multi_reduction <maximumf>, %64, %cst_16 [1] : vector<64x64xf32> to vector<64xf32>
    %66 = vector.shape_cast %65 : vector<64xf32> to vector<64x1xf32>
    %67 = vector.broadcast %66 : vector<64x1xf32> to vector<64x64xf32>
    %68 = arith.subf %64, %67 : vector<64x64xf32>
    %69 = math.exp %68 : vector<64x64xf32>
    %cst_17 = arith.constant dense<0.000000e+00> : vector<64xf32>
    %70 = vector.multi_reduction <add>, %69, %cst_17 [1] : vector<64x64xf32> to vector<64xf32>
    %71 = vector.shape_cast %70 : vector<64xf32> to vector<64x1xf32>
    %72 = tpu.reciprocal %71 {approx = true} : vector<64x1xf32> -> vector<64x1xf32>
    %73 = vector.broadcast %72 : vector<64x1xf32> to vector<64x64xf32>
    %74 = arith.mulf %69, %73 : vector<64x64xf32>
    %75 = arith.truncf %74 : vector<64x64xf32> to vector<64x64xbf16>
    %76 = arith.truncf %61 : vector<64x8xf32> to vector<64x8xbf16>
    %cst_18 = arith.constant dense<0.000000e+00> : vector<64x8xf32>
    %77 = tpu.matmul %75, %76, %cst_18 {dimension_numbers = #tpu.dot_dimension_numbers<[1], [0], [0], [1], [0, 0, 1, 1], [], []>} : vector<64x64xbf16>, vector<64x8xbf16>, vector<64x8xf32> -> vector<64x8xf32>
    %78 = vector.extract_strided_slice %17 {offsets = [64, 8], sizes = [64, 8], strides = [1, 1]} : vector<128x16xf32> to vector<64x8xf32>
    %79 = vector.extract_strided_slice %18 {offsets = [64, 8], sizes = [64, 8], strides = [1, 1]} : vector<128x16xf32> to vector<64x8xf32>
    %80 = vector.extract_strided_slice %19 {offsets = [64, 8], sizes = [64, 8], strides = [1, 1]} : vector<128x16xf32> to vector<64x8xf32>
    %81 = arith.truncf %78 : vector<64x8xf32> to vector<64x8xbf16>
    %82 = arith.truncf %79 : vector<64x8xf32> to vector<64x8xbf16>
    %cst_19 = arith.constant dense<0.000000e+00> : vector<64x64xf32>
    %83 = tpu.matmul %81, %82, %cst_19 {dimension_numbers = #tpu.dot_dimension_numbers<[1], [1], [0], [0], [0, 0, 1, 0], [], []>} : vector<64x8xbf16>, vector<64x8xbf16>, vector<64x64xf32> -> vector<64x64xf32>
    %cst_20 = arith.constant dense<0xFF800000> : vector<64xf32>
    %84 = vector.multi_reduction <maximumf>, %83, %cst_20 [1] : vector<64x64xf32> to vector<64xf32>
    %85 = vector.shape_cast %84 : vector<64xf32> to vector<64x1xf32>
    %86 = vector.broadcast %85 : vector<64x1xf32> to vector<64x64xf32>
    %87 = arith.subf %83, %86 : vector<64x64xf32>
    %88 = math.exp %87 : vector<64x64xf32>
    %cst_21 = arith.constant dense<0.000000e+00> : vector<64xf32>
    %89 = vector.multi_reduction <add>, %88, %cst_21 [1] : vector<64x64xf32> to vector<64xf32>
    %90 = vector.shape_cast %89 : vector<64xf32> to vector<64x1xf32>
    %91 = tpu.reciprocal %90 {approx = true} : vector<64x1xf32> -> vector<64x1xf32>
    %92 = vector.broadcast %91 : vector<64x1xf32> to vector<64x64xf32>
    %93 = arith.mulf %88, %92 : vector<64x64xf32>
    %94 = arith.truncf %93 : vector<64x64xf32> to vector<64x64xbf16>
    %95 = arith.truncf %80 : vector<64x8xf32> to vector<64x8xbf16>
    %cst_22 = arith.constant dense<0.000000e+00> : vector<64x8xf32>
    %96 = tpu.matmul %94, %95, %cst_22 {dimension_numbers = #tpu.dot_dimension_numbers<[1], [0], [0], [1], [0, 0, 1, 1], [], []>} : vector<64x64xbf16>, vector<64x8xbf16>, vector<64x8xf32> -> vector<64x8xf32>
    %97 = tpu.concatenate %77, %96 in 1 : vector<64x8xf32>, vector<64x8xf32> -> vector<64x16xf32>
    %98 = tpu.concatenate %58, %97 in 0 : vector<64x16xf32>, vector<64x16xf32> -> vector<128x16xf32>
    %c0_23 = arith.constant 0 : index
    %c0_24 = arith.constant 0 : index
    %c0_25 = arith.constant 0 : index
    %99 = vector.load %arg3[%c0_23, %c0_24, %c0_25] : memref<2x16x16xbf16, #tpu.memory_space<vmem>>, vector<1x16x16xbf16>
    %100 = vector.shape_cast %99 : vector<1x16x16xbf16> to vector<16x16xbf16>
    %101 = arith.truncf %98 : vector<128x16xf32> to vector<128x16xbf16>
    %cst_26 = arith.constant dense<0.000000e+00> : vector<128x16xf32>
    %102 = tpu.matmul %101, %100, %cst_26 {dimension_numbers = #tpu.dot_dimension_numbers<[1], [0], [0], [1], [0, 0, 1, 1], [], []>} : vector<128x16xbf16>, vector<16x16xbf16>, vector<128x16xf32> -> vector<128x16xf32>
    %103 = vector.broadcast %4 : vector<1x16xf32> to vector<128x16xf32>
    %104 = arith.addf %102, %103 : vector<128x16xf32>
    %105 = arith.addf %0, %104 : vector<128x16xf32>
    %cst_27 = arith.constant dense<0.000000e+00> : vector<128xf32>
    %106 = vector.multi_reduction <add>, %105, %cst_27 [1] : vector<128x16xf32> to vector<128xf32>
    %107 = vector.shape_cast %106 : vector<128xf32> to vector<128x1xf32>
    %cst_28 = arith.constant 1.600000e+01 : f32
    %108 = vector.broadcast %cst_28 : f32 to vector<128x1xf32>
    %109 = arith.divf %107, %108 : vector<128x1xf32>
    %110 = vector.broadcast %109 : vector<128x1xf32> to vector<128x16xf32>
    %111 = arith.subf %105, %110 : vector<128x16xf32>
    %112 = arith.mulf %111, %111 : vector<128x16xf32>
    %cst_29 = arith.constant dense<0.000000e+00> : vector<128xf32>
    %113 = vector.multi_reduction <add>, %112, %cst_29 [1] : vector<128x16xf32> to vector<128xf32>
    %114 = vector.shape_cast %113 : vector<128xf32> to vector<128x1xf32>
    %cst_30 = arith.constant 1.600000e+01 : f32
    %115 = vector.broadcast %cst_30 : f32 to vector<128x1xf32>
    %116 = arith.divf %114, %115 : vector<128x1xf32>
    %117 = vector.broadcast %109 : vector<128x1xf32> to vector<128x16xf32>
    %118 = arith.subf %105, %117 : vector<128x16xf32>
    %cst_31 = arith.constant 9.99999974E-6 : f32
    %119 = vector.broadcast %cst_31 : f32 to vector<128x1xf32>
    %120 = arith.addf %116, %119 : vector<128x1xf32>
    %121 = math.rsqrt %120 : vector<128x1xf32>
    %122 = vector.broadcast %121 : vector<128x1xf32> to vector<128x16xf32>
    %123 = arith.mulf %118, %122 : vector<128x16xf32>
    %124 = vector.broadcast %7 : vector<1x16xf32> to vector<128x16xf32>
    %125 = arith.mulf %123, %124 : vector<128x16xf32>
    %126 = vector.broadcast %8 : vector<1x16xf32> to vector<128x16xf32>
    %127 = arith.addf %125, %126 : vector<128x16xf32>
    %c0_32 = arith.constant 0 : index
    %c0_33 = arith.constant 0 : index
    %c0_34 = arith.constant 0 : index
    %128 = vector.load %arg4[%c0_32, %c0_33, %c0_34] : memref<2x16x64xbf16, #tpu.memory_space<vmem>>, vector<1x16x64xbf16>
    %129 = vector.shape_cast %128 : vector<1x16x64xbf16> to vector<16x64xbf16>
    %130 = arith.truncf %127 : vector<128x16xf32> to vector<128x16xbf16>
    %cst_35 = arith.constant dense<0.000000e+00> : vector<128x64xf32>
    %131 = tpu.matmul %130, %129, %cst_35 {dimension_numbers = #tpu.dot_dimension_numbers<[1], [0], [0], [1], [0, 0, 1, 1], [], []>} : vector<128x16xbf16>, vector<16x64xbf16>, vector<128x64xf32> -> vector<128x64xf32>
    %132 = vector.broadcast %5 : vector<1x64xf32> to vector<128x64xf32>
    %133 = arith.addf %131, %132 : vector<128x64xf32>
    %cst_36 = arith.constant 0.000000e+00 : f32
    %134 = vector.broadcast %cst_36 : f32 to vector<128x64xf32>
    %135 = arith.maximumf %133, %134 : vector<128x64xf32>
    %c0_37 = arith.constant 0 : index
    %c0_38 = arith.constant 0 : index
    %c0_39 = arith.constant 0 : index
    %136 = vector.load %arg5[%c0_37, %c0_38, %c0_39] : memref<2x64x16xbf16, #tpu.memory_space<vmem>>, vector<1x64x16xbf16>
    %137 = vector.shape_cast %136 : vector<1x64x16xbf16> to vector<64x16xbf16>
    %138 = arith.truncf %135 : vector<128x64xf32> to vector<128x64xbf16>
    %cst_40 = arith.constant dense<0.000000e+00> : vector<128x16xf32>
    %139 = tpu.matmul %138, %137, %cst_40 {dimension_numbers = #tpu.dot_dimension_numbers<[1], [0], [0], [1], [0, 0, 1, 1], [], []>} : vector<128x64xbf16>, vector<64x16xbf16>, vector<128x16xf32> -> vector<128x16xf32>
    %140 = vector.broadcast %6 : vector<1x16xf32> to vector<128x16xf32>
    %141 = arith.addf %139, %140 : vector<128x16xf32>
    %142 = arith.addf %127, %141 : vector<128x16xf32>
    %cst_41 = arith.constant dense<0.000000e+00> : vector<128xf32>
    %143 = vector.multi_reduction <add>, %142, %cst_41 [1] : vector<128x16xf32> to vector<128xf32>
    %144 = vector.shape_cast %143 : vector<128xf32> to vector<128x1xf32>
    %cst_42 = arith.constant 1.600000e+01 : f32
    %145 = vector.broadcast %cst_42 : f32 to vector<128x1xf32>
    %146 = arith.divf %144, %145 : vector<128x1xf32>
    %147 = vector.broadcast %146 : vector<128x1xf32> to vector<128x16xf32>
    %148 = arith.subf %142, %147 : vector<128x16xf32>
    %149 = arith.mulf %148, %148 : vector<128x16xf32>
    %cst_43 = arith.constant dense<0.000000e+00> : vector<128xf32>
    %150 = vector.multi_reduction <add>, %149, %cst_43 [1] : vector<128x16xf32> to vector<128xf32>
    %151 = vector.shape_cast %150 : vector<128xf32> to vector<128x1xf32>
    %cst_44 = arith.constant 1.600000e+01 : f32
    %152 = vector.broadcast %cst_44 : f32 to vector<128x1xf32>
    %153 = arith.divf %151, %152 : vector<128x1xf32>
    %154 = vector.broadcast %146 : vector<128x1xf32> to vector<128x16xf32>
    %155 = arith.subf %142, %154 : vector<128x16xf32>
    %cst_45 = arith.constant 9.99999974E-6 : f32
    %156 = vector.broadcast %cst_45 : f32 to vector<128x1xf32>
    %157 = arith.addf %153, %156 : vector<128x1xf32>
    %158 = math.rsqrt %157 : vector<128x1xf32>
    %159 = vector.broadcast %158 : vector<128x1xf32> to vector<128x16xf32>
    %160 = arith.mulf %155, %159 : vector<128x16xf32>
    %161 = vector.broadcast %9 : vector<1x16xf32> to vector<128x16xf32>
    %162 = arith.mulf %160, %161 : vector<128x16xf32>
    %163 = vector.broadcast %10 : vector<1x16xf32> to vector<128x16xf32>
    %164 = arith.addf %162, %163 : vector<128x16xf32>
    %c1 = arith.constant 1 : index
    %c0_46 = arith.constant 0 : index
    %c0_47 = arith.constant 0 : index
    %165 = vector.load %arg6[%c1, %c0_46, %c0_47] : memref<2x8x64xf32, #tpu.memory_space<vmem>>, vector<1x8x64xf32>
    %166 = vector.shape_cast %165 : vector<1x8x64xf32> to vector<8x64xf32>
    %167 = vector.extract_strided_slice %166 {offsets = [0, 0], sizes = [1, 48], strides = [1, 1]} : vector<8x64xf32> to vector<1x48xf32>
    %168 = vector.extract_strided_slice %166 {offsets = [1, 0], sizes = [1, 16], strides = [1, 1]} : vector<8x64xf32> to vector<1x16xf32>
    %169 = vector.extract_strided_slice %166 {offsets = [2, 0], sizes = [1, 64], strides = [1, 1]} : vector<8x64xf32> to vector<1x64xf32>
    %170 = vector.extract_strided_slice %166 {offsets = [3, 0], sizes = [1, 16], strides = [1, 1]} : vector<8x64xf32> to vector<1x16xf32>
    %171 = vector.extract_strided_slice %166 {offsets = [4, 0], sizes = [1, 16], strides = [1, 1]} : vector<8x64xf32> to vector<1x16xf32>
    %172 = vector.extract_strided_slice %166 {offsets = [5, 0], sizes = [1, 16], strides = [1, 1]} : vector<8x64xf32> to vector<1x16xf32>
    %173 = vector.extract_strided_slice %166 {offsets = [6, 0], sizes = [1, 16], strides = [1, 1]} : vector<8x64xf32> to vector<1x16xf32>
    %174 = vector.extract_strided_slice %166 {offsets = [7, 0], sizes = [1, 16], strides = [1, 1]} : vector<8x64xf32> to vector<1x16xf32>
    %c1_48 = arith.constant 1 : index
    %c0_49 = arith.constant 0 : index
    %c0_50 = arith.constant 0 : index
    %175 = vector.load %arg2[%c1_48, %c0_49, %c0_50] : memref<2x16x48xbf16, #tpu.memory_space<vmem>>, vector<1x16x48xbf16>
    %176 = vector.shape_cast %175 : vector<1x16x48xbf16> to vector<16x48xbf16>
    %177 = arith.truncf %164 : vector<128x16xf32> to vector<128x16xbf16>
    %cst_51 = arith.constant dense<0.000000e+00> : vector<128x48xf32>
    %178 = tpu.matmul %177, %176, %cst_51 {dimension_numbers = #tpu.dot_dimension_numbers<[1], [0], [0], [1], [0, 0, 1, 1], [], []>} : vector<128x16xbf16>, vector<16x48xbf16>, vector<128x48xf32> -> vector<128x48xf32>
    %179 = vector.broadcast %167 : vector<1x48xf32> to vector<128x48xf32>
    %180 = arith.addf %178, %179 : vector<128x48xf32>
    %181 = vector.extract_strided_slice %180 {offsets = [0, 0], sizes = [128, 16], strides = [1, 1]} : vector<128x48xf32> to vector<128x16xf32>
    %182 = vector.extract_strided_slice %180 {offsets = [0, 16], sizes = [128, 16], strides = [1, 1]} : vector<128x48xf32> to vector<128x16xf32>
    %183 = vector.extract_strided_slice %180 {offsets = [0, 32], sizes = [128, 16], strides = [1, 1]} : vector<128x48xf32> to vector<128x16xf32>
    %184 = vector.extract_strided_slice %181 {offsets = [0, 0], sizes = [64, 8], strides = [1, 1]} : vector<128x16xf32> to vector<64x8xf32>
    %185 = vector.extract_strided_slice %182 {offsets = [0, 0], sizes = [64, 8], strides = [1, 1]} : vector<128x16xf32> to vector<64x8xf32>
    %186 = vector.extract_strided_slice %183 {offsets = [0, 0], sizes = [64, 8], strides = [1, 1]} : vector<128x16xf32> to vector<64x8xf32>
    %187 = arith.truncf %184 : vector<64x8xf32> to vector<64x8xbf16>
    %188 = arith.truncf %185 : vector<64x8xf32> to vector<64x8xbf16>
    %cst_52 = arith.constant dense<0.000000e+00> : vector<64x64xf32>
    %189 = tpu.matmul %187, %188, %cst_52 {dimension_numbers = #tpu.dot_dimension_numbers<[1], [1], [0], [0], [0, 0, 1, 0], [], []>} : vector<64x8xbf16>, vector<64x8xbf16>, vector<64x64xf32> -> vector<64x64xf32>
    %cst_53 = arith.constant dense<0xFF800000> : vector<64xf32>
    %190 = vector.multi_reduction <maximumf>, %189, %cst_53 [1] : vector<64x64xf32> to vector<64xf32>
    %191 = vector.shape_cast %190 : vector<64xf32> to vector<64x1xf32>
    %192 = vector.broadcast %191 : vector<64x1xf32> to vector<64x64xf32>
    %193 = arith.subf %189, %192 : vector<64x64xf32>
    %194 = math.exp %193 : vector<64x64xf32>
    %cst_54 = arith.constant dense<0.000000e+00> : vector<64xf32>
    %195 = vector.multi_reduction <add>, %194, %cst_54 [1] : vector<64x64xf32> to vector<64xf32>
    %196 = vector.shape_cast %195 : vector<64xf32> to vector<64x1xf32>
    %197 = tpu.reciprocal %196 {approx = true} : vector<64x1xf32> -> vector<64x1xf32>
    %198 = vector.broadcast %197 : vector<64x1xf32> to vector<64x64xf32>
    %199 = arith.mulf %194, %198 : vector<64x64xf32>
    %200 = arith.truncf %199 : vector<64x64xf32> to vector<64x64xbf16>
    %201 = arith.truncf %186 : vector<64x8xf32> to vector<64x8xbf16>
    %cst_55 = arith.constant dense<0.000000e+00> : vector<64x8xf32>
    %202 = tpu.matmul %200, %201, %cst_55 {dimension_numbers = #tpu.dot_dimension_numbers<[1], [0], [0], [1], [0, 0, 1, 1], [], []>} : vector<64x64xbf16>, vector<64x8xbf16>, vector<64x8xf32> -> vector<64x8xf32>
    %203 = vector.extract_strided_slice %181 {offsets = [0, 8], sizes = [64, 8], strides = [1, 1]} : vector<128x16xf32> to vector<64x8xf32>
    %204 = vector.extract_strided_slice %182 {offsets = [0, 8], sizes = [64, 8], strides = [1, 1]} : vector<128x16xf32> to vector<64x8xf32>
    %205 = vector.extract_strided_slice %183 {offsets = [0, 8], sizes = [64, 8], strides = [1, 1]} : vector<128x16xf32> to vector<64x8xf32>
    %206 = arith.truncf %203 : vector<64x8xf32> to vector<64x8xbf16>
    %207 = arith.truncf %204 : vector<64x8xf32> to vector<64x8xbf16>
    %cst_56 = arith.constant dense<0.000000e+00> : vector<64x64xf32>
    %208 = tpu.matmul %206, %207, %cst_56 {dimension_numbers = #tpu.dot_dimension_numbers<[1], [1], [0], [0], [0, 0, 1, 0], [], []>} : vector<64x8xbf16>, vector<64x8xbf16>, vector<64x64xf32> -> vector<64x64xf32>
    %cst_57 = arith.constant dense<0xFF800000> : vector<64xf32>
    %209 = vector.multi_reduction <maximumf>, %208, %cst_57 [1] : vector<64x64xf32> to vector<64xf32>
    %210 = vector.shape_cast %209 : vector<64xf32> to vector<64x1xf32>
    %211 = vector.broadcast %210 : vector<64x1xf32> to vector<64x64xf32>
    %212 = arith.subf %208, %211 : vector<64x64xf32>
    %213 = math.exp %212 : vector<64x64xf32>
    %cst_58 = arith.constant dense<0.000000e+00> : vector<64xf32>
    %214 = vector.multi_reduction <add>, %213, %cst_58 [1] : vector<64x64xf32> to vector<64xf32>
    %215 = vector.shape_cast %214 : vector<64xf32> to vector<64x1xf32>
    %216 = tpu.reciprocal %215 {approx = true} : vector<64x1xf32> -> vector<64x1xf32>
    %217 = vector.broadcast %216 : vector<64x1xf32> to vector<64x64xf32>
    %218 = arith.mulf %213, %217 : vector<64x64xf32>
    %219 = arith.truncf %218 : vector<64x64xf32> to vector<64x64xbf16>
    %220 = arith.truncf %205 : vector<64x8xf32> to vector<64x8xbf16>
    %cst_59 = arith.constant dense<0.000000e+00> : vector<64x8xf32>
    %221 = tpu.matmul %219, %220, %cst_59 {dimension_numbers = #tpu.dot_dimension_numbers<[1], [0], [0], [1], [0, 0, 1, 1], [], []>} : vector<64x64xbf16>, vector<64x8xbf16>, vector<64x8xf32> -> vector<64x8xf32>
    %222 = tpu.concatenate %202, %221 in 1 : vector<64x8xf32>, vector<64x8xf32> -> vector<64x16xf32>
    %223 = vector.extract_strided_slice %181 {offsets = [64, 0], sizes = [64, 8], strides = [1, 1]} : vector<128x16xf32> to vector<64x8xf32>
    %224 = vector.extract_strided_slice %182 {offsets = [64, 0], sizes = [64, 8], strides = [1, 1]} : vector<128x16xf32> to vector<64x8xf32>
    %225 = vector.extract_strided_slice %183 {offsets = [64, 0], sizes = [64, 8], strides = [1, 1]} : vector<128x16xf32> to vector<64x8xf32>
    %226 = arith.truncf %223 : vector<64x8xf32> to vector<64x8xbf16>
    %227 = arith.truncf %224 : vector<64x8xf32> to vector<64x8xbf16>
    %cst_60 = arith.constant dense<0.000000e+00> : vector<64x64xf32>
    %228 = tpu.matmul %226, %227, %cst_60 {dimension_numbers = #tpu.dot_dimension_numbers<[1], [1], [0], [0], [0, 0, 1, 0], [], []>} : vector<64x8xbf16>, vector<64x8xbf16>, vector<64x64xf32> -> vector<64x64xf32>
    %cst_61 = arith.constant dense<0xFF800000> : vector<64xf32>
    %229 = vector.multi_reduction <maximumf>, %228, %cst_61 [1] : vector<64x64xf32> to vector<64xf32>
    %230 = vector.shape_cast %229 : vector<64xf32> to vector<64x1xf32>
    %231 = vector.broadcast %230 : vector<64x1xf32> to vector<64x64xf32>
    %232 = arith.subf %228, %231 : vector<64x64xf32>
    %233 = math.exp %232 : vector<64x64xf32>
    %cst_62 = arith.constant dense<0.000000e+00> : vector<64xf32>
    %234 = vector.multi_reduction <add>, %233, %cst_62 [1] : vector<64x64xf32> to vector<64xf32>
    %235 = vector.shape_cast %234 : vector<64xf32> to vector<64x1xf32>
    %236 = tpu.reciprocal %235 {approx = true} : vector<64x1xf32> -> vector<64x1xf32>
    %237 = vector.broadcast %236 : vector<64x1xf32> to vector<64x64xf32>
    %238 = arith.mulf %233, %237 : vector<64x64xf32>
    %239 = arith.truncf %238 : vector<64x64xf32> to vector<64x64xbf16>
    %240 = arith.truncf %225 : vector<64x8xf32> to vector<64x8xbf16>
    %cst_63 = arith.constant dense<0.000000e+00> : vector<64x8xf32>
    %241 = tpu.matmul %239, %240, %cst_63 {dimension_numbers = #tpu.dot_dimension_numbers<[1], [0], [0], [1], [0, 0, 1, 1], [], []>} : vector<64x64xbf16>, vector<64x8xbf16>, vector<64x8xf32> -> vector<64x8xf32>
    %242 = vector.extract_strided_slice %181 {offsets = [64, 8], sizes = [64, 8], strides = [1, 1]} : vector<128x16xf32> to vector<64x8xf32>
    %243 = vector.extract_strided_slice %182 {offsets = [64, 8], sizes = [64, 8], strides = [1, 1]} : vector<128x16xf32> to vector<64x8xf32>
    %244 = vector.extract_strided_slice %183 {offsets = [64, 8], sizes = [64, 8], strides = [1, 1]} : vector<128x16xf32> to vector<64x8xf32>
    %245 = arith.truncf %242 : vector<64x8xf32> to vector<64x8xbf16>
    %246 = arith.truncf %243 : vector<64x8xf32> to vector<64x8xbf16>
    %cst_64 = arith.constant dense<0.000000e+00> : vector<64x64xf32>
    %247 = tpu.matmul %245, %246, %cst_64 {dimension_numbers = #tpu.dot_dimension_numbers<[1], [1], [0], [0], [0, 0, 1, 0], [], []>} : vector<64x8xbf16>, vector<64x8xbf16>, vector<64x64xf32> -> vector<64x64xf32>
    %cst_65 = arith.constant dense<0xFF800000> : vector<64xf32>
    %248 = vector.multi_reduction <maximumf>, %247, %cst_65 [1] : vector<64x64xf32> to vector<64xf32>
    %249 = vector.shape_cast %248 : vector<64xf32> to vector<64x1xf32>
    %250 = vector.broadcast %249 : vector<64x1xf32> to vector<64x64xf32>
    %251 = arith.subf %247, %250 : vector<64x64xf32>
    %252 = math.exp %251 : vector<64x64xf32>
    %cst_66 = arith.constant dense<0.000000e+00> : vector<64xf32>
    %253 = vector.multi_reduction <add>, %252, %cst_66 [1] : vector<64x64xf32> to vector<64xf32>
    %254 = vector.shape_cast %253 : vector<64xf32> to vector<64x1xf32>
    %255 = tpu.reciprocal %254 {approx = true} : vector<64x1xf32> -> vector<64x1xf32>
    %256 = vector.broadcast %255 : vector<64x1xf32> to vector<64x64xf32>
    %257 = arith.mulf %252, %256 : vector<64x64xf32>
    %258 = arith.truncf %257 : vector<64x64xf32> to vector<64x64xbf16>
    %259 = arith.truncf %244 : vector<64x8xf32> to vector<64x8xbf16>
    %cst_67 = arith.constant dense<0.000000e+00> : vector<64x8xf32>
    %260 = tpu.matmul %258, %259, %cst_67 {dimension_numbers = #tpu.dot_dimension_numbers<[1], [0], [0], [1], [0, 0, 1, 1], [], []>} : vector<64x64xbf16>, vector<64x8xbf16>, vector<64x8xf32> -> vector<64x8xf32>
    %261 = tpu.concatenate %241, %260 in 1 : vector<64x8xf32>, vector<64x8xf32> -> vector<64x16xf32>
    %262 = tpu.concatenate %222, %261 in 0 : vector<64x16xf32>, vector<64x16xf32> -> vector<128x16xf32>
    %c1_68 = arith.constant 1 : index
    %c0_69 = arith.constant 0 : index
    %c0_70 = arith.constant 0 : index
    %263 = vector.load %arg3[%c1_68, %c0_69, %c0_70] : memref<2x16x16xbf16, #tpu.memory_space<vmem>>, vector<1x16x16xbf16>
    %264 = vector.shape_cast %263 : vector<1x16x16xbf16> to vector<16x16xbf16>
    %265 = arith.truncf %262 : vector<128x16xf32> to vector<128x16xbf16>
    %cst_71 = arith.constant dense<0.000000e+00> : vector<128x16xf32>
    %266 = tpu.matmul %265, %264, %cst_71 {dimension_numbers = #tpu.dot_dimension_numbers<[1], [0], [0], [1], [0, 0, 1, 1], [], []>} : vector<128x16xbf16>, vector<16x16xbf16>, vector<128x16xf32> -> vector<128x16xf32>
    %267 = vector.broadcast %168 : vector<1x16xf32> to vector<128x16xf32>
    %268 = arith.addf %266, %267 : vector<128x16xf32>
    %269 = arith.addf %164, %268 : vector<128x16xf32>
    %cst_72 = arith.constant dense<0.000000e+00> : vector<128xf32>
    %270 = vector.multi_reduction <add>, %269, %cst_72 [1] : vector<128x16xf32> to vector<128xf32>
    %271 = vector.shape_cast %270 : vector<128xf32> to vector<128x1xf32>
    %cst_73 = arith.constant 1.600000e+01 : f32
    %272 = vector.broadcast %cst_73 : f32 to vector<128x1xf32>
    %273 = arith.divf %271, %272 : vector<128x1xf32>
    %274 = vector.broadcast %273 : vector<128x1xf32> to vector<128x16xf32>
    %275 = arith.subf %269, %274 : vector<128x16xf32>
    %276 = arith.mulf %275, %275 : vector<128x16xf32>
    %cst_74 = arith.constant dense<0.000000e+00> : vector<128xf32>
    %277 = vector.multi_reduction <add>, %276, %cst_74 [1] : vector<128x16xf32> to vector<128xf32>
    %278 = vector.shape_cast %277 : vector<128xf32> to vector<128x1xf32>
    %cst_75 = arith.constant 1.600000e+01 : f32
    %279 = vector.broadcast %cst_75 : f32 to vector<128x1xf32>
    %280 = arith.divf %278, %279 : vector<128x1xf32>
    %281 = vector.broadcast %273 : vector<128x1xf32> to vector<128x16xf32>
    %282 = arith.subf %269, %281 : vector<128x16xf32>
    %cst_76 = arith.constant 9.99999974E-6 : f32
    %283 = vector.broadcast %cst_76 : f32 to vector<128x1xf32>
    %284 = arith.addf %280, %283 : vector<128x1xf32>
    %285 = math.rsqrt %284 : vector<128x1xf32>
    %286 = vector.broadcast %285 : vector<128x1xf32> to vector<128x16xf32>
    %287 = arith.mulf %282, %286 : vector<128x16xf32>
    %288 = vector.broadcast %171 : vector<1x16xf32> to vector<128x16xf32>
    %289 = arith.mulf %287, %288 : vector<128x16xf32>
    %290 = vector.broadcast %172 : vector<1x16xf32> to vector<128x16xf32>
    %291 = arith.addf %289, %290 : vector<128x16xf32>
    %c1_77 = arith.constant 1 : index
    %c0_78 = arith.constant 0 : index
    %c0_79 = arith.constant 0 : index
    %292 = vector.load %arg4[%c1_77, %c0_78, %c0_79] : memref<2x16x64xbf16, #tpu.memory_space<vmem>>, vector<1x16x64xbf16>
    %293 = vector.shape_cast %292 : vector<1x16x64xbf16> to vector<16x64xbf16>
    %294 = arith.truncf %291 : vector<128x16xf32> to vector<128x16xbf16>
    %cst_80 = arith.constant dense<0.000000e+00> : vector<128x64xf32>
    %295 = tpu.matmul %294, %293, %cst_80 {dimension_numbers = #tpu.dot_dimension_numbers<[1], [0], [0], [1], [0, 0, 1, 1], [], []>} : vector<128x16xbf16>, vector<16x64xbf16>, vector<128x64xf32> -> vector<128x64xf32>
    %296 = vector.broadcast %169 : vector<1x64xf32> to vector<128x64xf32>
    %297 = arith.addf %295, %296 : vector<128x64xf32>
    %cst_81 = arith.constant 0.000000e+00 : f32
    %298 = vector.broadcast %cst_81 : f32 to vector<128x64xf32>
    %299 = arith.maximumf %297, %298 : vector<128x64xf32>
    %c1_82 = arith.constant 1 : index
    %c0_83 = arith.constant 0 : index
    %c0_84 = arith.constant 0 : index
    %300 = vector.load %arg5[%c1_82, %c0_83, %c0_84] : memref<2x64x16xbf16, #tpu.memory_space<vmem>>, vector<1x64x16xbf16>
    %301 = vector.shape_cast %300 : vector<1x64x16xbf16> to vector<64x16xbf16>
    %302 = arith.truncf %299 : vector<128x64xf32> to vector<128x64xbf16>
    %cst_85 = arith.constant dense<0.000000e+00> : vector<128x16xf32>
    %303 = tpu.matmul %302, %301, %cst_85 {dimension_numbers = #tpu.dot_dimension_numbers<[1], [0], [0], [1], [0, 0, 1, 1], [], []>} : vector<128x64xbf16>, vector<64x16xbf16>, vector<128x16xf32> -> vector<128x16xf32>
    %304 = vector.broadcast %170 : vector<1x16xf32> to vector<128x16xf32>
    %305 = arith.addf %303, %304 : vector<128x16xf32>
    %306 = arith.addf %291, %305 : vector<128x16xf32>
    %cst_86 = arith.constant dense<0.000000e+00> : vector<128xf32>
    %307 = vector.multi_reduction <add>, %306, %cst_86 [1] : vector<128x16xf32> to vector<128xf32>
    %308 = vector.shape_cast %307 : vector<128xf32> to vector<128x1xf32>
    %cst_87 = arith.constant 1.600000e+01 : f32
    %309 = vector.broadcast %cst_87 : f32 to vector<128x1xf32>
    %310 = arith.divf %308, %309 : vector<128x1xf32>
    %311 = vector.broadcast %310 : vector<128x1xf32> to vector<128x16xf32>
    %312 = arith.subf %306, %311 : vector<128x16xf32>
    %313 = arith.mulf %312, %312 : vector<128x16xf32>
    %cst_88 = arith.constant dense<0.000000e+00> : vector<128xf32>
    %314 = vector.multi_reduction <add>, %313, %cst_88 [1] : vector<128x16xf32> to vector<128xf32>
    %315 = vector.shape_cast %314 : vector<128xf32> to vector<128x1xf32>
    %cst_89 = arith.constant 1.600000e+01 : f32
    %316 = vector.broadcast %cst_89 : f32 to vector<128x1xf32>
    %317 = arith.divf %315, %316 : vector<128x1xf32>
    %318 = vector.broadcast %310 : vector<128x1xf32> to vector<128x16xf32>
    %319 = arith.subf %306, %318 : vector<128x16xf32>
    %cst_90 = arith.constant 9.99999974E-6 : f32
    %320 = vector.broadcast %cst_90 : f32 to vector<128x1xf32>
    %321 = arith.addf %317, %320 : vector<128x1xf32>
    %322 = math.rsqrt %321 : vector<128x1xf32>
    %323 = vector.broadcast %322 : vector<128x1xf32> to vector<128x16xf32>
    %324 = arith.mulf %319, %323 : vector<128x16xf32>
    %325 = vector.broadcast %173 : vector<1x16xf32> to vector<128x16xf32>
    %326 = arith.mulf %324, %325 : vector<128x16xf32>
    %327 = vector.broadcast %174 : vector<1x16xf32> to vector<128x16xf32>
    %328 = arith.addf %326, %327 : vector<128x16xf32>
    %329 = arith.addf %328, %0 : vector<128x16xf32>
    %c0_91 = arith.constant 0 : index
    %c0_92 = arith.constant 0 : index
    %330 = vector.load %arg7[%c0_91, %c0_92] : memref<56x128xbf16, #tpu.memory_space<vmem>>, vector<56x128xbf16>
    %331 = arith.truncf %329 : vector<128x16xf32> to vector<128x16xbf16>
    %cst_93 = arith.constant dense<0.000000e+00> : vector<56x16xf32>
    %332 = tpu.matmul %330, %331, %cst_93 {dimension_numbers = #tpu.dot_dimension_numbers<[1], [0], [0], [1], [0, 0, 1, 1], [], []>} : vector<56x128xbf16>, vector<128x16xbf16>, vector<56x16xf32> -> vector<56x16xf32>
    %c0_94 = arith.constant 0 : index
    %c0_95 = arith.constant 0 : index
    %333 = vector.load %arg10[%c0_94, %c0_95] : memref<8x128xf32, #tpu.memory_space<vmem>>, vector<8x128xf32>
    %334 = vector.extract_strided_slice %333 {offsets = [0, 0], sizes = [1, 64], strides = [1, 1]} : vector<8x128xf32> to vector<1x64xf32>
    %335 = vector.extract_strided_slice %333 {offsets = [1, 0], sizes = [1, 128], strides = [1, 1]} : vector<8x128xf32> to vector<1x128xf32>
    %c0_96 = arith.constant 0 : index
    %c0_97 = arith.constant 0 : index
    %336 = vector.load %arg8[%c0_96, %c0_97] : memref<16x64xbf16, #tpu.memory_space<vmem>>, vector<16x64xbf16>
    %337 = arith.truncf %332 : vector<56x16xf32> to vector<56x16xbf16>
    %cst_98 = arith.constant dense<0.000000e+00> : vector<56x64xf32>
    %338 = tpu.matmul %337, %336, %cst_98 {dimension_numbers = #tpu.dot_dimension_numbers<[1], [0], [0], [1], [0, 0, 1, 1], [], []>} : vector<56x16xbf16>, vector<16x64xbf16>, vector<56x64xf32> -> vector<56x64xf32>
    %339 = vector.broadcast %334 : vector<1x64xf32> to vector<56x64xf32>
    %340 = arith.addf %338, %339 : vector<56x64xf32>
    %cst_99 = arith.constant 0.000000e+00 : f32
    %341 = vector.broadcast %cst_99 : f32 to vector<56x64xf32>
    %342 = arith.maximumf %340, %341 : vector<56x64xf32>
    %c0_100 = arith.constant 0 : index
    %c0_101 = arith.constant 0 : index
    %343 = vector.load %arg9[%c0_100, %c0_101] : memref<64x128xbf16, #tpu.memory_space<vmem>>, vector<64x128xbf16>
    %344 = arith.truncf %342 : vector<56x64xf32> to vector<56x64xbf16>
    %cst_102 = arith.constant dense<0.000000e+00> : vector<56x128xf32>
    %345 = tpu.matmul %344, %343, %cst_102 {dimension_numbers = #tpu.dot_dimension_numbers<[1], [0], [0], [1], [0, 0, 1, 1], [], []>} : vector<56x64xbf16>, vector<64x128xbf16>, vector<56x128xf32> -> vector<56x128xf32>
    %346 = vector.broadcast %335 : vector<1x128xf32> to vector<56x128xf32>
    %347 = arith.addf %345, %346 : vector<56x128xf32>
    %c0_103 = arith.constant 0 : index
    %c0_104 = arith.constant 0 : index
    %348 = vector.load %arg11[%c0_103, %c0_104] : memref<56x128xf32, #tpu.memory_space<vmem>>, vector<56x128xf32>
    tpu.vector_store %arg11[%c0_103, %c0_104], %347 {strides = array<i32>} : memref<56x128xf32, #tpu.memory_space<vmem>>, vector<56x128xf32>,
    return
  }
  func.func @transform_0(%arg0: i32) -> (i32, i32) {
    %c0_i32 = arith.constant 0 : i32
    %c0_i32_0 = arith.constant 0 : i32
    %c0_i32_1 = arith.constant 0 : i32
    return %c0_i32, %c0_i32_0 : i32, i32
  }
  func.func @transform_1(%arg0: i32) -> (i32, i32, i32) {
    %c0_i32 = arith.constant 0 : i32
    %c0_i32_0 = arith.constant 0 : i32
    %c0_i32_1 = arith.constant 0 : i32
    %c0_i32_2 = arith.constant 0 : i32
    return %c0_i32, %c0_i32_0, %c0_i32_1 : i32, i32, i32
  }
  func.func @transform_2(%arg0: i32) -> (i32, i32, i32) {
    %c0_i32 = arith.constant 0 : i32
    %c0_i32_0 = arith.constant 0 : i32
    %c0_i32_1 = arith.constant 0 : i32
    %c0_i32_2 = arith.constant 0 : i32
    return %c0_i32, %c0_i32_0, %c0_i32_1 : i32, i32, i32
  }
  func.func @transform_3(%arg0: i32) -> (i32, i32, i32) {
    %c0_i32 = arith.constant 0 : i32
    %c0_i32_0 = arith.constant 0 : i32
    %c0_i32_1 = arith.constant 0 : i32
    %c0_i32_2 = arith.constant 0 : i32
    return %c0_i32, %c0_i32_0, %c0_i32_1 : i32, i32, i32
  }
  func.func @transform_4(%arg0: i32) -> (i32, i32, i32) {
    %c0_i32 = arith.constant 0 : i32
    %c0_i32_0 = arith.constant 0 : i32
    %c0_i32_1 = arith.constant 0 : i32
    %c0_i32_2 = arith.constant 0 : i32
    return %c0_i32, %c0_i32_0, %c0_i32_1 : i32, i32, i32
  }
  func.func @transform_5(%arg0: i32) -> (i32, i32, i32) {
    %c0_i32 = arith.constant 0 : i32
    %c0_i32_0 = arith.constant 0 : i32
    %c0_i32_1 = arith.constant 0 : i32
    %c0_i32_2 = arith.constant 0 : i32
    return %c0_i32, %c0_i32_0, %c0_i32_1 : i32, i32, i32
  }
  func.func @transform_6(%arg0: i32) -> (i32, i32) {
    %c0_i32 = arith.constant 0 : i32
    %c0_i32_0 = arith.constant 0 : i32
    %c0_i32_1 = arith.constant 0 : i32
    return %c0_i32, %c0_i32_0 : i32, i32
  }
  func.func @transform_7(%arg0: i32) -> (i32, i32) {
    %c0_i32 = arith.constant 0 : i32
    %c0_i32_0 = arith.constant 0 : i32
    %c0_i32_1 = arith.constant 0 : i32
    return %c0_i32, %c0_i32_0 : i32, i32
  }
  func.func @transform_8(%arg0: i32) -> (i32, i32) {
    %c0_i32 = arith.constant 0 : i32
    %c0_i32_0 = arith.constant 0 : i32
    %c0_i32_1 = arith.constant 0 : i32
    return %c0_i32, %c0_i32_0 : i32, i32
  }
  func.func @transform_9(%arg0: i32) -> (i32, i32) {
    %c0_i32 = arith.constant 0 : i32
    %c0_i32_0 = arith.constant 0 : i32
    %c0_i32_1 = arith.constant 0 : i32
    return %c0_i32, %c0_i32_0 : i32, i32
  }
  func.func @transform_10(%arg0: i32) -> (i32, i32) {
    %c0_i32 = arith.constant 0 : i32
    %c0_i32_0 = arith.constant 0 : i32
    %c0_i32_1 = arith.constant 0 : i32
    return %c0_i32, %c0_i32_0 : i32, i32
  }
}

</mosaic_0001>

<llo_original>
// kernel: tpu_custom_call.1
$region0: #{tpu_custom_call.1}
  #allocation0 [shape = 'u32[]', space=smem, size = 0x4, offset = 0x4, fixed_abs, tag = 'smem constant byte address 0x4 - core index']
  #allocation1 [shape = 'u32[144,128]{1,0:T(1,128)}', space=vmem, size = 0x12000, scoped, tag = 'internal scratch']
  %s0 = inlined_call_operand.vmem [shape: f32[128,16], index: 0, kind: input, shape index: {}]
  %s1 = inlined_call_operand.vmem [shape: bf16[2,16,48], index: 1, kind: input, shape index: {}]
  %s2 = inlined_call_operand.vmem [shape: bf16[2,16,16], index: 2, kind: input, shape index: {}]
  %s3 = inlined_call_operand.vmem [shape: bf16[2,16,64], index: 3, kind: input, shape index: {}]
  %s4 = inlined_call_operand.vmem [shape: bf16[2,64,16], index: 4, kind: input, shape index: {}]
  %s5 = inlined_call_operand.vmem [shape: f32[2,8,64], index: 5, kind: input, shape index: {}]
  %s6 = inlined_call_operand.vmem [shape: bf16[56,128], index: 6, kind: input, shape index: {}]
  %s7 = inlined_call_operand.vmem [shape: bf16[16,64], index: 7, kind: input, shape index: {}]
  %s8 = inlined_call_operand.vmem [shape: bf16[64,128], index: 8, kind: input, shape index: {}]
  %s9 = inlined_call_operand.vmem [shape: f32[8,128], index: 9, kind: input, shape index: {}]
  %s10 = inlined_call_operand.hbm [shape: f32[56,128], index: 10, kind: output, shape index: {}]
  %s11 = sld [smem:[#allocation0]]
  $region50: #{tpu_custom_call.1} parent=0
    _
  %s13 = ssub.s32 1, %s11
  %s14 = scalar_select 0, %s13, %s11
  $region1: #{tpu_custom_call.1} parent=0
    #allocation2 [shape = 'u8[28672]{0}', space=vmem, size = 0x7000, scoped, tag = 'output window, operand 0, single buffered']
    #allocation3 [shape = 's32[1]{0}', space=sflag, size = 0x4, scoped, tag = 'scoped memory for tpu_custom_call.1']
    %15 = vsyncpa [#allocation3], 0
    // Predicated region
    $region2: #{tpu_custom_call.1} parent=1 // pred_check
      _
    $region3: #{tpu_custom_call.1} parent=1 // pred_check_branch
      %17 = sbr.rel (0) target = $region5
    $region4: #{tpu_custom_call.1} parent=1 // pred_region
      _
    $region5: #{tpu_custom_call.1} parent=1 // pred_fallthru
      _
    // Predicated region
    $region6: #{tpu_custom_call.1} parent=1 // pred_check
      _
    $region7: #{tpu_custom_call.1} parent=1 // pred_check_branch
      %19 = sbr.rel (0) target = $region9
    $region8: #{tpu_custom_call.1} parent=1 // pred_region
      _
    $region9: #{tpu_custom_call.1} parent=1 // pred_fallthru
      _
    // Predicated region
    $region10: #{tpu_custom_call.1} parent=1 // pred_check
      _
    $region11: #{tpu_custom_call.1} parent=1 // pred_check_branch
      %21 = sbr.rel (0) target = $region13
    $region12: #{tpu_custom_call.1} parent=1 // pred_region
      _
    $region13: #{tpu_custom_call.1} parent=1 // pred_fallthru
      _
    // Predicated region
    $region14: #{tpu_custom_call.1} parent=1 // pred_check
      _
    $region15: #{tpu_custom_call.1} parent=1 // pred_check_branch
      %23 = sbr.rel (0) target = $region17
    $region16: #{tpu_custom_call.1} parent=1 // pred_region
      _
    $region17: #{tpu_custom_call.1} parent=1 // pred_fallthru
      _
    // Predicated region
    $region18: #{tpu_custom_call.1} parent=1 // pred_check
      _
    $region19: #{tpu_custom_call.1} parent=1 // pred_check_branch
      %25 = sbr.rel (0) target = $region21
    $region20: #{tpu_custom_call.1} parent=1 // pred_region
      _
    $region21: #{tpu_custom_call.1} parent=1 // pred_fallthru
      _
    // Predicated region
    $region22: #{tpu_custom_call.1} parent=1 // pred_check
      _
    $region23: #{tpu_custom_call.1} parent=1 // pred_check_branch
      %27 = sbr.rel (0) target = $region25
    $region24: #{tpu_custom_call.1} parent=1 // pred_region
      _
    $region25: #{tpu_custom_call.1} parent=1 // pred_fallthru
      _
    // Predicated region
    $region26: #{tpu_custom_call.1} parent=1 // pred_check
      _
    $region27: #{tpu_custom_call.1} parent=1 // pred_check_branch
      %29 = sbr.rel (0) target = $region29
    $region28: #{tpu_custom_call.1} parent=1 // pred_region
      _
    $region29: #{tpu_custom_call.1} parent=1 // pred_fallthru
      _
    // Predicated region
    $region30: #{tpu_custom_call.1} parent=1 // pred_check
      _
    $region31: #{tpu_custom_call.1} parent=1 // pred_check_branch
      %31 = sbr.rel (0) target = $region33
    $region32: #{tpu_custom_call.1} parent=1 // pred_region
      _
    $region33: #{tpu_custom_call.1} parent=1 // pred_fallthru
      _
    // Predicated region
    $region34: #{tpu_custom_call.1} parent=1 // pred_check
      _
    $region35: #{tpu_custom_call.1} parent=1 // pred_check_branch
      %33 = sbr.rel (0) target = $region37
    $region36: #{tpu_custom_call.1} parent=1 // pred_region
      _
    $region37: #{tpu_custom_call.1} parent=1 // pred_fallthru
      _
    // Predicated region
    $region38: #{tpu_custom_call.1} parent=1 // pred_check
      _
    $region39: #{tpu_custom_call.1} parent=1 // pred_check_branch
      %35 = sbr.rel (0) target = $region41
    $region40: #{tpu_custom_call.1} parent=1 // pred_region
      _
    $region41: #{tpu_custom_call.1} parent=1 // pred_fallthru
      _
    %v37 = vld [vmem:[%s0] sm:$0xff]
    %v38 = vld [vmem:[%s0 + $0x8] sm:$0xff]
    %v39 = vld [vmem:[%s0 + $0x10] sm:$0xff]
    %v40 = vld [vmem:[%s0 + $0x18] sm:$0xff]
    %v41 = vld [vmem:[%s0 + $0x20] sm:$0xff]
    %v42 = vld [vmem:[%s0 + $0x28] sm:$0xff]
    %v43 = vld [vmem:[%s0 + $0x30] sm:$0xff]
    %v44 = vld [vmem:[%s0 + $0x38] sm:$0xff]
    %v45 = vld [vmem:[%s0 + $0x40] sm:$0xff]
    %v46 = vld [vmem:[%s0 + $0x48] sm:$0xff]
    %v47 = vld [vmem:[%s0 + $0x50] sm:$0xff]
    %v48 = vld [vmem:[%s0 + $0x58] sm:$0xff]
    %v49 = vld [vmem:[%s0 + $0x60] sm:$0xff]
    %v50 = vld [vmem:[%s0 + $0x68] sm:$0xff]
    %v51 = vld [vmem:[%s0 + $0x70] sm:$0xff]
    %v52 = vld [vmem:[%s0 + $0x78] sm:$0xff]
    %v53 = vld [vmem:[%s5] sm:$0xff]
    %v54 = vld [vmem:[%s1] sm:$0xf]
    %v55 = vld [vmem:[%s1 + $0x4] sm:$0xf]
    %v56 = vpack.c.bf16 %v38, %v37
    %v57 = vpack.c.bf16 %v40, %v39
    %v58 = vpack.c.bf16 %v42, %v41
    %v59 = vpack.c.bf16 %v44, %v43
    %v60 = vpack.c.bf16 %v46, %v45
    %v61 = vpack.c.bf16 %v48, %v47
    %v62 = vpack.c.bf16 %v50, %v49
    %v63 = vpack.c.bf16 %v52, %v51
    %v64 = vlaneseq
    %v65 = vshrl.u32 %v64, 7
    %v66 = vsub.s32 0, %v65
    %v67 = vrot.slane %v53, %v66
    %v70 = vunpack.c.l.b16 %v54
    %v71 = vunpack.c.l.b16 %v55
    %v72 = vpack.c.b16 %v71, %v70
    %vm74 = vcmask 130048
    %v76 = vsel %vm74, %v56, 0
    %v79 = vsel %vm74, %v57, 0
    %v82 = vsel %vm74, %v58, 0
    %v85 = vsel %vm74, %v59, 0
    %v88 = vsel %vm74, %v60, 0
    %v91 = vsel %vm74, %v61, 0
    %v94 = vsel %vm74, %v62, 0
    %v97 = vsel %vm74, %v63, 0
    %99 = vmatprep.subr.bf16.mxu0 0
    %100 = vmatpush1.bf16.msra.mxu0 %v72
    %101 = vmatprep.subr.bf16.mxu0 0
    %102 = vmatpush1.bf16.msra.mxu0 0
    %103 = vmatprep.subr.bf16.mxu0 0
    %104 = vmatpush1.bf16.msra.mxu0 0
    %105 = vmatprep.subr.bf16.mxu0 0
    %106 = vmatpush1.bf16.msra.mxu0 0
    %107 = vmatprep.subr.bf16.mxu0 0
    %108 = vmatpush1.bf16.msra.mxu0 0
    %109 = vmatprep.subr.bf16.mxu0 0
    %110 = vmatpush1.bf16.msra.mxu0 0
    %111 = vmatprep.subr.bf16.mxu0 0
    %112 = vmatpush1.bf16.msra.mxu0 0
    %113 = vmatprep.subr.bf16.mxu0 0
    %114 = vmatpush1.bf16.msra.mxu0 0
    %115 = vmatprep.subr.bf16.mxu0 0
    %116 = vmatpush1.bf16.msra.mxu0 0
    %117 = vmatprep.subr.bf16.mxu0 0
    %118 = vmatpush1.bf16.msra.mxu0 0
    %119 = vmatprep.subr.bf16.mxu0 0
    %120 = vmatpush1.bf16.msra.mxu0 0
    %121 = vmatprep.subr.bf16.mxu0 0
    %122 = vmatpush1.bf16.msra.mxu0 0
    %123 = vmatprep.subr.bf16.mxu0 0
    %124 = vmatpush1.bf16.msra.mxu0 0
    %125 = vmatprep.subr.bf16.mxu0 0
    %126 = vmatpush1.bf16.msra.mxu0 0
    %127 = vmatprep.subr.bf16.mxu0 0
    %128 = vmatpush1.bf16.msra.mxu0 0
    %129 = vmatprep.subr.bf16.mxu0 0
    %130 = vmatpush1.bf16.msra.mxu0 0
    %131 = vmatprep.mubr.bf16.mxu0 0
    %132 = vmatmul.mubr.bf16.gmra.mrb[0].mxu0 %v76
    %v133 = vpop.f32.mrb[0].mxu0
    %v134 = vadd.f32 %v67, %v133
    %v135 = vpop.f32.mrb[0].mxu0
    %v136 = vpop.f32.mrb[0].mxu0
    %v137 = vadd.f32 %v67, %v136
    %v138 = vpop.f32.mrb[0].mxu0
    %139 = vmatprep.mubr.bf16.mxu0 0
    %140 = vmatmul.mubr.bf16.gmra.mrb[0].mxu0 %v79
    %v141 = vpop.f32.mrb[0].mxu0
    %v142 = vadd.f32 %v67, %v141
    %v143 = vpop.f32.mrb[0].mxu0
    %v144 = vpop.f32.mrb[0].mxu0
    %v145 = vadd.f32 %v67, %v144
    %v146 = vpop.f32.mrb[0].mxu0
    %147 = vmatprep.mubr.bf16.mxu0 0
    %148 = vmatmul.mubr.bf16.gmra.mrb[0].mxu0 %v82
    %v149 = vpop.f32.mrb[0].mxu0
    %v150 = vadd.f32 %v67, %v149
    %v151 = vpop.f32.mrb[0].mxu0
    %v152 = vpop.f32.mrb[0].mxu0
    %v153 = vadd.f32 %v67, %v152
    %v154 = vpop.f32.mrb[0].mxu0
    %155 = vmatprep.mubr.bf16.mxu0 0
    %156 = vmatmul.mubr.bf16.gmra.mrb[0].mxu0 %v85
    %v157 = vpop.f32.mrb[0].mxu0
    %v158 = vadd.f32 %v67, %v157
    %v159 = vpop.f32.mrb[0].mxu0
    %v160 = vpop.f32.mrb[0].mxu0
    %v161 = vadd.f32 %v67, %v160
    %v162 = vpop.f32.mrb[0].mxu0
    %163 = vmatprep.mubr.bf16.mxu0 0
    %164 = vmatmul.mubr.bf16.gmra.mrb[0].mxu0 %v88
    %v165 = vpop.f32.mrb[0].mxu0
    %v166 = vadd.f32 %v67, %v165
    %v167 = vpop.f32.mrb[0].mxu0
    %v168 = vpop.f32.mrb[0].mxu0
    %v169 = vadd.f32 %v67, %v168
    %v170 = vpop.f32.mrb[0].mxu0
    %171 = vmatprep.mubr.bf16.mxu0 0
    %172 = vmatmul.mubr.bf16.gmra.mrb[0].mxu0 %v91
    %v173 = vpop.f32.mrb[0].mxu0
    %v174 = vadd.f32 %v67, %v173
    %v175 = vpop.f32.mrb[0].mxu0
    %v176 = vpop.f32.mrb[0].mxu0
    %v177 = vadd.f32 %v67, %v176
    %v178 = vpop.f32.mrb[0].mxu0
    %179 = vmatprep.mubr.bf16.mxu0 0
    %180 = vmatmul.mubr.bf16.gmra.mrb[0].mxu0 %v94
    %v181 = vpop.f32.mrb[0].mxu0
    %v182 = vadd.f32 %v67, %v181
    %v183 = vpop.f32.mrb[0].mxu0
    %v184 = vpop.f32.mrb[0].mxu0
    %v185 = vadd.f32 %v67, %v184
    %v186 = vpop.f32.mrb[0].mxu0
    %187 = vmatprep.mubr.bf16.mxu0 0
    %188 = vmatmul.mubr.bf16.gmra.mrb[0].mxu0 %v97
    %v189 = vpop.f32.mrb[0].mxu0
    %v190 = vadd.f32 %v67, %v189
    %v191 = vpop.f32.mrb[0].mxu0
    %v192 = vpop.f32.mrb[0].mxu0
    %v193 = vadd.f32 %v67, %v192
    %v194 = vpop.f32.mrb[0].mxu0
    %195 = vdwg.mxu0
    %v196 = vpack.c.bf16 %v137, %v134
    %v197 = vpack.c.bf16 %v145, %v142
    %v198 = vpack.c.bf16 %v153, %v150
    %v199 = vpack.c.bf16 %v161, %v158
    %204 = vrot.lane.b32.xlu0 %v196, 112
    %v205 = vpop.permute.xlu0 %204
    %206 = vrot.lane.b32.xlu0 %v197, 112
    %v207 = vpop.permute.xlu0 %206
    %208 = vrot.lane.b32.xlu0 %v198, 112
    %v209 = vpop.permute.xlu0 %208
    %210 = vrot.lane.b32.xlu0 %v199, 112
    %v211 = vpop.permute.xlu0 %210
    %vm212 = vcmask 64512
    %v214 = vsel %vm212, %v196, 0
    %v217 = vsel %vm212, %v197, 0
    %v220 = vsel %vm212, %v198, 0
    %v223 = vsel %vm212, %v199, 0
    %v226 = vsel %vm212, %v205, 0
    %v229 = vsel %vm212, %v207, 0
    %v232 = vsel %vm212, %v209, 0
    %v235 = vsel %vm212, %v211, 0
    %237 = vmatprep.subr.bf16.mxu0 0
    %238 = vmatpush1.bf16.xpose.msra.mxu0 %v226
    %239 = vmatprep.subr.bf16.mxu0 0
    %240 = vmatpush1.bf16.xpose.msra.mxu0 %v229
    %241 = vmatprep.subr.bf16.mxu0 0
    %242 = vmatpush1.bf16.xpose.msra.mxu0 %v232
    %243 = vmatprep.subr.bf16.mxu0 0
    %244 = vmatpush1.bf16.xpose.msra.mxu0 %v235
    %245 = vmatprep.subr.bf16.mxu0 0
    %246 = vmatpush1.bf16.xpose.msra.mxu0 0
    %247 = vmatprep.subr.bf16.mxu0 0
    %248 = vmatpush1.bf16.xpose.msra.mxu0 0
    %249 = vmatprep.subr.bf16.mxu0 0
    %250 = vmatpush1.bf16.xpose.msra.mxu0 0
    %251 = vmatprep.subr.bf16.mxu0 0
    %252 = vmatpush1.bf16.xpose.msra.mxu0 0
    %253 = vmatprep.subr.bf16.mxu0 0
    %254 = vmatpush1.bf16.xpose.msra.mxu0 0
    %255 = vmatprep.subr.bf16.mxu0 0
    %256 = vmatpush1.bf16.xpose.msra.mxu0 0
    %257 = vmatprep.subr.bf16.mxu0 0
    %258 = vmatpush1.bf16.xpose.msra.mxu0 0
    %259 = vmatprep.subr.bf16.mxu0 0
    %260 = vmatpush1.bf16.xpose.msra.mxu0 0
    %261 = vmatprep.subr.bf16.mxu0 0
    %262 = vmatpush1.bf16.xpose.msra.mxu0 0
    %263 = vmatprep.subr.bf16.mxu0 0
    %264 = vmatpush1.bf16.xpose.msra.mxu0 0
    %265 = vmatprep.subr.bf16.mxu0 0
    %266 = vmatpush1.bf16.xpose.msra.mxu0 0
    %267 = vmatprep.subr.bf16.mxu0 0
    %268 = vmatpush1.bf16.xpose.msra.mxu0 0
    %269 = vmatprep.mubr.bf16.mxu0 0
    %270 = vmatmul.mubr.bf16.gmra.mrb[0].mxu0 %v214
    %v271 = vpop.f32.mrb[0].mxu0
    %v272 = vadd.f32 0.0, %v271
    %v273 = vpop.f32.mrb[0].mxu0
    %v274 = vpop.f32.mrb[0].mxu0
    %v275 = vadd.f32 0.0, %v274
    %v276 = vpop.f32.mrb[0].mxu0
    %277 = vmatprep.mubr.bf16.mxu0 0
    %278 = vmatmul.mubr.bf16.gmra.mrb[0].mxu0 %v217
    %v279 = vpop.f32.mrb[0].mxu0
    %v280 = vadd.f32 0.0, %v279
    %v281 = vpop.f32.mrb[0].mxu0
    %v282 = vpop.f32.mrb[0].mxu0
    %v283 = vadd.f32 0.0, %v282
    %v284 = vpop.f32.mrb[0].mxu0
    %285 = vmatprep.mubr.bf16.mxu0 0
    %286 = vmatmul.mubr.bf16.gmra.mrb[0].mxu0 %v220
    %v287 = vpop.f32.mrb[0].mxu0
    %v288 = vadd.f32 0.0, %v287
    %v289 = vpop.f32.mrb[0].mxu0
    %v290 = vpop.f32.mrb[0].mxu0
    %v291 = vadd.f32 0.0, %v290
    %v292 = vpop.f32.mrb[0].mxu0
    %293 = vmatprep.mubr.bf16.mxu0 0
    %294 = vmatmul.mubr.bf16.gmra.mrb[0].mxu0 %v223
    %v295 = vpop.f32.mrb[0].mxu0
    %v296 = vadd.f32 0.0, %v295
    %v297 = vpop.f32.mrb[0].mxu0
    %v298 = vpop.f32.mrb[0].mxu0
    %v299 = vadd.f32 0.0, %v298
    %v300 = vpop.f32.mrb[0].mxu0
    %301 = vdwg.mxu0
    %vm302 = vcmask 523264
    %v303 = vsel %vm302, %v272, -inf
    %304 = vmax.xlane.f32.xlu0 %v303
    %v305 = vpop.xlane.xlu0 %304
    %v306 = vsel %vm302, %v275, -inf
    %307 = vmax.xlane.f32.xlu0 %v306
    %v308 = vpop.xlane.xlu0 %307
    %v309 = vsel %vm302, %v280, -inf
    %310 = vmax.xlane.f32.xlu0 %v309
    %v311 = vpop.xlane.xlu0 %310
    %v312 = vsel %vm302, %v283, -inf
    %313 = vmax.xlane.f32.xlu0 %v312
    %v314 = vpop.xlane.xlu0 %313
    %v315 = vsel %vm302, %v288, -inf
    %316 = vmax.xlane.f32.xlu0 %v315
    %v317 = vpop.xlane.xlu0 %316
    %v318 = vsel %vm302, %v291, -inf
    %319 = vmax.xlane.f32.xlu0 %v318
    %v320 = vpop.xlane.xlu0 %319
    %v321 = vsel %vm302, %v296, -inf
    %322 = vmax.xlane.f32.xlu0 %v321
    %v323 = vpop.xlane.xlu0 %322
    %v324 = vsel %vm302, %v299, -inf
    %325 = vmax.xlane.f32.xlu0 %v324
    %v326 = vpop.xlane.xlu0 %325
    %v327 = vsub.f32 %v272, %v305
    %v328 = vsub.f32 %v275, %v308
    %v329 = vsub.f32 %v280, %v311
    %v330 = vsub.f32 %v283, %v314
    %v331 = vsub.f32 %v288, %v317
    %v332 = vsub.f32 %v291, %v320
    %v333 = vsub.f32 %v296, %v323
    %v334 = vsub.f32 %v299, %v326
    %v335 = vmul.f32 %v327, 1.442695
    %v336 = vpow.pop %v335
    %v337 = vmul.f32 %v328, 1.442695
    %v338 = vpow.pop %v337
    %v339 = vmul.f32 %v329, 1.442695
    %v340 = vpow.pop %v339
    %v341 = vmul.f32 %v330, 1.442695
    %v342 = vpow.pop %v341
    %v343 = vmul.f32 %v331, 1.442695
    %v344 = vpow.pop %v343
    %v345 = vmul.f32 %v332, 1.442695
    %v346 = vpow.pop %v345
    %v347 = vmul.f32 %v333, 1.442695
    %v348 = vpow.pop %v347
    %v349 = vmul.f32 %v334, 1.442695
    %v350 = vpow.pop %v349
    %v351 = vsel %vm302, %v336, 0.0
    %352 = vadd.xlane.f32.xlu0 %v351
    %v353 = vpop.xlane.xlu0 %352
    %v354 = vsel %vm302, %v338, 0.0
    %355 = vadd.xlane.f32.xlu0 %v354
    %v356 = vpop.xlane.xlu0 %355
    %v357 = vsel %vm302, %v340, 0.0
    %358 = vadd.xlane.f32.xlu0 %v357
    %v359 = vpop.xlane.xlu0 %358
    %v360 = vsel %vm302, %v342, 0.0
    %361 = vadd.xlane.f32.xlu0 %v360
    %v362 = vpop.xlane.xlu0 %361
    %v363 = vsel %vm302, %v344, 0.0
    %364 = vadd.xlane.f32.xlu0 %v363
    %v365 = vpop.xlane.xlu0 %364
    %v366 = vsel %vm302, %v346, 0.0
    %367 = vadd.xlane.f32.xlu0 %v366
    %v368 = vpop.xlane.xlu0 %367
    %v369 = vsel %vm302, %v348, 0.0
    %370 = vadd.xlane.f32.xlu0 %v369
    %v371 = vpop.xlane.xlu0 %370
    %v372 = vsel %vm302, %v350, 0.0
    %373 = vadd.xlane.f32.xlu0 %v372
    %v374 = vpop.xlane.xlu0 %373
    %v375 = vrcp.pop %v353
    %v376 = vrcp.pop %v356
    %v377 = vrcp.pop %v359
    %v378 = vrcp.pop %v362
    %v379 = vrcp.pop %v365
    %v380 = vrcp.pop %v368
    %v381 = vrcp.pop %v371
    %v382 = vrcp.pop %v374
    %v383 = vmul.f32 %v336, %v375
    %v384 = vmul.f32 %v338, %v376
    %v385 = vmul.f32 %v340, %v377
    %v386 = vmul.f32 %v342, %v378
    %v387 = vmul.f32 %v344, %v379
    %v388 = vmul.f32 %v346, %v380
    %v389 = vmul.f32 %v348, %v381
    %v390 = vmul.f32 %v350, %v382
    %v391 = vpack.c.bf16 %v384, %v383
    %v392 = vpack.c.bf16 %v386, %v385
    %v393 = vpack.c.bf16 %v388, %v387
    %v394 = vpack.c.bf16 %v390, %v389
    %395 = vrot.lane.b32.xlu0 %v196, 96
    %v396 = vpop.permute.xlu0 %395
    %397 = vrot.lane.b32.xlu0 %v197, 96
    %v398 = vpop.permute.xlu0 %397
    %399 = vrot.lane.b32.xlu0 %v198, 96
    %v400 = vpop.permute.xlu0 %399
    %401 = vrot.lane.b32.xlu0 %v199, 96
    %v402 = vpop.permute.xlu0 %401
    %v408 = vsel %vm302, %v391, 0
    %v411 = vsel %vm302, %v392, 0
    %v414 = vsel %vm302, %v393, 0
    %v417 = vsel %vm302, %v394, 0
    %419 = vmatprep.subr.bf16.mxu0 0
    %420 = vmatpush1.bf16.msra.mxu0 %v396
    %421 = vmatprep.subr.bf16.mxu0 0
    %422 = vmatpush1.bf16.msra.mxu0 %v398
    %423 = vmatprep.subr.bf16.mxu0 0
    %424 = vmatpush1.bf16.msra.mxu0 %v400
    %425 = vmatprep.subr.bf16.mxu0 0
    %426 = vmatpush1.bf16.msra.mxu0 %v402
    %427 = vmatprep.subr.bf16.mxu0 0
    %428 = vmatpush1.bf16.msra.mxu0 0
    %429 = vmatprep.subr.bf16.mxu0 0
    %430 = vmatpush1.bf16.msra.mxu0 0
    %431 = vmatprep.subr.bf16.mxu0 0
    %432 = vmatpush1.bf16.msra.mxu0 0
    %433 = vmatprep.subr.bf16.mxu0 0
    %434 = vmatpush1.bf16.msra.mxu0 0
    %435 = vmatprep.subr.bf16.mxu0 0
    %436 = vmatpush1.bf16.msra.mxu0 0
    %437 = vmatprep.subr.bf16.mxu0 0
    %438 = vmatpush1.bf16.msra.mxu0 0
    %439 = vmatprep.subr.bf16.mxu0 0
    %440 = vmatpush1.bf16.msra.mxu0 0
    %441 = vmatprep.subr.bf16.mxu0 0
    %442 = vmatpush1.bf16.msra.mxu0 0
    %443 = vmatprep.subr.bf16.mxu0 0
    %444 = vmatpush1.bf16.msra.mxu0 0
    %445 = vmatprep.subr.bf16.mxu0 0
    %446 = vmatpush1.bf16.msra.mxu0 0
    %447 = vmatprep.subr.bf16.mxu0 0
    %448 = vmatpush1.bf16.msra.mxu0 0
    %449 = vmatprep.subr.bf16.mxu0 0
    %450 = vmatpush1.bf16.msra.mxu0 0
    %451 = vmatprep.mubr.bf16.mxu0 0
    %452 = vmatmul.mubr.bf16.gmra.mrb[0].mxu0 %v408
    %v453 = vpop.f32.mrb[0].mxu0
    %v454 = vadd.f32 0.0, %v453
    %v455 = vpop.f32.mrb[0].mxu0
    %v456 = vpop.f32.mrb[0].mxu0
    %v457 = vadd.f32 0.0, %v456
    %v458 = vpop.f32.mrb[0].mxu0
    %459 = vmatprep.mubr.bf16.mxu0 0
    %460 = vmatmul.mubr.bf16.gmra.mrb[0].mxu0 %v411
    %v461 = vpop.f32.mrb[0].mxu0
    %v462 = vadd.f32 0.0, %v461
    %v463 = vpop.f32.mrb[0].mxu0
    %v464 = vpop.f32.mrb[0].mxu0
    %v465 = vadd.f32 0.0, %v464
    %v466 = vpop.f32.mrb[0].mxu0
    %467 = vmatprep.mubr.bf16.mxu0 0
    %468 = vmatmul.mubr.bf16.gmra.mrb[0].mxu0 %v414
    %v469 = vpop.f32.mrb[0].mxu0
    %v470 = vadd.f32 0.0, %v469
    %v471 = vpop.f32.mrb[0].mxu0
    %v472 = vpop.f32.mrb[0].mxu0
    %v473 = vadd.f32 0.0, %v472
    %v474 = vpop.f32.mrb[0].mxu0
    %475 = vmatprep.mubr.bf16.mxu0 0
    %476 = vmatmul.mubr.bf16.gmra.mrb[0].mxu0 %v417
    %v477 = vpop.f32.mrb[0].mxu0
    %v478 = vadd.f32 0.0, %v477
    %v479 = vpop.f32.mrb[0].mxu0
    %v480 = vpop.f32.mrb[0].mxu0
    %v481 = vadd.f32 0.0, %v480
    %v482 = vpop.f32.mrb[0].mxu0
    %483 = vdwg.mxu0
    %484 = vrot.lane.b32.xlu0 %v196, 120
    %v485 = vpop.permute.xlu0 %484
    %486 = vrot.lane.b32.xlu0 %v197, 120
    %v487 = vpop.permute.xlu0 %486
    %488 = vrot.lane.b32.xlu0 %v198, 120
    %v489 = vpop.permute.xlu0 %488
    %490 = vrot.lane.b32.xlu0 %v199, 120
    %v491 = vpop.permute.xlu0 %490
    %492 = vrot.lane.b32.xlu0 %v196, 104
    %v493 = vpop.permute.xlu0 %492
    %494 = vrot.lane.b32.xlu0 %v197, 104
    %v495 = vpop.permute.xlu0 %494
    %496 = vrot.lane.b32.xlu0 %v198, 104
    %v497 = vpop.permute.xlu0 %496
    %498 = vrot.lane.b32.xlu0 %v199, 104
    %v499 = vpop.permute.xlu0 %498
    %v501 = vsel %vm212, %v485, 0
    %v504 = vsel %vm212, %v487, 0
    %v507 = vsel %vm212, %v489, 0
    %v510 = vsel %vm212, %v491, 0
    %v513 = vsel %vm212, %v493, 0
    %v516 = vsel %vm212, %v495, 0
    %v519 = vsel %vm212, %v497, 0
    %v522 = vsel %vm212, %v499, 0
    %524 = vmatprep.subr.bf16.mxu0 0
    %525 = vmatpush1.bf16.xpose.msra.mxu0 %v513
    %526 = vmatprep.subr.bf16.mxu0 0
    %527 = vmatpush1.bf16.xpose.msra.mxu0 %v516
    %528 = vmatprep.subr.bf16.mxu0 0
    %529 = vmatpush1.bf16.xpose.msra.mxu0 %v519
    %530 = vmatprep.subr.bf16.mxu0 0
    %531 = vmatpush1.bf16.xpose.msra.mxu0 %v522
    %532 = vmatprep.subr.bf16.mxu0 0
    %533 = vmatpush1.bf16.xpose.msra.mxu0 0
    %534 = vmatprep.subr.bf16.mxu0 0
    %535 = vmatpush1.bf16.xpose.msra.mxu0 0
    %536 = vmatprep.subr.bf16.mxu0 0
    %537 = vmatpush1.bf16.xpose.msra.mxu0 0
    %538 = vmatprep.subr.bf16.mxu0 0
    %539 = vmatpush1.bf16.xpose.msra.mxu0 0
    %540 = vmatprep.subr.bf16.mxu0 0
    %541 = vmatpush1.bf16.xpose.msra.mxu0 0
    %542 = vmatprep.subr.bf16.mxu0 0
    %543 = vmatpush1.bf16.xpose.msra.mxu0 0
    %544 = vmatprep.subr.bf16.mxu0 0
    %545 = vmatpush1.bf16.xpose.msra.mxu0 0
    %546 = vmatprep.subr.bf16.mxu0 0
    %547 = vmatpush1.bf16.xpose.msra.mxu0 0
    %548 = vmatprep.subr.bf16.mxu0 0
    %549 = vmatpush1.bf16.xpose.msra.mxu0 0
    %550 = vmatprep.subr.bf16.mxu0 0
    %551 = vmatpush1.bf16.xpose.msra.mxu0 0
    %552 = vmatprep.subr.bf16.mxu0 0
    %553 = vmatpush1.bf16.xpose.msra.mxu0 0
    %554 = vmatprep.subr.bf16.mxu0 0
    %555 = vmatpush1.bf16.xpose.msra.mxu0 0
    %556 = vmatprep.mubr.bf16.mxu0 0
    %557 = vmatmul.mubr.bf16.gmra.mrb[0].mxu0 %v501
    %v558 = vpop.f32.mrb[0].mxu0
    %v559 = vadd.f32 0.0, %v558
    %v560 = vpop.f32.mrb[0].mxu0
    %v561 = vpop.f32.mrb[0].mxu0
    %v562 = vadd.f32 0.0, %v561
    %v563 = vpop.f32.mrb[0].mxu0
    %564 = vmatprep.mubr.bf16.mxu0 0
    %565 = vmatmul.mubr.bf16.gmra.mrb[0].mxu0 %v504
    %v566 = vpop.f32.mrb[0].mxu0
    %v567 = vadd.f32 0.0, %v566
    %v568 = vpop.f32.mrb[0].mxu0
    %v569 = vpop.f32.mrb[0].mxu0
    %v570 = vadd.f32 0.0, %v569
    %v571 = vpop.f32.mrb[0].mxu0
    %572 = vmatprep.mubr.bf16.mxu0 0
    %573 = vmatmul.mubr.bf16.gmra.mrb[0].mxu0 %v507
    %v574 = vpop.f32.mrb[0].mxu0
    %v575 = vadd.f32 0.0, %v574
    %v576 = vpop.f32.mrb[0].mxu0
    %v577 = vpop.f32.mrb[0].mxu0
    %v578 = vadd.f32 0.0, %v577
    %v579 = vpop.f32.mrb[0].mxu0
    %580 = vmatprep.mubr.bf16.mxu0 0
    %581 = vmatmul.mubr.bf16.gmra.mrb[0].mxu0 %v510
    %v582 = vpop.f32.mrb[0].mxu0
    %v583 = vadd.f32 0.0, %v582
    %v584 = vpop.f32.mrb[0].mxu0
    %v585 = vpop.f32.mrb[0].mxu0
    %v586 = vadd.f32 0.0, %v585
    %v587 = vpop.f32.mrb[0].mxu0
    %588 = vdwg.mxu0
    %v589 = vsel %vm302, %v559, -inf
    %590 = vmax.xlane.f32.xlu0 %v589
    %v591 = vpop.xlane.xlu0 %590
    %v592 = vsel %vm302, %v562, -inf
    %593 = vmax.xlane.f32.xlu0 %v592
    %v594 = vpop.xlane.xlu0 %593
    %v595 = vsel %vm302, %v567, -inf
    %596 = vmax.xlane.f32.xlu0 %v595
    %v597 = vpop.xlane.xlu0 %596
    %v598 = vsel %vm302, %v570, -inf
    %599 = vmax.xlane.f32.xlu0 %v598
    %v600 = vpop.xlane.xlu0 %599
    %v601 = vsel %vm302, %v575, -inf
    %602 = vmax.xlane.f32.xlu0 %v601
    %v603 = vpop.xlane.xlu0 %602
    %v604 = vsel %vm302, %v578, -inf
    %605 = vmax.xlane.f32.xlu0 %v604
    %v606 = vpop.xlane.xlu0 %605
    %v607 = vsel %vm302, %v583, -inf
    %608 = vmax.xlane.f32.xlu0 %v607
    %v609 = vpop.xlane.xlu0 %608
    %v610 = vsel %vm302, %v586, -inf
    %611 = vmax.xlane.f32.xlu0 %v610
    %v612 = vpop.xlane.xlu0 %611
    %v613 = vsub.f32 %v559, %v591
    %v614 = vsub.f32 %v562, %v594
    %v615 = vsub.f32 %v567, %v597
    %v616 = vsub.f32 %v570, %v600
    %v617 = vsub.f32 %v575, %v603
    %v618 = vsub.f32 %v578, %v606
    %v619 = vsub.f32 %v583, %v609
    %v620 = vsub.f32 %v586, %v612
    %v621 = vmul.f32 %v613, 1.442695
    %v622 = vpow.pop %v621
    %v623 = vmul.f32 %v614, 1.442695
    %v624 = vpow.pop %v623
    %v625 = vmul.f32 %v615, 1.442695
    %v626 = vpow.pop %v625
    %v627 = vmul.f32 %v616, 1.442695
    %v628 = vpow.pop %v627
    %v629 = vmul.f32 %v617, 1.442695
    %v630 = vpow.pop %v629
    %v631 = vmul.f32 %v618, 1.442695
    %v632 = vpow.pop %v631
    %v633 = vmul.f32 %v619, 1.442695
    %v634 = vpow.pop %v633
    %v635 = vmul.f32 %v620, 1.442695
    %v636 = vpow.pop %v635
    %v637 = vsel %vm302, %v622, 0.0
    %638 = vadd.xlane.f32.xlu0 %v637
    %v639 = vpop.xlane.xlu0 %638
    %v640 = vsel %vm302, %v624, 0.0
    %641 = vadd.xlane.f32.xlu0 %v640
    %v642 = vpop.xlane.xlu0 %641
    %v643 = vsel %vm302, %v626, 0.0
    %644 = vadd.xlane.f32.xlu0 %v643
    %v645 = vpop.xlane.xlu0 %644
    %v646 = vsel %vm302, %v628, 0.0
    %647 = vadd.xlane.f32.xlu0 %v646
    %v648 = vpop.xlane.xlu0 %647
    %v649 = vsel %vm302, %v630, 0.0
    %650 = vadd.xlane.f32.xlu0 %v649
    %v651 = vpop.xlane.xlu0 %650
    %v652 = vsel %vm302, %v632, 0.0
    %653 = vadd.xlane.f32.xlu0 %v652
    %v654 = vpop.xlane.xlu0 %653
    %v655 = vsel %vm302, %v634, 0.0
    %656 = vadd.xlane.f32.xlu0 %v655
    %v657 = vpop.xlane.xlu0 %656
    %v658 = vsel %vm302, %v636, 0.0
    %659 = vadd.xlane.f32.xlu0 %v658
    %v660 = vpop.xlane.xlu0 %659
    %v661 = vrcp.pop %v639
    %v662 = vrcp.pop %v642
    %v663 = vrcp.pop %v645
    %v664 = vrcp.pop %v648
    %v665 = vrcp.pop %v651
    %v666 = vrcp.pop %v654
    %v667 = vrcp.pop %v657
    %v668 = vrcp.pop %v660
    %v669 = vmul.f32 %v622, %v661
    %v670 = vmul.f32 %v624, %v662
    %v671 = vmul.f32 %v626, %v663
    %v672 = vmul.f32 %v628, %v664
    %v673 = vmul.f32 %v630, %v665
    %v674 = vmul.f32 %v632, %v666
    %v675 = vmul.f32 %v634, %v667
    %v676 = vmul.f32 %v636, %v668
    %v677 = vpack.c.bf16 %v670, %v669
    %v678 = vpack.c.bf16 %v672, %v671
    %v679 = vpack.c.bf16 %v674, %v673
    %v680 = vpack.c.bf16 %v676, %v675
    %681 = vrot.lane.b32.xlu0 %v196, 88
    %v682 = vpop.permute.xlu0 %681
    %683 = vrot.lane.b32.xlu0 %v197, 88
    %v684 = vpop.permute.xlu0 %683
    %685 = vrot.lane.b32.xlu0 %v198, 88
    %v686 = vpop.permute.xlu0 %685
    %687 = vrot.lane.b32.xlu0 %v199, 88
    %v688 = vpop.permute.xlu0 %687
    %v694 = vsel %vm302, %v677, 0
    %v697 = vsel %vm302, %v678, 0
    %v700 = vsel %vm302, %v679, 0
    %v703 = vsel %vm302, %v680, 0
    %705 = vmatprep.subr.bf16.mxu0 0
    %706 = vmatpush1.bf16.msra.mxu0 %v682
    %707 = vmatprep.subr.bf16.mxu0 0
    %708 = vmatpush1.bf16.msra.mxu0 %v684
    %709 = vmatprep.subr.bf16.mxu0 0
    %710 = vmatpush1.bf16.msra.mxu0 %v686
    %711 = vmatprep.subr.bf16.mxu0 0
    %712 = vmatpush1.bf16.msra.mxu0 %v688
    %713 = vmatprep.subr.bf16.mxu0 0
    %714 = vmatpush1.bf16.msra.mxu0 0
    %715 = vmatprep.subr.bf16.mxu0 0
    %716 = vmatpush1.bf16.msra.mxu0 0
    %717 = vmatprep.subr.bf16.mxu0 0
    %718 = vmatpush1.bf16.msra.mxu0 0
    %719 = vmatprep.subr.bf16.mxu0 0
    %720 = vmatpush1.bf16.msra.mxu0 0
    %721 = vmatprep.subr.bf16.mxu0 0
    %722 = vmatpush1.bf16.msra.mxu0 0
    %723 = vmatprep.subr.bf16.mxu0 0
    %724 = vmatpush1.bf16.msra.mxu0 0
    %725 = vmatprep.subr.bf16.mxu0 0
    %726 = vmatpush1.bf16.msra.mxu0 0
    %727 = vmatprep.subr.bf16.mxu0 0
    %728 = vmatpush1.bf16.msra.mxu0 0
    %729 = vmatprep.subr.bf16.mxu0 0
    %730 = vmatpush1.bf16.msra.mxu0 0
    %731 = vmatprep.subr.bf16.mxu0 0
    %732 = vmatpush1.bf16.msra.mxu0 0
    %733 = vmatprep.subr.bf16.mxu0 0
    %734 = vmatpush1.bf16.msra.mxu0 0
    %735 = vmatprep.subr.bf16.mxu0 0
    %736 = vmatpush1.bf16.msra.mxu0 0
    %737 = vmatprep.mubr.bf16.mxu0 0
    %738 = vmatmul.mubr.bf16.gmra.mrb[0].mxu0 %v694
    %v739 = vpop.f32.mrb[0].mxu0
    %v740 = vadd.f32 0.0, %v739
    %v741 = vpop.f32.mrb[0].mxu0
    %v742 = vpop.f32.mrb[0].mxu0
    %v743 = vadd.f32 0.0, %v742
    %v744 = vpop.f32.mrb[0].mxu0
    %745 = vmatprep.mubr.bf16.mxu0 0
    %746 = vmatmul.mubr.bf16.gmra.mrb[0].mxu0 %v697
    %v747 = vpop.f32.mrb[0].mxu0
    %v748 = vadd.f32 0.0, %v747
    %v749 = vpop.f32.mrb[0].mxu0
    %v750 = vpop.f32.mrb[0].mxu0
    %v751 = vadd.f32 0.0, %v750
    %v752 = vpop.f32.mrb[0].mxu0
    %753 = vmatprep.mubr.bf16.mxu0 0
    %754 = vmatmul.mubr.bf16.gmra.mrb[0].mxu0 %v700
    %v755 = vpop.f32.mrb[0].mxu0
    %v756 = vadd.f32 0.0, %v755
    %v757 = vpop.f32.mrb[0].mxu0
    %v758 = vpop.f32.mrb[0].mxu0
    %v759 = vadd.f32 0.0, %v758
    %v760 = vpop.f32.mrb[0].mxu0
    %761 = vmatprep.mubr.bf16.mxu0 0
    %762 = vmatmul.mubr.bf16.gmra.mrb[0].mxu0 %v703
    %v763 = vpop.f32.mrb[0].mxu0
    %v764 = vadd.f32 0.0, %v763
    %v765 = vpop.f32.mrb[0].mxu0
    %v766 = vpop.f32.mrb[0].mxu0
    %v767 = vadd.f32 0.0, %v766
    %v768 = vpop.f32.mrb[0].mxu0
    %769 = vdwg.mxu0
    %778 = vrot.lane.b32.xlu0 %v740, 8
    %v779 = vpop.permute.xlu0 %778
    %780 = vrot.lane.b32.xlu0 %v743, 8
    %v781 = vpop.permute.xlu0 %780
    %782 = vrot.lane.b32.xlu0 %v748, 8
    %v783 = vpop.permute.xlu0 %782
    %784 = vrot.lane.b32.xlu0 %v751, 8
    %v785 = vpop.permute.xlu0 %784
    %786 = vrot.lane.b32.xlu0 %v756, 8
    %v787 = vpop.permute.xlu0 %786
    %788 = vrot.lane.b32.xlu0 %v759, 8
    %v789 = vpop.permute.xlu0 %788
    %790 = vrot.lane.b32.xlu0 %v764, 8
    %v791 = vpop.permute.xlu0 %790
    %792 = vrot.lane.b32.xlu0 %v767, 8
    %v793 = vpop.permute.xlu0 %792
    %v802 = vsel %vm212, %v454, %v779
    %v803 = vsel %vm212, %v457, %v781
    %v804 = vsel %vm212, %v462, %v783
    %v805 = vsel %vm212, %v465, %v785
    %v806 = vsel %vm212, %v470, %v787
    %v807 = vsel %vm212, %v473, %v789
    %v808 = vsel %vm212, %v478, %v791
    %v809 = vsel %vm212, %v481, %v793
    %v810 = vpack.c.bf16 %v169, %v166
    %v811 = vpack.c.bf16 %v177, %v174
    %v812 = vpack.c.bf16 %v185, %v182
    %v813 = vpack.c.bf16 %v193, %v190
    %818 = vrot.lane.b32.xlu0 %v810, 112
    %v819 = vpop.permute.xlu0 %818
    %820 = vrot.lane.b32.xlu0 %v811, 112
    %v821 = vpop.permute.xlu0 %820
    %822 = vrot.lane.b32.xlu0 %v812, 112
    %v823 = vpop.permute.xlu0 %822
    %824 = vrot.lane.b32.xlu0 %v813, 112
    %v825 = vpop.permute.xlu0 %824
    %v827 = vsel %vm212, %v810, 0
    %v830 = vsel %vm212, %v811, 0
    %v833 = vsel %vm212, %v812, 0
    %v836 = vsel %vm212, %v813, 0
    %v839 = vsel %vm212, %v819, 0
    %v842 = vsel %vm212, %v821, 0
    %v845 = vsel %vm212, %v823, 0
    %v848 = vsel %vm212, %v825, 0
    %850 = vmatprep.subr.bf16.mxu0 0
    %851 = vmatpush1.bf16.xpose.msra.mxu0 %v839
    %852 = vmatprep.subr.bf16.mxu0 0
    %853 = vmatpush1.bf16.xpose.msra.mxu0 %v842
    %854 = vmatprep.subr.bf16.mxu0 0
    %855 = vmatpush1.bf16.xpose.msra.mxu0 %v845
    %856 = vmatprep.subr.bf16.mxu0 0
    %857 = vmatpush1.bf16.xpose.msra.mxu0 %v848
    %858 = vmatprep.subr.bf16.mxu0 0
    %859 = vmatpush1.bf16.xpose.msra.mxu0 0
    %860 = vmatprep.subr.bf16.mxu0 0
    %861 = vmatpush1.bf16.xpose.msra.mxu0 0
    %862 = vmatprep.subr.bf16.mxu0 0
    %863 = vmatpush1.bf16.xpose.msra.mxu0 0
    %864 = vmatprep.subr.bf16.mxu0 0
    %865 = vmatpush1.bf16.xpose.msra.mxu0 0
    %866 = vmatprep.subr.bf16.mxu0 0
    %867 = vmatpush1.bf16.xpose.msra.mxu0 0
    %868 = vmatprep.subr.bf16.mxu0 0
    %869 = vmatpush1.bf16.xpose.msra.mxu0 0
    %870 = vmatprep.subr.bf16.mxu0 0
    %871 = vmatpush1.bf16.xpose.msra.mxu0 0
    %872 = vmatprep.subr.bf16.mxu0 0
    %873 = vmatpush1.bf16.xpose.msra.mxu0 0
    %874 = vmatprep.subr.bf16.mxu0 0
    %875 = vmatpush1.bf16.xpose.msra.mxu0 0
    %876 = vmatprep.subr.bf16.mxu0 0
    %877 = vmatpush1.bf16.xpose.msra.mxu0 0
    %878 = vmatprep.subr.bf16.mxu0 0
    %879 = vmatpush1.bf16.xpose.msra.mxu0 0
    %880 = vmatprep.subr.bf16.mxu0 0
    %881 = vmatpush1.bf16.xpose.msra.mxu0 0
    %882 = vmatprep.mubr.bf16.mxu0 0
    %883 = vmatmul.mubr.bf16.gmra.mrb[0].mxu0 %v827
    %v884 = vpop.f32.mrb[0].mxu0
    %v885 = vadd.f32 0.0, %v884
    %v886 = vpop.f32.mrb[0].mxu0
    %v887 = vpop.f32.mrb[0].mxu0
    %v888 = vadd.f32 0.0, %v887
    %v889 = vpop.f32.mrb[0].mxu0
    %890 = vmatprep.mubr.bf16.mxu0 0
    %891 = vmatmul.mubr.bf16.gmra.mrb[0].mxu0 %v830
    %v892 = vpop.f32.mrb[0].mxu0
    %v893 = vadd.f32 0.0, %v892
    %v894 = vpop.f32.mrb[0].mxu0
    %v895 = vpop.f32.mrb[0].mxu0
    %v896 = vadd.f32 0.0, %v895
    %v897 = vpop.f32.mrb[0].mxu0
    %898 = vmatprep.mubr.bf16.mxu0 0
    %899 = vmatmul.mubr.bf16.gmra.mrb[0].mxu0 %v833
    %v900 = vpop.f32.mrb[0].mxu0
    %v901 = vadd.f32 0.0, %v900
    %v902 = vpop.f32.mrb[0].mxu0
    %v903 = vpop.f32.mrb[0].mxu0
    %v904 = vadd.f32 0.0, %v903
    %v905 = vpop.f32.mrb[0].mxu0
    %906 = vmatprep.mubr.bf16.mxu0 0
    %907 = vmatmul.mubr.bf16.gmra.mrb[0].mxu0 %v836
    %v908 = vpop.f32.mrb[0].mxu0
    %v909 = vadd.f32 0.0, %v908
    %v910 = vpop.f32.mrb[0].mxu0
    %v911 = vpop.f32.mrb[0].mxu0
    %v912 = vadd.f32 0.0, %v911
    %v913 = vpop.f32.mrb[0].mxu0
    %914 = vdwg.mxu0
    %v915 = vsel %vm302, %v885, -inf
    %916 = vmax.xlane.f32.xlu0 %v915
    %v917 = vpop.xlane.xlu0 %916
    %v918 = vsel %vm302, %v888, -inf
    %919 = vmax.xlane.f32.xlu0 %v918
    %v920 = vpop.xlane.xlu0 %919
    %v921 = vsel %vm302, %v893, -inf
    %922 = vmax.xlane.f32.xlu0 %v921
    %v923 = vpop.xlane.xlu0 %922
    %v924 = vsel %vm302, %v896, -inf
    %925 = vmax.xlane.f32.xlu0 %v924
    %v926 = vpop.xlane.xlu0 %925
    %v927 = vsel %vm302, %v901, -inf
    %928 = vmax.xlane.f32.xlu0 %v927
    %v929 = vpop.xlane.xlu0 %928
    %v930 = vsel %vm302, %v904, -inf
    %931 = vmax.xlane.f32.xlu0 %v930
    %v932 = vpop.xlane.xlu0 %931
    %v933 = vsel %vm302, %v909, -inf
    %934 = vmax.xlane.f32.xlu0 %v933
    %v935 = vpop.xlane.xlu0 %934
    %v936 = vsel %vm302, %v912, -inf
    %937 = vmax.xlane.f32.xlu0 %v936
    %v938 = vpop.xlane.xlu0 %937
    %v939 = vsub.f32 %v885, %v917
    %v940 = vsub.f32 %v888, %v920
    %v941 = vsub.f32 %v893, %v923
    %v942 = vsub.f32 %v896, %v926
    %v943 = vsub.f32 %v901, %v929
    %v944 = vsub.f32 %v904, %v932
    %v945 = vsub.f32 %v909, %v935
    %v946 = vsub.f32 %v912, %v938
    %v947 = vmul.f32 %v939, 1.442695
    %v948 = vpow.pop %v947
    %v949 = vmul.f32 %v940, 1.442695
    %v950 = vpow.pop %v949
    %v951 = vmul.f32 %v941, 1.442695
    %v952 = vpow.pop %v951
    %v953 = vmul.f32 %v942, 1.442695
    %v954 = vpow.pop %v953
    %v955 = vmul.f32 %v943, 1.442695
    %v956 = vpow.pop %v955
    %v957 = vmul.f32 %v944, 1.442695
    %v958 = vpow.pop %v957
    %v959 = vmul.f32 %v945, 1.442695
    %v960 = vpow.pop %v959
    %v961 = vmul.f32 %v946, 1.442695
    %v962 = vpow.pop %v961
    %v963 = vsel %vm302, %v948, 0.0
    %964 = vadd.xlane.f32.xlu0 %v963
    %v965 = vpop.xlane.xlu0 %964
    %v966 = vsel %vm302, %v950, 0.0
    %967 = vadd.xlane.f32.xlu0 %v966
    %v968 = vpop.xlane.xlu0 %967
    %v969 = vsel %vm302, %v952, 0.0
    %970 = vadd.xlane.f32.xlu0 %v969
    %v971 = vpop.xlane.xlu0 %970
    %v972 = vsel %vm302, %v954, 0.0
    %973 = vadd.xlane.f32.xlu0 %v972
    %v974 = vpop.xlane.xlu0 %973
    %v975 = vsel %vm302, %v956, 0.0
    %976 = vadd.xlane.f32.xlu0 %v975
    %v977 = vpop.xlane.xlu0 %976
    %v978 = vsel %vm302, %v958, 0.0
    %979 = vadd.xlane.f32.xlu0 %v978
    %v980 = vpop.xlane.xlu0 %979
    %v981 = vsel %vm302, %v960, 0.0
    %982 = vadd.xlane.f32.xlu0 %v981
    %v983 = vpop.xlane.xlu0 %982
    %v984 = vsel %vm302, %v962, 0.0
    %985 = vadd.xlane.f32.xlu0 %v984
    %v986 = vpop.xlane.xlu0 %985
    %v987 = vrcp.pop %v965
    %v988 = vrcp.pop %v968
    %v989 = vrcp.pop %v971
    %v990 = vrcp.pop %v974
    %v991 = vrcp.pop %v977
    %v992 = vrcp.pop %v980
    %v993 = vrcp.pop %v983
    %v994 = vrcp.pop %v986
    %v995 = vmul.f32 %v948, %v987
    %v996 = vmul.f32 %v950, %v988
    %v997 = vmul.f32 %v952, %v989
    %v998 = vmul.f32 %v954, %v990
    %v999 = vmul.f32 %v956, %v991
    %v1000 = vmul.f32 %v958, %v992
    %v1001 = vmul.f32 %v960, %v993
    %v1002 = vmul.f32 %v962, %v994
    %v1003 = vpack.c.bf16 %v996, %v995
    %v1004 = vpack.c.bf16 %v998, %v997
    %v1005 = vpack.c.bf16 %v1000, %v999
    %v1006 = vpack.c.bf16 %v1002, %v1001
    %1007 = vrot.lane.b32.xlu0 %v810, 96
    %v1008 = vpop.permute.xlu0 %1007
    %1009 = vrot.lane.b32.xlu0 %v811, 96
    %v1010 = vpop.permute.xlu0 %1009
    %1011 = vrot.lane.b32.xlu0 %v812, 96
    %v1012 = vpop.permute.xlu0 %1011
    %1013 = vrot.lane.b32.xlu0 %v813, 96
    %v1014 = vpop.permute.xlu0 %1013
    %v1020 = vsel %vm302, %v1003, 0
    %v1023 = vsel %vm302, %v1004, 0
    %v1026 = vsel %vm302, %v1005, 0
    %v1029 = vsel %vm302, %v1006, 0
    %1031 = vmatprep.subr.bf16.mxu0 0
    %1032 = vmatpush1.bf16.msra.mxu0 %v1008
    %1033 = vmatprep.subr.bf16.mxu0 0
    %1034 = vmatpush1.bf16.msra.mxu0 %v1010
    %1035 = vmatprep.subr.bf16.mxu0 0
    %1036 = vmatpush1.bf16.msra.mxu0 %v1012
    %1037 = vmatprep.subr.bf16.mxu0 0
    %1038 = vmatpush1.bf16.msra.mxu0 %v1014
    %1039 = vmatprep.subr.bf16.mxu0 0
    %1040 = vmatpush1.bf16.msra.mxu0 0
    %1041 = vmatprep.subr.bf16.mxu0 0
    %1042 = vmatpush1.bf16.msra.mxu0 0
    %1043 = vmatprep.subr.bf16.mxu0 0
    %1044 = vmatpush1.bf16.msra.mxu0 0
    %1045 = vmatprep.subr.bf16.mxu0 0
    %1046 = vmatpush1.bf16.msra.mxu0 0
    %1047 = vmatprep.subr.bf16.mxu0 0
    %1048 = vmatpush1.bf16.msra.mxu0 0
    %1049 = vmatprep.subr.bf16.mxu0 0
    %1050 = vmatpush1.bf16.msra.mxu0 0
    %1051 = vmatprep.subr.bf16.mxu0 0
    %1052 = vmatpush1.bf16.msra.mxu0 0
    %1053 = vmatprep.subr.bf16.mxu0 0
    %1054 = vmatpush1.bf16.msra.mxu0 0
    %1055 = vmatprep.subr.bf16.mxu0 0
    %1056 = vmatpush1.bf16.msra.mxu0 0
    %1057 = vmatprep.subr.bf16.mxu0 0
    %1058 = vmatpush1.bf16.msra.mxu0 0
    %1059 = vmatprep.subr.bf16.mxu0 0
    %1060 = vmatpush1.bf16.msra.mxu0 0
    %1061 = vmatprep.subr.bf16.mxu0 0
    %1062 = vmatpush1.bf16.msra.mxu0 0
    %1063 = vmatprep.mubr.bf16.mxu0 0
    %1064 = vmatmul.mubr.bf16.gmra.mrb[0].mxu0 %v1020
    %v1065 = vpop.f32.mrb[0].mxu0
    %v1066 = vadd.f32 0.0, %v1065
    %v1067 = vpop.f32.mrb[0].mxu0
    %v1068 = vpop.f32.mrb[0].mxu0
    %v1069 = vadd.f32 0.0, %v1068
    %v1070 = vpop.f32.mrb[0].mxu0
    %1071 = vmatprep.mubr.bf16.mxu0 0
    %1072 = vmatmul.mubr.bf16.gmra.mrb[0].mxu0 %v1023
    %v1073 = vpop.f32.mrb[0].mxu0
    %v1074 = vadd.f32 0.0, %v1073
    %v1075 = vpop.f32.mrb[0].mxu0
    %v1076 = vpop.f32.mrb[0].mxu0
    %v1077 = vadd.f32 0.0, %v1076
    %v1078 = vpop.f32.mrb[0].mxu0
    %1079 = vmatprep.mubr.bf16.mxu0 0
    %1080 = vmatmul.mubr.bf16.gmra.mrb[0].mxu0 %v1026
    %v1081 = vpop.f32.mrb[0].mxu0
    %v1082 = vadd.f32 0.0, %v1081
    %v1083 = vpop.f32.mrb[0].mxu0
    %v1084 = vpop.f32.mrb[0].mxu0
    %v1085 = vadd.f32 0.0, %v1084
    %v1086 = vpop.f32.mrb[0].mxu0
    %1087 = vmatprep.mubr.bf16.mxu0 0
    %1088 = vmatmul.mubr.bf16.gmra.mrb[0].mxu0 %v1029
    %v1089 = vpop.f32.mrb[0].mxu0
    %v1090 = vadd.f32 0.0, %v1089
    %v1091 = vpop.f32.mrb[0].mxu0
    %v1092 = vpop.f32.mrb[0].mxu0
    %v1093 = vadd.f32 0.0, %v1092
    %v1094 = vpop.f32.mrb[0].mxu0
    %1095 = vdwg.mxu0
    %1096 = vrot.lane.b32.xlu0 %v810, 120
    %v1097 = vpop.permute.xlu0 %1096
    %1098 = vrot.lane.b32.xlu0 %v811, 120
    %v1099 = vpop.permute.xlu0 %1098
    %1100 = vrot.lane.b32.xlu0 %v812, 120
    %v1101 = vpop.permute.xlu0 %1100
    %1102 = vrot.lane.b32.xlu0 %v813, 120
    %v1103 = vpop.permute.xlu0 %1102
    %1104 = vrot.lane.b32.xlu0 %v810, 104
    %v1105 = vpop.permute.xlu0 %1104
    %1106 = vrot.lane.b32.xlu0 %v811, 104
    %v1107 = vpop.permute.xlu0 %1106
    %1108 = vrot.lane.b32.xlu0 %v812, 104
    %v1109 = vpop.permute.xlu0 %1108
    %1110 = vrot.lane.b32.xlu0 %v813, 104
    %v1111 = vpop.permute.xlu0 %1110
    %v1113 = vsel %vm212, %v1097, 0
    %v1116 = vsel %vm212, %v1099, 0
    %v1119 = vsel %vm212, %v1101, 0
    %v1122 = vsel %vm212, %v1103, 0
    %v1125 = vsel %vm212, %v1105, 0
    %v1128 = vsel %vm212, %v1107, 0
    %v1131 = vsel %vm212, %v1109, 0
    %v1134 = vsel %vm212, %v1111, 0
    %1136 = vmatprep.subr.bf16.mxu0 0
    %1137 = vmatpush1.bf16.xpose.msra.mxu0 %v1125
    %1138 = vmatprep.subr.bf16.mxu0 0
    %1139 = vmatpush1.bf16.xpose.msra.mxu0 %v1128
    %1140 = vmatprep.subr.bf16.mxu0 0
    %1141 = vmatpush1.bf16.xpose.msra.mxu0 %v1131
    %1142 = vmatprep.subr.bf16.mxu0 0
    %1143 = vmatpush1.bf16.xpose.msra.mxu0 %v1134
    %1144 = vmatprep.subr.bf16.mxu0 0
    %1145 = vmatpush1.bf16.xpose.msra.mxu0 0
    %1146 = vmatprep.subr.bf16.mxu0 0
    %1147 = vmatpush1.bf16.xpose.msra.mxu0 0
    %1148 = vmatprep.subr.bf16.mxu0 0
    %1149 = vmatpush1.bf16.xpose.msra.mxu0 0
    %1150 = vmatprep.subr.bf16.mxu0 0
    %1151 = vmatpush1.bf16.xpose.msra.mxu0 0
    %1152 = vmatprep.subr.bf16.mxu0 0
    %1153 = vmatpush1.bf16.xpose.msra.mxu0 0
    %1154 = vmatprep.subr.bf16.mxu0 0
    %1155 = vmatpush1.bf16.xpose.msra.mxu0 0
    %1156 = vmatprep.subr.bf16.mxu0 0
    %1157 = vmatpush1.bf16.xpose.msra.mxu0 0
    %1158 = vmatprep.subr.bf16.mxu0 0
    %1159 = vmatpush1.bf16.xpose.msra.mxu0 0
    %1160 = vmatprep.subr.bf16.mxu0 0
    %1161 = vmatpush1.bf16.xpose.msra.mxu0 0
    %1162 = vmatprep.subr.bf16.mxu0 0
    %1163 = vmatpush1.bf16.xpose.msra.mxu0 0
    %1164 = vmatprep.subr.bf16.mxu0 0
    %1165 = vmatpush1.bf16.xpose.msra.mxu0 0
    %1166 = vmatprep.subr.bf16.mxu0 0
    %1167 = vmatpush1.bf16.xpose.msra.mxu0 0
    %1168 = vmatprep.mubr.bf16.mxu0 0
    %1169 = vmatmul.mubr.bf16.gmra.mrb[0].mxu0 %v1113
    %v1170 = vpop.f32.mrb[0].mxu0
    %v1171 = vadd.f32 0.0, %v1170
    %v1172 = vpop.f32.mrb[0].mxu0
    %v1173 = vpop.f32.mrb[0].mxu0
    %v1174 = vadd.f32 0.0, %v1173
    %v1175 = vpop.f32.mrb[0].mxu0
    %1176 = vmatprep.mubr.bf16.mxu0 0
    %1177 = vmatmul.mubr.bf16.gmra.mrb[0].mxu0 %v1116
    %v1178 = vpop.f32.mrb[0].mxu0
    %v1179 = vadd.f32 0.0, %v1178
    %v1180 = vpop.f32.mrb[0].mxu0
    %v1181 = vpop.f32.mrb[0].mxu0
    %v1182 = vadd.f32 0.0, %v1181
    %v1183 = vpop.f32.mrb[0].mxu0
    %1184 = vmatprep.mubr.bf16.mxu0 0
    %1185 = vmatmul.mubr.bf16.gmra.mrb[0].mxu0 %v1119
    %v1186 = vpop.f32.mrb[0].mxu0
    %v1187 = vadd.f32 0.0, %v1186
    %v1188 = vpop.f32.mrb[0].mxu0
    %v1189 = vpop.f32.mrb[0].mxu0
    %v1190 = vadd.f32 0.0, %v1189
    %v1191 = vpop.f32.mrb[0].mxu0
    %1192 = vmatprep.mubr.bf16.mxu0 0
    %1193 = vmatmul.mubr.bf16.gmra.mrb[0].mxu0 %v1122
    %v1194 = vpop.f32.mrb[0].mxu0
    %v1195 = vadd.f32 0.0, %v1194
    %v1196 = vpop.f32.mrb[0].mxu0
    %v1197 = vpop.f32.mrb[0].mxu0
    %v1198 = vadd.f32 0.0, %v1197
    %v1199 = vpop.f32.mrb[0].mxu0
    %1200 = vdwg.mxu0
    %v1201 = vsel %vm302, %v1171, -inf
    %1202 = vmax.xlane.f32.xlu0 %v1201
    %v1203 = vpop.xlane.xlu0 %1202
    %v1204 = vsel %vm302, %v1174, -inf
    %1205 = vmax.xlane.f32.xlu0 %v1204
    %v1206 = vpop.xlane.xlu0 %1205
    %v1207 = vsel %vm302, %v1179, -inf
    %1208 = vmax.xlane.f32.xlu0 %v1207
    %v1209 = vpop.xlane.xlu0 %1208
    %v1210 = vsel %vm302, %v1182, -inf
    %1211 = vmax.xlane.f32.xlu0 %v1210
    %v1212 = vpop.xlane.xlu0 %1211
    %v1213 = vsel %vm302, %v1187, -inf
    %1214 = vmax.xlane.f32.xlu0 %v1213
    %v1215 = vpop.xlane.xlu0 %1214
    %v1216 = vsel %vm302, %v1190, -inf
    %1217 = vmax.xlane.f32.xlu0 %v1216
    %v1218 = vpop.xlane.xlu0 %1217
    %v1219 = vsel %vm302, %v1195, -inf
    %1220 = vmax.xlane.f32.xlu0 %v1219
    %v1221 = vpop.xlane.xlu0 %1220
    %v1222 = vsel %vm302, %v1198, -inf
    %1223 = vmax.xlane.f32.xlu0 %v1222
    %v1224 = vpop.xlane.xlu0 %1223
    %v1225 = vsub.f32 %v1171, %v1203
    %v1226 = vsub.f32 %v1174, %v1206
    %v1227 = vsub.f32 %v1179, %v1209
    %v1228 = vsub.f32 %v1182, %v1212
    %v1229 = vsub.f32 %v1187, %v1215
    %v1230 = vsub.f32 %v1190, %v1218
    %v1231 = vsub.f32 %v1195, %v1221
    %v1232 = vsub.f32 %v1198, %v1224
    %v1233 = vmul.f32 %v1225, 1.442695
    %v1234 = vpow.pop %v1233
    %v1235 = vmul.f32 %v1226, 1.442695
    %v1236 = vpow.pop %v1235
    %v1237 = vmul.f32 %v1227, 1.442695
    %v1238 = vpow.pop %v1237
    %v1239 = vmul.f32 %v1228, 1.442695
    %v1240 = vpow.pop %v1239
    %v1241 = vmul.f32 %v1229, 1.442695
    %v1242 = vpow.pop %v1241
    %v1243 = vmul.f32 %v1230, 1.442695
    %v1244 = vpow.pop %v1243
    %v1245 = vmul.f32 %v1231, 1.442695
    %v1246 = vpow.pop %v1245
    %v1247 = vmul.f32 %v1232, 1.442695
    %v1248 = vpow.pop %v1247
    %v1249 = vsel %vm302, %v1234, 0.0
    %1250 = vadd.xlane.f32.xlu0 %v1249
    %v1251 = vpop.xlane.xlu0 %1250
    %v1252 = vsel %vm302, %v1236, 0.0
    %1253 = vadd.xlane.f32.xlu0 %v1252
    %v1254 = vpop.xlane.xlu0 %1253
    %v1255 = vsel %vm302, %v1238, 0.0
    %1256 = vadd.xlane.f32.xlu0 %v1255
    %v1257 = vpop.xlane.xlu0 %1256
    %v1258 = vsel %vm302, %v1240, 0.0
    %1259 = vadd.xlane.f32.xlu0 %v1258
    %v1260 = vpop.xlane.xlu0 %1259
    %v1261 = vsel %vm302, %v1242, 0.0
    %1262 = vadd.xlane.f32.xlu0 %v1261
    %v1263 = vpop.xlane.xlu0 %1262
    %v1264 = vsel %vm302, %v1244, 0.0
    %1265 = vadd.xlane.f32.xlu0 %v1264
    %v1266 = vpop.xlane.xlu0 %1265
    %v1267 = vsel %vm302, %v1246, 0.0
    %1268 = vadd.xlane.f32.xlu0 %v1267
    %v1269 = vpop.xlane.xlu0 %1268
    %v1270 = vsel %vm302, %v1248, 0.0
    %1271 = vadd.xlane.f32.xlu0 %v1270
    %v1272 = vpop.xlane.xlu0 %1271
    %v1273 = vrcp.pop %v1251
    %v1274 = vrcp.pop %v1254
    %v1275 = vrcp.pop %v1257
    %v1276 = vrcp.pop %v1260
    %v1277 = vrcp.pop %v1263
    %v1278 = vrcp.pop %v1266
    %v1279 = vrcp.pop %v1269
    %v1280 = vrcp.pop %v1272
    %v1281 = vmul.f32 %v1234, %v1273
    %v1282 = vmul.f32 %v1236, %v1274
    %v1283 = vmul.f32 %v1238, %v1275
    %v1284 = vmul.f32 %v1240, %v1276
    %v1285 = vmul.f32 %v1242, %v1277
    %v1286 = vmul.f32 %v1244, %v1278
    %v1287 = vmul.f32 %v1246, %v1279
    %v1288 = vmul.f32 %v1248, %v1280
    %v1289 = vpack.c.bf16 %v1282, %v1281
    %v1290 = vpack.c.bf16 %v1284, %v1283
    %v1291 = vpack.c.bf16 %v1286, %v1285
    %v1292 = vpack.c.bf16 %v1288, %v1287
    %1293 = vrot.lane.b32.xlu0 %v810, 88
    %v1294 = vpop.permute.xlu0 %1293
    %1295 = vrot.lane.b32.xlu0 %v811, 88
    %v1296 = vpop.permute.xlu0 %1295
    %1297 = vrot.lane.b32.xlu0 %v812, 88
    %v1298 = vpop.permute.xlu0 %1297
    %1299 = vrot.lane.b32.xlu0 %v813, 88
    %v1300 = vpop.permute.xlu0 %1299
    %v1306 = vsel %vm302, %v1289, 0
    %v1309 = vsel %vm302, %v1290, 0
    %v1312 = vsel %vm302, %v1291, 0
    %v1315 = vsel %vm302, %v1292, 0
    %1317 = vmatprep.subr.bf16.mxu0 0
    %1318 = vmatpush1.bf16.msra.mxu0 %v1294
    %1319 = vmatprep.subr.bf16.mxu0 0
    %1320 = vmatpush1.bf16.msra.mxu0 %v1296
    %1321 = vmatprep.subr.bf16.mxu0 0
    %1322 = vmatpush1.bf16.msra.mxu0 %v1298
    %1323 = vmatprep.subr.bf16.mxu0 0
    %1324 = vmatpush1.bf16.msra.mxu0 %v1300
    %1325 = vmatprep.subr.bf16.mxu0 0
    %1326 = vmatpush1.bf16.msra.mxu0 0
    %1327 = vmatprep.subr.bf16.mxu0 0
    %1328 = vmatpush1.bf16.msra.mxu0 0
    %1329 = vmatprep.subr.bf16.mxu0 0
    %1330 = vmatpush1.bf16.msra.mxu0 0
    %1331 = vmatprep.subr.bf16.mxu0 0
    %1332 = vmatpush1.bf16.msra.mxu0 0
    %1333 = vmatprep.subr.bf16.mxu0 0
    %1334 = vmatpush1.bf16.msra.mxu0 0
    %1335 = vmatprep.subr.bf16.mxu0 0
    %1336 = vmatpush1.bf16.msra.mxu0 0
    %1337 = vmatprep.subr.bf16.mxu0 0
    %1338 = vmatpush1.bf16.msra.mxu0 0
    %1339 = vmatprep.subr.bf16.mxu0 0
    %1340 = vmatpush1.bf16.msra.mxu0 0
    %1341 = vmatprep.subr.bf16.mxu0 0
    %1342 = vmatpush1.bf16.msra.mxu0 0
    %1343 = vmatprep.subr.bf16.mxu0 0
    %1344 = vmatpush1.bf16.msra.mxu0 0
    %1345 = vmatprep.subr.bf16.mxu0 0
    %1346 = vmatpush1.bf16.msra.mxu0 0
    %1347 = vmatprep.subr.bf16.mxu0 0
    %1348 = vmatpush1.bf16.msra.mxu0 0
    %1349 = vmatprep.mubr.bf16.mxu0 0
    %1350 = vmatmul.mubr.bf16.gmra.mrb[0].mxu0 %v1306
    %v1351 = vpop.f32.mrb[0].mxu0
    %v1352 = vadd.f32 0.0, %v1351
    %v1353 = vpop.f32.mrb[0].mxu0
    %v1354 = vpop.f32.mrb[0].mxu0
    %v1355 = vadd.f32 0.0, %v1354
    %v1356 = vpop.f32.mrb[0].mxu0
    %1357 = vmatprep.mubr.bf16.mxu0 0
    %1358 = vmatmul.mubr.bf16.gmra.mrb[0].mxu0 %v1309
    %v1359 = vpop.f32.mrb[0].mxu0
    %v1360 = vadd.f32 0.0, %v1359
    %v1361 = vpop.f32.mrb[0].mxu0
    %v1362 = vpop.f32.mrb[0].mxu0
    %v1363 = vadd.f32 0.0, %v1362
    %v1364 = vpop.f32.mrb[0].mxu0
    %1365 = vmatprep.mubr.bf16.mxu0 0
    %1366 = vmatmul.mubr.bf16.gmra.mrb[0].mxu0 %v1312
    %v1367 = vpop.f32.mrb[0].mxu0
    %v1368 = vadd.f32 0.0, %v1367
    %v1369 = vpop.f32.mrb[0].mxu0
    %v1370 = vpop.f32.mrb[0].mxu0
    %v1371 = vadd.f32 0.0, %v1370
    %v1372 = vpop.f32.mrb[0].mxu0
    %1373 = vmatprep.mubr.bf16.mxu0 0
    %1374 = vmatmul.mubr.bf16.gmra.mrb[0].mxu0 %v1315
    %v1375 = vpop.f32.mrb[0].mxu0
    %v1376 = vadd.f32 0.0, %v1375
    %v1377 = vpop.f32.mrb[0].mxu0
    %v1378 = vpop.f32.mrb[0].mxu0
    %v1379 = vadd.f32 0.0, %v1378
    %v1380 = vpop.f32.mrb[0].mxu0
    %1381 = vdwg.mxu0
    %1390 = vrot.lane.b32.xlu0 %v1352, 8
    %v1391 = vpop.permute.xlu0 %1390
    %1392 = vrot.lane.b32.xlu0 %v1355, 8
    %v1393 = vpop.permute.xlu0 %1392
    %1394 = vrot.lane.b32.xlu0 %v1360, 8
    %v1395 = vpop.permute.xlu0 %1394
    %1396 = vrot.lane.b32.xlu0 %v1363, 8
    %v1397 = vpop.permute.xlu0 %1396
    %1398 = vrot.lane.b32.xlu0 %v1368, 8
    %v1399 = vpop.permute.xlu0 %1398
    %1400 = vrot.lane.b32.xlu0 %v1371, 8
    %v1401 = vpop.permute.xlu0 %1400
    %1402 = vrot.lane.b32.xlu0 %v1376, 8
    %v1403 = vpop.permute.xlu0 %1402
    %1404 = vrot.lane.b32.xlu0 %v1379, 8
    %v1405 = vpop.permute.xlu0 %1404
    %v1414 = vsel %vm212, %v1066, %v1391
    %v1415 = vsel %vm212, %v1069, %v1393
    %v1416 = vsel %vm212, %v1074, %v1395
    %v1417 = vsel %vm212, %v1077, %v1397
    %v1418 = vsel %vm212, %v1082, %v1399
    %v1419 = vsel %vm212, %v1085, %v1401
    %v1420 = vsel %vm212, %v1090, %v1403
    %v1421 = vsel %vm212, %v1093, %v1405
    %v1422 = vld [vmem:[%s2] sm:$0xf]
    %v1423 = vld [vmem:[%s2 + $0x4] sm:$0xf]
    %v1424 = vpack.c.bf16 %v803, %v802
    %v1425 = vpack.c.bf16 %v805, %v804
    %v1426 = vpack.c.bf16 %v807, %v806
    %v1427 = vpack.c.bf16 %v809, %v808
    %v1428 = vpack.c.bf16 %v1415, %v1414
    %v1429 = vpack.c.bf16 %v1417, %v1416
    %v1430 = vpack.c.bf16 %v1419, %v1418
    %v1431 = vpack.c.bf16 %v1421, %v1420
    %v1432 = vlaneseq
    %v1433 = vshrl.u32 %v1432, 7
    %v1434 = vsub.s32 1, %v1433
    %v1435 = vrot.slane %v53, %v1434
    %v1438 = vunpack.c.l.b16 %v1422
    %v1439 = vunpack.c.l.b16 %v1423
    %v1440 = vpack.c.b16 %v1439, %v1438
    %v1443 = vsel %vm74, %v1424, 0
    %v1446 = vsel %vm74, %v1425, 0
    %v1449 = vsel %vm74, %v1426, 0
    %v1452 = vsel %vm74, %v1427, 0
    %v1455 = vsel %vm74, %v1428, 0
    %v1458 = vsel %vm74, %v1429, 0
    %v1461 = vsel %vm74, %v1430, 0
    %v1464 = vsel %vm74, %v1431, 0
    %1466 = vmatprep.subr.bf16.mxu0 0
    %1467 = vmatpush1.bf16.msra.mxu0 %v1440
    %1468 = vmatprep.subr.bf16.mxu0 0
    %1469 = vmatpush1.bf16.msra.mxu0 0
    %1470 = vmatprep.subr.bf16.mxu0 0
    %1471 = vmatpush1.bf16.msra.mxu0 0
    %1472 = vmatprep.subr.bf16.mxu0 0
    %1473 = vmatpush1.bf16.msra.mxu0 0
    %1474 = vmatprep.subr.bf16.mxu0 0
    %1475 = vmatpush1.bf16.msra.mxu0 0
    %1476 = vmatprep.subr.bf16.mxu0 0
    %1477 = vmatpush1.bf16.msra.mxu0 0
    %1478 = vmatprep.subr.bf16.mxu0 0
    %1479 = vmatpush1.bf16.msra.mxu0 0
    %1480 = vmatprep.subr.bf16.mxu0 0
    %1481 = vmatpush1.bf16.msra.mxu0 0
    %1482 = vmatprep.subr.bf16.mxu0 0
    %1483 = vmatpush1.bf16.msra.mxu0 0
    %1484 = vmatprep.subr.bf16.mxu0 0
    %1485 = vmatpush1.bf16.msra.mxu0 0
    %1486 = vmatprep.subr.bf16.mxu0 0
    %1487 = vmatpush1.bf16.msra.mxu0 0
    %1488 = vmatprep.subr.bf16.mxu0 0
    %1489 = vmatpush1.bf16.msra.mxu0 0
    %1490 = vmatprep.subr.bf16.mxu0 0
    %1491 = vmatpush1.bf16.msra.mxu0 0
    %1492 = vmatprep.subr.bf16.mxu0 0
    %1493 = vmatpush1.bf16.msra.mxu0 0
    %1494 = vmatprep.subr.bf16.mxu0 0
    %1495 = vmatpush1.bf16.msra.mxu0 0
    %1496 = vmatprep.subr.bf16.mxu0 0
    %1497 = vmatpush1.bf16.msra.mxu0 0
    %1498 = vmatprep.mubr.bf16.mxu0 0
    %1499 = vmatmul.mubr.bf16.gmra.mrb[0].mxu0 %v1443
    %v1500 = vpop.f32.mrb[0].mxu0
    %v1501 = vadd.f32 %v1435, %v1500
    %v1502 = vpop.f32.mrb[0].mxu0
    %v1503 = vpop.f32.mrb[0].mxu0
    %v1504 = vadd.f32 %v1435, %v1503
    %v1505 = vpop.f32.mrb[0].mxu0
    %1506 = vmatprep.mubr.bf16.mxu0 0
    %1507 = vmatmul.mubr.bf16.gmra.mrb[0].mxu0 %v1446
    %v1508 = vpop.f32.mrb[0].mxu0
    %v1509 = vadd.f32 %v1435, %v1508
    %v1510 = vpop.f32.mrb[0].mxu0
    %v1511 = vpop.f32.mrb[0].mxu0
    %v1512 = vadd.f32 %v1435, %v1511
    %v1513 = vpop.f32.mrb[0].mxu0
    %1514 = vmatprep.mubr.bf16.mxu0 0
    %1515 = vmatmul.mubr.bf16.gmra.mrb[0].mxu0 %v1449
    %v1516 = vpop.f32.mrb[0].mxu0
    %v1517 = vadd.f32 %v1435, %v1516
    %v1518 = vpop.f32.mrb[0].mxu0
    %v1519 = vpop.f32.mrb[0].mxu0
    %v1520 = vadd.f32 %v1435, %v1519
    %v1521 = vpop.f32.mrb[0].mxu0
    %1522 = vmatprep.mubr.bf16.mxu0 0
    %1523 = vmatmul.mubr.bf16.gmra.mrb[0].mxu0 %v1452
    %v1524 = vpop.f32.mrb[0].mxu0
    %v1525 = vadd.f32 %v1435, %v1524
    %v1526 = vpop.f32.mrb[0].mxu0
    %v1527 = vpop.f32.mrb[0].mxu0
    %v1528 = vadd.f32 %v1435, %v1527
    %v1529 = vpop.f32.mrb[0].mxu0
    %1530 = vmatprep.mubr.bf16.mxu0 0
    %1531 = vmatmul.mubr.bf16.gmra.mrb[0].mxu0 %v1455
    %v1532 = vpop.f32.mrb[0].mxu0
    %v1533 = vadd.f32 %v1435, %v1532
    %v1534 = vpop.f32.mrb[0].mxu0
    %v1535 = vpop.f32.mrb[0].mxu0
    %v1536 = vadd.f32 %v1435, %v1535
    %v1537 = vpop.f32.mrb[0].mxu0
    %1538 = vmatprep.mubr.bf16.mxu0 0
    %1539 = vmatmul.mubr.bf16.gmra.mrb[0].mxu0 %v1458
    %v1540 = vpop.f32.mrb[0].mxu0
    %v1541 = vadd.f32 %v1435, %v1540
    %v1542 = vpop.f32.mrb[0].mxu0
    %v1543 = vpop.f32.mrb[0].mxu0
    %v1544 = vadd.f32 %v1435, %v1543
    %v1545 = vpop.f32.mrb[0].mxu0
    %1546 = vmatprep.mubr.bf16.mxu0 0
    %1547 = vmatmul.mubr.bf16.gmra.mrb[0].mxu0 %v1461
    %v1548 = vpop.f32.mrb[0].mxu0
    %v1549 = vadd.f32 %v1435, %v1548
    %v1550 = vpop.f32.mrb[0].mxu0
    %v1551 = vpop.f32.mrb[0].mxu0
    %v1552 = vadd.f32 %v1435, %v1551
    %v1553 = vpop.f32.mrb[0].mxu0
    %1554 = vmatprep.mubr.bf16.mxu0 0
    %1555 = vmatmul.mubr.bf16.gmra.mrb[0].mxu0 %v1464
    %v1556 = vpop.f32.mrb[0].mxu0
    %v1557 = vadd.f32 %v1435, %v1556
    %v1558 = vpop.f32.mrb[0].mxu0
    %v1559 = vpop.f32.mrb[0].mxu0
    %v1560 = vadd.f32 %v1435, %v1559
    %v1561 = vpop.f32.mrb[0].mxu0
    %1562 = vdwg.mxu0
    %v1563 = vadd.f32 %v37, %v1501
    %v1564 = vadd.f32 %v38, %v1504
    %v1565 = vadd.f32 %v39, %v1509
    %v1566 = vadd.f32 %v40, %v1512
    %v1567 = vadd.f32 %v41, %v1517
    %v1568 = vadd.f32 %v42, %v1520
    %v1569 = vadd.f32 %v43, %v1525
    %v1570 = vadd.f32 %v44, %v1528
    %v1571 = vadd.f32 %v45, %v1533
    %v1572 = vadd.f32 %v46, %v1536
    %v1573 = vadd.f32 %v47, %v1541
    %v1574 = vadd.f32 %v48, %v1544
    %v1575 = vadd.f32 %v49, %v1549
    %v1576 = vadd.f32 %v50, %v1552
    %v1577 = vadd.f32 %v51, %v1557
    %v1578 = vadd.f32 %v52, %v1560
    %v1579 = vsel %vm74, %v1563, 0.0
    %1580 = vadd.xlane.f32.xlu0 %v1579
    %v1581 = vpop.xlane.xlu0 %1580
    %v1582 = vsel %vm74, %v1564, 0.0
    %1583 = vadd.xlane.f32.xlu0 %v1582
    %v1584 = vpop.xlane.xlu0 %1583
    %v1585 = vsel %vm74, %v1565, 0.0
    %1586 = vadd.xlane.f32.xlu0 %v1585
    %v1587 = vpop.xlane.xlu0 %1586
    %v1588 = vsel %vm74, %v1566, 0.0
    %1589 = vadd.xlane.f32.xlu0 %v1588
    %v1590 = vpop.xlane.xlu0 %1589
    %v1591 = vsel %vm74, %v1567, 0.0
    %1592 = vadd.xlane.f32.xlu0 %v1591
    %v1593 = vpop.xlane.xlu0 %1592
    %v1594 = vsel %vm74, %v1568, 0.0
    %1595 = vadd.xlane.f32.xlu0 %v1594
    %v1596 = vpop.xlane.xlu0 %1595
    %v1597 = vsel %vm74, %v1569, 0.0
    %1598 = vadd.xlane.f32.xlu0 %v1597
    %v1599 = vpop.xlane.xlu0 %1598
    %v1600 = vsel %vm74, %v1570, 0.0
    %1601 = vadd.xlane.f32.xlu0 %v1600
    %v1602 = vpop.xlane.xlu0 %1601
    %v1603 = vsel %vm74, %v1571, 0.0
    %1604 = vadd.xlane.f32.xlu0 %v1603
    %v1605 = vpop.xlane.xlu0 %1604
    %v1606 = vsel %vm74, %v1572, 0.0
    %1607 = vadd.xlane.f32.xlu0 %v1606
    %v1608 = vpop.xlane.xlu0 %1607
    %v1609 = vsel %vm74, %v1573, 0.0
    %1610 = vadd.xlane.f32.xlu0 %v1609
    %v1611 = vpop.xlane.xlu0 %1610
    %v1612 = vsel %vm74, %v1574, 0.0
    %1613 = vadd.xlane.f32.xlu0 %v1612
    %v1614 = vpop.xlane.xlu0 %1613
    %v1615 = vsel %vm74, %v1575, 0.0
    %1616 = vadd.xlane.f32.xlu0 %v1615
    %v1617 = vpop.xlane.xlu0 %1616
    %v1618 = vsel %vm74, %v1576, 0.0
    %1619 = vadd.xlane.f32.xlu0 %v1618
    %v1620 = vpop.xlane.xlu0 %1619
    %v1621 = vsel %vm74, %v1577, 0.0
    %1622 = vadd.xlane.f32.xlu0 %v1621
    %v1623 = vpop.xlane.xlu0 %1622
    %v1624 = vsel %vm74, %v1578, 0.0
    %1625 = vadd.xlane.f32.xlu0 %v1624
    %v1626 = vpop.xlane.xlu0 %1625
    %v1627 = vrcp.pop 16.0
    %v1628 = vmul.f32 %v1581, %v1627
    %v1629 = vmul.f32 %v1584, %v1627
    %v1630 = vmul.f32 %v1587, %v1627
    %v1631 = vmul.f32 %v1590, %v1627
    %v1632 = vmul.f32 %v1593, %v1627
    %v1633 = vmul.f32 %v1596, %v1627
    %v1634 = vmul.f32 %v1599, %v1627
    %v1635 = vmul.f32 %v1602, %v1627
    %v1636 = vmul.f32 %v1605, %v1627
    %v1637 = vmul.f32 %v1608, %v1627
    %v1638 = vmul.f32 %v1611, %v1627
    %v1639 = vmul.f32 %v1614, %v1627
    %v1640 = vmul.f32 %v1617, %v1627
    %v1641 = vmul.f32 %v1620, %v1627
    %v1642 = vmul.f32 %v1623, %v1627
    %v1643 = vmul.f32 %v1626, %v1627
    %v1644 = vsub.f32 %v1563, %v1628
    %v1645 = vsub.f32 %v1564, %v1629
    %v1646 = vsub.f32 %v1565, %v1630
    %v1647 = vsub.f32 %v1566, %v1631
    %v1648 = vsub.f32 %v1567, %v1632
    %v1649 = vsub.f32 %v1568, %v1633
    %v1650 = vsub.f32 %v1569, %v1634
    %v1651 = vsub.f32 %v1570, %v1635
    %v1652 = vsub.f32 %v1571, %v1636
    %v1653 = vsub.f32 %v1572, %v1637
    %v1654 = vsub.f32 %v1573, %v1638
    %v1655 = vsub.f32 %v1574, %v1639
    %v1656 = vsub.f32 %v1575, %v1640
    %v1657 = vsub.f32 %v1576, %v1641
    %v1658 = vsub.f32 %v1577, %v1642
    %v1659 = vsub.f32 %v1578, %v1643
    %v1660 = vmul.f32 %v1644, %v1644
    %v1661 = vmul.f32 %v1645, %v1645
    %v1662 = vmul.f32 %v1646, %v1646
    %v1663 = vmul.f32 %v1647, %v1647
    %v1664 = vmul.f32 %v1648, %v1648
    %v1665 = vmul.f32 %v1649, %v1649
    %v1666 = vmul.f32 %v1650, %v1650
    %v1667 = vmul.f32 %v1651, %v1651
    %v1668 = vmul.f32 %v1652, %v1652
    %v1669 = vmul.f32 %v1653, %v1653
    %v1670 = vmul.f32 %v1654, %v1654
    %v1671 = vmul.f32 %v1655, %v1655
    %v1672 = vmul.f32 %v1656, %v1656
    %v1673 = vmul.f32 %v1657, %v1657
    %v1674 = vmul.f32 %v1658, %v1658
    %v1675 = vmul.f32 %v1659, %v1659
    %v1676 = vsel %vm74, %v1660, 0.0
    %1677 = vadd.xlane.f32.xlu0 %v1676
    %v1678 = vpop.xlane.xlu0 %1677
    %v1679 = vsel %vm74, %v1661, 0.0
    %1680 = vadd.xlane.f32.xlu0 %v1679
    %v1681 = vpop.xlane.xlu0 %1680
    %v1682 = vsel %vm74, %v1662, 0.0
    %1683 = vadd.xlane.f32.xlu0 %v1682
    %v1684 = vpop.xlane.xlu0 %1683
    %v1685 = vsel %vm74, %v1663, 0.0
    %1686 = vadd.xlane.f32.xlu0 %v1685
    %v1687 = vpop.xlane.xlu0 %1686
    %v1688 = vsel %vm74, %v1664, 0.0
    %1689 = vadd.xlane.f32.xlu0 %v1688
    %v1690 = vpop.xlane.xlu0 %1689
    %v1691 = vsel %vm74, %v1665, 0.0
    %1692 = vadd.xlane.f32.xlu0 %v1691
    %v1693 = vpop.xlane.xlu0 %1692
    %v1694 = vsel %vm74, %v1666, 0.0
    %1695 = vadd.xlane.f32.xlu0 %v1694
    %v1696 = vpop.xlane.xlu0 %1695
    %v1697 = vsel %vm74, %v1667, 0.0
    %1698 = vadd.xlane.f32.xlu0 %v1697
    %v1699 = vpop.xlane.xlu0 %1698
    %v1700 = vsel %vm74, %v1668, 0.0
    %1701 = vadd.xlane.f32.xlu0 %v1700
    %v1702 = vpop.xlane.xlu0 %1701
    %v1703 = vsel %vm74, %v1669, 0.0
    %1704 = vadd.xlane.f32.xlu0 %v1703
    %v1705 = vpop.xlane.xlu0 %1704
    %v1706 = vsel %vm74, %v1670, 0.0
    %1707 = vadd.xlane.f32.xlu0 %v1706
    %v1708 = vpop.xlane.xlu0 %1707
    %v1709 = vsel %vm74, %v1671, 0.0
    %1710 = vadd.xlane.f32.xlu0 %v1709
    %v1711 = vpop.xlane.xlu0 %1710
    %v1712 = vsel %vm74, %v1672, 0.0
    %1713 = vadd.xlane.f32.xlu0 %v1712
    %v1714 = vpop.xlane.xlu0 %1713
    %v1715 = vsel %vm74, %v1673, 0.0
    %1716 = vadd.xlane.f32.xlu0 %v1715
    %v1717 = vpop.xlane.xlu0 %1716
    %v1718 = vsel %vm74, %v1674, 0.0
    %1719 = vadd.xlane.f32.xlu0 %v1718
    %v1720 = vpop.xlane.xlu0 %1719
    %v1721 = vsel %vm74, %v1675, 0.0
    %1722 = vadd.xlane.f32.xlu0 %v1721
    %v1723 = vpop.xlane.xlu0 %1722
    %v1724 = vmul.f32 %v1678, %v1627
    %v1725 = vmul.f32 %v1681, %v1627
    %v1726 = vmul.f32 %v1684, %v1627
    %v1727 = vmul.f32 %v1687, %v1627
    %v1728 = vmul.f32 %v1690, %v1627
    %v1729 = vmul.f32 %v1693, %v1627
    %v1730 = vmul.f32 %v1696, %v1627
    %v1731 = vmul.f32 %v1699, %v1627
    %v1732 = vmul.f32 %v1702, %v1627
    %v1733 = vmul.f32 %v1705, %v1627
    %v1734 = vmul.f32 %v1708, %v1627
    %v1735 = vmul.f32 %v1711, %v1627
    %v1736 = vmul.f32 %v1714, %v1627
    %v1737 = vmul.f32 %v1717, %v1627
    %v1738 = vmul.f32 %v1720, %v1627
    %v1739 = vmul.f32 %v1723, %v1627
    %v1740 = vadd.f32 %v1724, 1e-05
    %v1741 = vadd.f32 %v1725, 1e-05
    %v1742 = vadd.f32 %v1726, 1e-05
    %v1743 = vadd.f32 %v1727, 1e-05
    %v1744 = vadd.f32 %v1728, 1e-05
    %v1745 = vadd.f32 %v1729, 1e-05
    %v1746 = vadd.f32 %v1730, 1e-05
    %v1747 = vadd.f32 %v1731, 1e-05
    %v1748 = vadd.f32 %v1732, 1e-05
    %v1749 = vadd.f32 %v1733, 1e-05
    %v1750 = vadd.f32 %v1734, 1e-05
    %v1751 = vadd.f32 %v1735, 1e-05
    %v1752 = vadd.f32 %v1736, 1e-05
    %v1753 = vadd.f32 %v1737, 1e-05
    %v1754 = vadd.f32 %v1738, 1e-05
    %v1755 = vadd.f32 %v1739, 1e-05
    %v1756 = vrsqrt.pop %v1740
    %v1757 = vrsqrt.pop %v1741
    %v1758 = vrsqrt.pop %v1742
    %v1759 = vrsqrt.pop %v1743
    %v1760 = vrsqrt.pop %v1744
    %v1761 = vrsqrt.pop %v1745
    %v1762 = vrsqrt.pop %v1746
    %v1763 = vrsqrt.pop %v1747
    %v1764 = vrsqrt.pop %v1748
    %v1765 = vrsqrt.pop %v1749
    %v1766 = vrsqrt.pop %v1750
    %v1767 = vrsqrt.pop %v1751
    %v1768 = vrsqrt.pop %v1752
    %v1769 = vrsqrt.pop %v1753
    %v1770 = vrsqrt.pop %v1754
    %v1771 = vrsqrt.pop %v1755
    %v1772 = vmul.f32 %v1644, %v1756
    %v1773 = vmul.f32 %v1645, %v1757
    %v1774 = vmul.f32 %v1646, %v1758
    %v1775 = vmul.f32 %v1647, %v1759
    %v1776 = vmul.f32 %v1648, %v1760
    %v1777 = vmul.f32 %v1649, %v1761
    %v1778 = vmul.f32 %v1650, %v1762
    %v1779 = vmul.f32 %v1651, %v1763
    %v1780 = vmul.f32 %v1652, %v1764
    %v1781 = vmul.f32 %v1653, %v1765
    %v1782 = vmul.f32 %v1654, %v1766
    %v1783 = vmul.f32 %v1655, %v1767
    %v1784 = vmul.f32 %v1656, %v1768
    %v1785 = vmul.f32 %v1657, %v1769
    %v1786 = vmul.f32 %v1658, %v1770
    %v1787 = vmul.f32 %v1659, %v1771
    %v1788 = vlaneseq
    %v1789 = vshrl.u32 %v1788, 7
    %v1790 = vsub.s32 4, %v1789
    %v1791 = vrot.slane %v53, %v1790
    %v1792 = vmul.f32 %v1772, %v1791
    %v1793 = vmul.f32 %v1773, %v1791
    %v1794 = vmul.f32 %v1774, %v1791
    %v1795 = vmul.f32 %v1775, %v1791
    %v1796 = vmul.f32 %v1776, %v1791
    %v1797 = vmul.f32 %v1777, %v1791
    %v1798 = vmul.f32 %v1778, %v1791
    %v1799 = vmul.f32 %v1779, %v1791
    %v1800 = vmul.f32 %v1780, %v1791
    %v1801 = vmul.f32 %v1781, %v1791
    %v1802 = vmul.f32 %v1782, %v1791
    %v1803 = vmul.f32 %v1783, %v1791
    %v1804 = vmul.f32 %v1784, %v1791
    %v1805 = vmul.f32 %v1785, %v1791
    %v1806 = vmul.f32 %v1786, %v1791
    %v1807 = vmul.f32 %v1787, %v1791
    %v1808 = vlaneseq
    %v1809 = vshrl.u32 %v1808, 7
    %v1810 = vsub.s32 5, %v1809
    %v1811 = vrot.slane %v53, %v1810
    %v1812 = vadd.f32 %v1792, %v1811
    %v1813 = vadd.f32 %v1793, %v1811
    %v1814 = vadd.f32 %v1794, %v1811
    %v1815 = vadd.f32 %v1795, %v1811
    %v1816 = vadd.f32 %v1796, %v1811
    %v1817 = vadd.f32 %v1797, %v1811
    %v1818 = vadd.f32 %v1798, %v1811
    %v1819 = vadd.f32 %v1799, %v1811
    %v1820 = vadd.f32 %v1800, %v1811
    %v1821 = vadd.f32 %v1801, %v1811
    %v1822 = vadd.f32 %v1802, %v1811
    %v1823 = vadd.f32 %v1803, %v1811
    %v1824 = vadd.f32 %v1804, %v1811
    %v1825 = vadd.f32 %v1805, %v1811
    %v1826 = vadd.f32 %v1806, %v1811
    %v1827 = vadd.f32 %v1807, %v1811
    %v1828 = vld [vmem:[%s3] sm:$0xf]
    %v1829 = vld [vmem:[%s3 + $0x4] sm:$0xf]
    %v1830 = vpack.c.bf16 %v1813, %v1812
    %v1831 = vpack.c.bf16 %v1815, %v1814
    %v1832 = vpack.c.bf16 %v1817, %v1816
    %v1833 = vpack.c.bf16 %v1819, %v1818
    %v1834 = vpack.c.bf16 %v1821, %v1820
    %v1835 = vpack.c.bf16 %v1823, %v1822
    %v1836 = vpack.c.bf16 %v1825, %v1824
    %v1837 = vpack.c.bf16 %v1827, %v1826
    %v1838 = vlaneseq
    %v1839 = vshrl.u32 %v1838, 7
    %v1840 = vsub.s32 2, %v1839
    %v1841 = vrot.slane %v53, %v1840
    %v1844 = vunpack.c.l.b16 %v1828
    %v1845 = vunpack.c.l.b16 %v1829
    %v1846 = vpack.c.b16 %v1845, %v1844
    %v1849 = vsel %vm74, %v1830, 0
    %v1852 = vsel %vm74, %v1831, 0
    %v1855 = vsel %vm74, %v1832, 0
    %v1858 = vsel %vm74, %v1833, 0
    %v1861 = vsel %vm74, %v1834, 0
    %v1864 = vsel %vm74, %v1835, 0
    %v1867 = vsel %vm74, %v1836, 0
    %v1870 = vsel %vm74, %v1837, 0
    %1872 = vmatprep.subr.bf16.mxu0 0
    %1873 = vmatpush1.bf16.msra.mxu0 %v1846
    %1874 = vmatprep.subr.bf16.mxu0 0
    %1875 = vmatpush1.bf16.msra.mxu0 0
    %1876 = vmatprep.subr.bf16.mxu0 0
    %1877 = vmatpush1.bf16.msra.mxu0 0
    %1878 = vmatprep.subr.bf16.mxu0 0
    %1879 = vmatpush1.bf16.msra.mxu0 0
    %1880 = vmatprep.subr.bf16.mxu0 0
    %1881 = vmatpush1.bf16.msra.mxu0 0
    %1882 = vmatprep.subr.bf16.mxu0 0
    %1883 = vmatpush1.bf16.msra.mxu0 0
    %1884 = vmatprep.subr.bf16.mxu0 0
    %1885 = vmatpush1.bf16.msra.mxu0 0
    %1886 = vmatprep.subr.bf16.mxu0 0
    %1887 = vmatpush1.bf16.msra.mxu0 0
    %1888 = vmatprep.subr.bf16.mxu0 0
    %1889 = vmatpush1.bf16.msra.mxu0 0
    %1890 = vmatprep.subr.bf16.mxu0 0
    %1891 = vmatpush1.bf16.msra.mxu0 0
    %1892 = vmatprep.subr.bf16.mxu0 0
    %1893 = vmatpush1.bf16.msra.mxu0 0
    %1894 = vmatprep.subr.bf16.mxu0 0
    %1895 = vmatpush1.bf16.msra.mxu0 0
    %1896 = vmatprep.subr.bf16.mxu0 0
    %1897 = vmatpush1.bf16.msra.mxu0 0
    %1898 = vmatprep.subr.bf16.mxu0 0
    %1899 = vmatpush1.bf16.msra.mxu0 0
    %1900 = vmatprep.subr.bf16.mxu0 0
    %1901 = vmatpush1.bf16.msra.mxu0 0
    %1902 = vmatprep.subr.bf16.mxu0 0
    %1903 = vmatpush1.bf16.msra.mxu0 0
    %1904 = vmatprep.mubr.bf16.mxu0 0
    %1905 = vmatmul.mubr.bf16.gmra.mrb[0].mxu0 %v1849
    %v1906 = vpop.f32.mrb[0].mxu0
    %v1907 = vadd.f32 %v1841, %v1906
    %v1908 = vpop.f32.mrb[0].mxu0
    %v1909 = vpop.f32.mrb[0].mxu0
    %v1910 = vadd.f32 %v1841, %v1909
    %v1911 = vpop.f32.mrb[0].mxu0
    %1912 = vmatprep.mubr.bf16.mxu0 0
    %1913 = vmatmul.mubr.bf16.gmra.mrb[0].mxu0 %v1852
    %v1914 = vpop.f32.mrb[0].mxu0
    %v1915 = vadd.f32 %v1841, %v1914
    %v1916 = vpop.f32.mrb[0].mxu0
    %v1917 = vpop.f32.mrb[0].mxu0
    %v1918 = vadd.f32 %v1841, %v1917
    %v1919 = vpop.f32.mrb[0].mxu0
    %1920 = vmatprep.mubr.bf16.mxu0 0
    %1921 = vmatmul.mubr.bf16.gmra.mrb[0].mxu0 %v1855
    %v1922 = vpop.f32.mrb[0].mxu0
    %v1923 = vadd.f32 %v1841, %v1922
    %v1924 = vpop.f32.mrb[0].mxu0
    %v1925 = vpop.f32.mrb[0].mxu0
    %v1926 = vadd.f32 %v1841, %v1925
    %v1927 = vpop.f32.mrb[0].mxu0
    %1928 = vmatprep.mubr.bf16.mxu0 0
    %1929 = vmatmul.mubr.bf16.gmra.mrb[0].mxu0 %v1858
    %v1930 = vpop.f32.mrb[0].mxu0
    %v1931 = vadd.f32 %v1841, %v1930
    %v1932 = vpop.f32.mrb[0].mxu0
    %v1933 = vpop.f32.mrb[0].mxu0
    %v1934 = vadd.f32 %v1841, %v1933
    %v1935 = vpop.f32.mrb[0].mxu0
    %1936 = vmatprep.mubr.bf16.mxu0 0
    %1937 = vmatmul.mubr.bf16.gmra.mrb[0].mxu0 %v1861
    %v1938 = vpop.f32.mrb[0].mxu0
    %v1939 = vadd.f32 %v1841, %v1938
    %v1940 = vpop.f32.mrb[0].mxu0
    %v1941 = vpop.f32.mrb[0].mxu0
    %v1942 = vadd.f32 %v1841, %v1941
    %v1943 = vpop.f32.mrb[0].mxu0
    %1944 = vmatprep.mubr.bf16.mxu0 0
    %1945 = vmatmul.mubr.bf16.gmra.mrb[0].mxu0 %v1864
    %v1946 = vpop.f32.mrb[0].mxu0
    %v1947 = vadd.f32 %v1841, %v1946
    %v1948 = vpop.f32.mrb[0].mxu0
    %v1949 = vpop.f32.mrb[0].mxu0
    %v1950 = vadd.f32 %v1841, %v1949
    %v1951 = vpop.f32.mrb[0].mxu0
    %1952 = vmatprep.mubr.bf16.mxu0 0
    %1953 = vmatmul.mubr.bf16.gmra.mrb[0].mxu0 %v1867
    %v1954 = vpop.f32.mrb[0].mxu0
    %v1955 = vadd.f32 %v1841, %v1954
    %v1956 = vpop.f32.mrb[0].mxu0
    %v1957 = vpop.f32.mrb[0].mxu0
    %v1958 = vadd.f32 %v1841, %v1957
    %v1959 = vpop.f32.mrb[0].mxu0
    %1960 = vmatprep.mubr.bf16.mxu0 0
    %1961 = vmatmul.mubr.bf16.gmra.mrb[0].mxu0 %v1870
    %v1962 = vpop.f32.mrb[0].mxu0
    %v1963 = vadd.f32 %v1841, %v1962
    %v1964 = vpop.f32.mrb[0].mxu0
    %v1965 = vpop.f32.mrb[0].mxu0
    %v1966 = vadd.f32 %v1841, %v1965
    %v1967 = vpop.f32.mrb[0].mxu0
    %1968 = vdwg.mxu0
    %v1969 = vmax.f32 %v1907, 0.0
    %v1970 = vmax.f32 %v1910, 0.0
    %v1971 = vmax.f32 %v1915, 0.0
    %v1972 = vmax.f32 %v1918, 0.0
    %v1973 = vmax.f32 %v1923, 0.0
    %v1974 = vmax.f32 %v1926, 0.0
    %v1975 = vmax.f32 %v1931, 0.0
    %v1976 = vmax.f32 %v1934, 0.0
    %v1977 = vmax.f32 %v1939, 0.0
    %v1978 = vmax.f32 %v1942, 0.0
    %v1979 = vmax.f32 %v1947, 0.0
    %v1980 = vmax.f32 %v1950, 0.0
    %v1981 = vmax.f32 %v1955, 0.0
    %v1982 = vmax.f32 %v1958, 0.0
    %v1983 = vmax.f32 %v1963, 0.0
    %v1984 = vmax.f32 %v1966, 0.0
    %v1985 = vld [vmem:[%s4] sm:$0xf]
    %v1986 = vld [vmem:[%s4 + $0x4] sm:$0xf]
    %v1987 = vld [vmem:[%s4 + $0x8] sm:$0xf]
    %v1988 = vld [vmem:[%s4 + $0xc] sm:$0xf]
    %v1989 = vld [vmem:[%s4 + $0x10] sm:$0xf]
    %v1990 = vld [vmem:[%s4 + $0x14] sm:$0xf]
    %v1991 = vld [vmem:[%s4 + $0x18] sm:$0xf]
    %v1992 = vld [vmem:[%s4 + $0x1c] sm:$0xf]
    %v1993 = vpack.c.bf16 %v1970, %v1969
    %v1994 = vpack.c.bf16 %v1972, %v1971
    %v1995 = vpack.c.bf16 %v1974, %v1973
    %v1996 = vpack.c.bf16 %v1976, %v1975
    %v1997 = vpack.c.bf16 %v1978, %v1977
    %v1998 = vpack.c.bf16 %v1980, %v1979
    %v1999 = vpack.c.bf16 %v1982, %v1981
    %v2000 = vpack.c.bf16 %v1984, %v1983
    %v2001 = vlaneseq
    %v2002 = vshrl.u32 %v2001, 7
    %v2003 = vsub.s32 3, %v2002
    %v2004 = vrot.slane %v53, %v2003
    %v2013 = vunpack.c.l.b16 %v1985
    %v2014 = vunpack.c.l.b16 %v1986
    %v2015 = vunpack.c.l.b16 %v1987
    %v2016 = vunpack.c.l.b16 %v1988
    %v2017 = vunpack.c.l.b16 %v1989
    %v2018 = vunpack.c.l.b16 %v1990
    %v2019 = vunpack.c.l.b16 %v1991
    %v2020 = vunpack.c.l.b16 %v1992
    %v2021 = vpack.c.b16 %v2014, %v2013
    %v2022 = vpack.c.b16 %v2016, %v2015
    %v2023 = vpack.c.b16 %v2018, %v2017
    %v2024 = vpack.c.b16 %v2020, %v2019
    %v2030 = vsel %vm302, %v1993, 0
    %v2033 = vsel %vm302, %v1994, 0
    %v2036 = vsel %vm302, %v1995, 0
    %v2039 = vsel %vm302, %v1996, 0
    %v2042 = vsel %vm302, %v1997, 0
    %v2045 = vsel %vm302, %v1998, 0
    %v2048 = vsel %vm302, %v1999, 0
    %v2051 = vsel %vm302, %v2000, 0
    %2053 = vmatprep.subr.bf16.mxu0 0
    %2054 = vmatpush1.bf16.msra.mxu0 %v2021
    %2055 = vmatprep.subr.bf16.mxu0 0
    %2056 = vmatpush1.bf16.msra.mxu0 %v2022
    %2057 = vmatprep.subr.bf16.mxu0 0
    %2058 = vmatpush1.bf16.msra.mxu0 %v2023
    %2059 = vmatprep.subr.bf16.mxu0 0
    %2060 = vmatpush1.bf16.msra.mxu0 %v2024
    %2061 = vmatprep.subr.bf16.mxu0 0
    %2062 = vmatpush1.bf16.msra.mxu0 0
    %2063 = vmatprep.subr.bf16.mxu0 0
    %2064 = vmatpush1.bf16.msra.mxu0 0
    %2065 = vmatprep.subr.bf16.mxu0 0
    %2066 = vmatpush1.bf16.msra.mxu0 0
    %2067 = vmatprep.subr.bf16.mxu0 0
    %2068 = vmatpush1.bf16.msra.mxu0 0
    %2069 = vmatprep.subr.bf16.mxu0 0
    %2070 = vmatpush1.bf16.msra.mxu0 0
    %2071 = vmatprep.subr.bf16.mxu0 0
    %2072 = vmatpush1.bf16.msra.mxu0 0
    %2073 = vmatprep.subr.bf16.mxu0 0
    %2074 = vmatpush1.bf16.msra.mxu0 0
    %2075 = vmatprep.subr.bf16.mxu0 0
    %2076 = vmatpush1.bf16.msra.mxu0 0
    %2077 = vmatprep.subr.bf16.mxu0 0
    %2078 = vmatpush1.bf16.msra.mxu0 0
    %2079 = vmatprep.subr.bf16.mxu0 0
    %2080 = vmatpush1.bf16.msra.mxu0 0
    %2081 = vmatprep.subr.bf16.mxu0 0
    %2082 = vmatpush1.bf16.msra.mxu0 0
    %2083 = vmatprep.subr.bf16.mxu0 0
    %2084 = vmatpush1.bf16.msra.mxu0 0
    %2085 = vmatprep.mubr.bf16.mxu0 0
    %2086 = vmatmul.mubr.bf16.gmra.mrb[0].mxu0 %v2030
    %v2087 = vpop.f32.mrb[0].mxu0
    %v2088 = vadd.f32 %v2004, %v2087
    %v2089 = vpop.f32.mrb[0].mxu0
    %v2090 = vpop.f32.mrb[0].mxu0
    %v2091 = vadd.f32 %v2004, %v2090
    %v2092 = vpop.f32.mrb[0].mxu0
    %2093 = vmatprep.mubr.bf16.mxu0 0
    %2094 = vmatmul.mubr.bf16.gmra.mrb[0].mxu0 %v2033
    %v2095 = vpop.f32.mrb[0].mxu0
    %v2096 = vadd.f32 %v2004, %v2095
    %v2097 = vpop.f32.mrb[0].mxu0
    %v2098 = vpop.f32.mrb[0].mxu0
    %v2099 = vadd.f32 %v2004, %v2098
    %v2100 = vpop.f32.mrb[0].mxu0
    %2101 = vmatprep.mubr.bf16.mxu0 0
    %2102 = vmatmul.mubr.bf16.gmra.mrb[0].mxu0 %v2036
    %v2103 = vpop.f32.mrb[0].mxu0
    %v2104 = vadd.f32 %v2004, %v2103
    %v2105 = vpop.f32.mrb[0].mxu0
    %v2106 = vpop.f32.mrb[0].mxu0
    %v2107 = vadd.f32 %v2004, %v2106
    %v2108 = vpop.f32.mrb[0].mxu0
    %2109 = vmatprep.mubr.bf16.mxu0 0
    %2110 = vmatmul.mubr.bf16.gmra.mrb[0].mxu0 %v2039
    %v2111 = vpop.f32.mrb[0].mxu0
    %v2112 = vadd.f32 %v2004, %v2111
    %v2113 = vpop.f32.mrb[0].mxu0
    %v2114 = vpop.f32.mrb[0].mxu0
    %v2115 = vadd.f32 %v2004, %v2114
    %v2116 = vpop.f32.mrb[0].mxu0
    %2117 = vmatprep.mubr.bf16.mxu0 0
    %2118 = vmatmul.mubr.bf16.gmra.mrb[0].mxu0 %v2042
    %v2119 = vpop.f32.mrb[0].mxu0
    %v2120 = vadd.f32 %v2004, %v2119
    %v2121 = vpop.f32.mrb[0].mxu0
    %v2122 = vpop.f32.mrb[0].mxu0
    %v2123 = vadd.f32 %v2004, %v2122
    %v2124 = vpop.f32.mrb[0].mxu0
    %2125 = vmatprep.mubr.bf16.mxu0 0
    %2126 = vmatmul.mubr.bf16.gmra.mrb[0].mxu0 %v2045
    %v2127 = vpop.f32.mrb[0].mxu0
    %v2128 = vadd.f32 %v2004, %v2127
    %v2129 = vpop.f32.mrb[0].mxu0
    %v2130 = vpop.f32.mrb[0].mxu0
    %v2131 = vadd.f32 %v2004, %v2130
    %v2132 = vpop.f32.mrb[0].mxu0
    %2133 = vmatprep.mubr.bf16.mxu0 0
    %2134 = vmatmul.mubr.bf16.gmra.mrb[0].mxu0 %v2048
    %v2135 = vpop.f32.mrb[0].mxu0
    %v2136 = vadd.f32 %v2004, %v2135
    %v2137 = vpop.f32.mrb[0].mxu0
    %v2138 = vpop.f32.mrb[0].mxu0
    %v2139 = vadd.f32 %v2004, %v2138
    %v2140 = vpop.f32.mrb[0].mxu0
    %2141 = vmatprep.mubr.bf16.mxu0 0
    %2142 = vmatmul.mubr.bf16.gmra.mrb[0].mxu0 %v2051
    %v2143 = vpop.f32.mrb[0].mxu0
    %v2144 = vadd.f32 %v2004, %v2143
    %v2145 = vpop.f32.mrb[0].mxu0
    %v2146 = vpop.f32.mrb[0].mxu0
    %v2147 = vadd.f32 %v2004, %v2146
    %v2148 = vpop.f32.mrb[0].mxu0
    %2149 = vdwg.mxu0
    %v2150 = vadd.f32 %v1812, %v2088
    %v2151 = vadd.f32 %v1813, %v2091
    %v2152 = vadd.f32 %v1814, %v2096
    %v2153 = vadd.f32 %v1815, %v2099
    %v2154 = vadd.f32 %v1816, %v2104
    %v2155 = vadd.f32 %v1817, %v2107
    %v2156 = vadd.f32 %v1818, %v2112
    %v2157 = vadd.f32 %v1819, %v2115
    %v2158 = vadd.f32 %v1820, %v2120
    %v2159 = vadd.f32 %v1821, %v2123
    %v2160 = vadd.f32 %v1822, %v2128
    %v2161 = vadd.f32 %v1823, %v2131
    %v2162 = vadd.f32 %v1824, %v2136
    %v2163 = vadd.f32 %v1825, %v2139
    %v2164 = vadd.f32 %v1826, %v2144
    %v2165 = vadd.f32 %v1827, %v2147
    %v2166 = vsel %vm74, %v2150, 0.0
    %2167 = vadd.xlane.f32.xlu0 %v2166
    %v2168 = vpop.xlane.xlu0 %2167
    %v2169 = vsel %vm74, %v2151, 0.0
    %2170 = vadd.xlane.f32.xlu0 %v2169
    %v2171 = vpop.xlane.xlu0 %2170
    %v2172 = vsel %vm74, %v2152, 0.0
    %2173 = vadd.xlane.f32.xlu0 %v2172
    %v2174 = vpop.xlane.xlu0 %2173
    %v2175 = vsel %vm74, %v2153, 0.0
    %2176 = vadd.xlane.f32.xlu0 %v2175
    %v2177 = vpop.xlane.xlu0 %2176
    %v2178 = vsel %vm74, %v2154, 0.0
    %2179 = vadd.xlane.f32.xlu0 %v2178
    %v2180 = vpop.xlane.xlu0 %2179
    %v2181 = vsel %vm74, %v2155, 0.0
    %2182 = vadd.xlane.f32.xlu0 %v2181
    %v2183 = vpop.xlane.xlu0 %2182
    %v2184 = vsel %vm74, %v2156, 0.0
    %2185 = vadd.xlane.f32.xlu0 %v2184
    %v2186 = vpop.xlane.xlu0 %2185
    %v2187 = vsel %vm74, %v2157, 0.0
    %2188 = vadd.xlane.f32.xlu0 %v2187
    %v2189 = vpop.xlane.xlu0 %2188
    %v2190 = vsel %vm74, %v2158, 0.0
    %2191 = vadd.xlane.f32.xlu0 %v2190
    %v2192 = vpop.xlane.xlu0 %2191
    %v2193 = vsel %vm74, %v2159, 0.0
    %2194 = vadd.xlane.f32.xlu0 %v2193
    %v2195 = vpop.xlane.xlu0 %2194
    %v2196 = vsel %vm74, %v2160, 0.0
    %2197 = vadd.xlane.f32.xlu0 %v2196
    %v2198 = vpop.xlane.xlu0 %2197
    %v2199 = vsel %vm74, %v2161, 0.0
    %2200 = vadd.xlane.f32.xlu0 %v2199
    %v2201 = vpop.xlane.xlu0 %2200
    %v2202 = vsel %vm74, %v2162, 0.0
    %2203 = vadd.xlane.f32.xlu0 %v2202
    %v2204 = vpop.xlane.xlu0 %2203
    %v2205 = vsel %vm74, %v2163, 0.0
    %2206 = vadd.xlane.f32.xlu0 %v2205
    %v2207 = vpop.xlane.xlu0 %2206
    %v2208 = vsel %vm74, %v2164, 0.0
    %2209 = vadd.xlane.f32.xlu0 %v2208
    %v2210 = vpop.xlane.xlu0 %2209
    %v2211 = vsel %vm74, %v2165, 0.0
    %2212 = vadd.xlane.f32.xlu0 %v2211
    %v2213 = vpop.xlane.xlu0 %2212
    %v2214 = vmul.f32 %v2168, %v1627
    %v2215 = vmul.f32 %v2171, %v1627
    %v2216 = vmul.f32 %v2174, %v1627
    %v2217 = vmul.f32 %v2177, %v1627
    %v2218 = vmul.f32 %v2180, %v1627
    %v2219 = vmul.f32 %v2183, %v1627
    %v2220 = vmul.f32 %v2186, %v1627
    %v2221 = vmul.f32 %v2189, %v1627
    %v2222 = vmul.f32 %v2192, %v1627
    %v2223 = vmul.f32 %v2195, %v1627
    %v2224 = vmul.f32 %v2198, %v1627
    %v2225 = vmul.f32 %v2201, %v1627
    %v2226 = vmul.f32 %v2204, %v1627
    %v2227 = vmul.f32 %v2207, %v1627
    %v2228 = vmul.f32 %v2210, %v1627
    %v2229 = vmul.f32 %v2213, %v1627
    %v2230 = vsub.f32 %v2150, %v2214
    %v2231 = vsub.f32 %v2151, %v2215
    %v2232 = vsub.f32 %v2152, %v2216
    %v2233 = vsub.f32 %v2153, %v2217
    %v2234 = vsub.f32 %v2154, %v2218
    %v2235 = vsub.f32 %v2155, %v2219
    %v2236 = vsub.f32 %v2156, %v2220
    %v2237 = vsub.f32 %v2157, %v2221
    %v2238 = vsub.f32 %v2158, %v2222
    %v2239 = vsub.f32 %v2159, %v2223
    %v2240 = vsub.f32 %v2160, %v2224
    %v2241 = vsub.f32 %v2161, %v2225
    %v2242 = vsub.f32 %v2162, %v2226
    %v2243 = vsub.f32 %v2163, %v2227
    %v2244 = vsub.f32 %v2164, %v2228
    %v2245 = vsub.f32 %v2165, %v2229
    %v2246 = vmul.f32 %v2230, %v2230
    %v2247 = vmul.f32 %v2231, %v2231
    %v2248 = vmul.f32 %v2232, %v2232
    %v2249 = vmul.f32 %v2233, %v2233
    %v2250 = vmul.f32 %v2234, %v2234
    %v2251 = vmul.f32 %v2235, %v2235
    %v2252 = vmul.f32 %v2236, %v2236
    %v2253 = vmul.f32 %v2237, %v2237
    %v2254 = vmul.f32 %v2238, %v2238
    %v2255 = vmul.f32 %v2239, %v2239
    %v2256 = vmul.f32 %v2240, %v2240
    %v2257 = vmul.f32 %v2241, %v2241
    %v2258 = vmul.f32 %v2242, %v2242
    %v2259 = vmul.f32 %v2243, %v2243
    %v2260 = vmul.f32 %v2244, %v2244
    %v2261 = vmul.f32 %v2245, %v2245
    %v2262 = vsel %vm74, %v2246, 0.0
    %2263 = vadd.xlane.f32.xlu0 %v2262
    %v2264 = vpop.xlane.xlu0 %2263
    %v2265 = vsel %vm74, %v2247, 0.0
    %2266 = vadd.xlane.f32.xlu0 %v2265
    %v2267 = vpop.xlane.xlu0 %2266
    %v2268 = vsel %vm74, %v2248, 0.0
    %2269 = vadd.xlane.f32.xlu0 %v2268
    %v2270 = vpop.xlane.xlu0 %2269
    %v2271 = vsel %vm74, %v2249, 0.0
    %2272 = vadd.xlane.f32.xlu0 %v2271
    %v2273 = vpop.xlane.xlu0 %2272
    %v2274 = vsel %vm74, %v2250, 0.0
    %2275 = vadd.xlane.f32.xlu0 %v2274
    %v2276 = vpop.xlane.xlu0 %2275
    %v2277 = vsel %vm74, %v2251, 0.0
    %2278 = vadd.xlane.f32.xlu0 %v2277
    %v2279 = vpop.xlane.xlu0 %2278
    %v2280 = vsel %vm74, %v2252, 0.0
    %2281 = vadd.xlane.f32.xlu0 %v2280
    %v2282 = vpop.xlane.xlu0 %2281
    %v2283 = vsel %vm74, %v2253, 0.0
    %2284 = vadd.xlane.f32.xlu0 %v2283
    %v2285 = vpop.xlane.xlu0 %2284
    %v2286 = vsel %vm74, %v2254, 0.0
    %2287 = vadd.xlane.f32.xlu0 %v2286
    %v2288 = vpop.xlane.xlu0 %2287
    %v2289 = vsel %vm74, %v2255, 0.0
    %2290 = vadd.xlane.f32.xlu0 %v2289
    %v2291 = vpop.xlane.xlu0 %2290
    %v2292 = vsel %vm74, %v2256, 0.0
    %2293 = vadd.xlane.f32.xlu0 %v2292
    %v2294 = vpop.xlane.xlu0 %2293
    %v2295 = vsel %vm74, %v2257, 0.0
    %2296 = vadd.xlane.f32.xlu0 %v2295
    %v2297 = vpop.xlane.xlu0 %2296
    %v2298 = vsel %vm74, %v2258, 0.0
    %2299 = vadd.xlane.f32.xlu0 %v2298
    %v2300 = vpop.xlane.xlu0 %2299
    %v2301 = vsel %vm74, %v2259, 0.0
    %2302 = vadd.xlane.f32.xlu0 %v2301
    %v2303 = vpop.xlane.xlu0 %2302
    %v2304 = vsel %vm74, %v2260, 0.0
    %2305 = vadd.xlane.f32.xlu0 %v2304
    %v2306 = vpop.xlane.xlu0 %2305
    %v2307 = vsel %vm74, %v2261, 0.0
    %2308 = vadd.xlane.f32.xlu0 %v2307
    %v2309 = vpop.xlane.xlu0 %2308
    %v2310 = vmul.f32 %v2264, %v1627
    %v2311 = vmul.f32 %v2267, %v1627
    %v2312 = vmul.f32 %v2270, %v1627
    %v2313 = vmul.f32 %v2273, %v1627
    %v2314 = vmul.f32 %v2276, %v1627
    %v2315 = vmul.f32 %v2279, %v1627
    %v2316 = vmul.f32 %v2282, %v1627
    %v2317 = vmul.f32 %v2285, %v1627
    %v2318 = vmul.f32 %v2288, %v1627
    %v2319 = vmul.f32 %v2291, %v1627
    %v2320 = vmul.f32 %v2294, %v1627
    %v2321 = vmul.f32 %v2297, %v1627
    %v2322 = vmul.f32 %v2300, %v1627
    %v2323 = vmul.f32 %v2303, %v1627
    %v2324 = vmul.f32 %v2306, %v1627
    %v2325 = vmul.f32 %v2309, %v1627
    %v2326 = vadd.f32 %v2310, 1e-05
    %v2327 = vadd.f32 %v2311, 1e-05
    %v2328 = vadd.f32 %v2312, 1e-05
    %v2329 = vadd.f32 %v2313, 1e-05
    %v2330 = vadd.f32 %v2314, 1e-05
    %v2331 = vadd.f32 %v2315, 1e-05
    %v2332 = vadd.f32 %v2316, 1e-05
    %v2333 = vadd.f32 %v2317, 1e-05
    %v2334 = vadd.f32 %v2318, 1e-05
    %v2335 = vadd.f32 %v2319, 1e-05
    %v2336 = vadd.f32 %v2320, 1e-05
    %v2337 = vadd.f32 %v2321, 1e-05
    %v2338 = vadd.f32 %v2322, 1e-05
    %v2339 = vadd.f32 %v2323, 1e-05
    %v2340 = vadd.f32 %v2324, 1e-05
    %v2341 = vadd.f32 %v2325, 1e-05
    %v2342 = vrsqrt.pop %v2326
    %v2343 = vrsqrt.pop %v2327
    %v2344 = vrsqrt.pop %v2328
    %v2345 = vrsqrt.pop %v2329
    %v2346 = vrsqrt.pop %v2330
    %v2347 = vrsqrt.pop %v2331
    %v2348 = vrsqrt.pop %v2332
    %v2349 = vrsqrt.pop %v2333
    %v2350 = vrsqrt.pop %v2334
    %v2351 = vrsqrt.pop %v2335
    %v2352 = vrsqrt.pop %v2336
    %v2353 = vrsqrt.pop %v2337
    %v2354 = vrsqrt.pop %v2338
    %v2355 = vrsqrt.pop %v2339
    %v2356 = vrsqrt.pop %v2340
    %v2357 = vrsqrt.pop %v2341
    %v2358 = vmul.f32 %v2230, %v2342
    %v2359 = vmul.f32 %v2231, %v2343
    %v2360 = vmul.f32 %v2232, %v2344
    %v2361 = vmul.f32 %v2233, %v2345
    %v2362 = vmul.f32 %v2234, %v2346
    %v2363 = vmul.f32 %v2235, %v2347
    %v2364 = vmul.f32 %v2236, %v2348
    %v2365 = vmul.f32 %v2237, %v2349
    %v2366 = vmul.f32 %v2238, %v2350
    %v2367 = vmul.f32 %v2239, %v2351
    %v2368 = vmul.f32 %v2240, %v2352
    %v2369 = vmul.f32 %v2241, %v2353
    %v2370 = vmul.f32 %v2242, %v2354
    %v2371 = vmul.f32 %v2243, %v2355
    %v2372 = vmul.f32 %v2244, %v2356
    %v2373 = vmul.f32 %v2245, %v2357
    %v2374 = vlaneseq
    %v2375 = vshrl.u32 %v2374, 7
    %v2376 = vsub.s32 6, %v2375
    %v2377 = vrot.slane %v53, %v2376
    %v2378 = vmul.f32 %v2358, %v2377
    %v2379 = vmul.f32 %v2359, %v2377
    %v2380 = vmul.f32 %v2360, %v2377
    %v2381 = vmul.f32 %v2361, %v2377
    %v2382 = vmul.f32 %v2362, %v2377
    %v2383 = vmul.f32 %v2363, %v2377
    %v2384 = vmul.f32 %v2364, %v2377
    %v2385 = vmul.f32 %v2365, %v2377
    %v2386 = vmul.f32 %v2366, %v2377
    %v2387 = vmul.f32 %v2367, %v2377
    %v2388 = vmul.f32 %v2368, %v2377
    %v2389 = vmul.f32 %v2369, %v2377
    %v2390 = vmul.f32 %v2370, %v2377
    %v2391 = vmul.f32 %v2371, %v2377
    %v2392 = vmul.f32 %v2372, %v2377
    %v2393 = vmul.f32 %v2373, %v2377
    %v2394 = vlaneseq
    %v2395 = vshrl.u32 %v2394, 7
    %v2396 = vsub.s32 7, %v2395
    %v2397 = vrot.slane %v53, %v2396
    %v2398 = vadd.f32 %v2378, %v2397
    %v2399 = vadd.f32 %v2379, %v2397
    %v2400 = vadd.f32 %v2380, %v2397
    %v2401 = vadd.f32 %v2381, %v2397
    %v2402 = vadd.f32 %v2382, %v2397
    %v2403 = vadd.f32 %v2383, %v2397
    %v2404 = vadd.f32 %v2384, %v2397
    %v2405 = vadd.f32 %v2385, %v2397
    %v2406 = vadd.f32 %v2386, %v2397
    %v2407 = vadd.f32 %v2387, %v2397
    %v2408 = vadd.f32 %v2388, %v2397
    %v2409 = vadd.f32 %v2389, %v2397
    %v2410 = vadd.f32 %v2390, %v2397
    %v2411 = vadd.f32 %v2391, %v2397
    %v2412 = vadd.f32 %v2392, %v2397
    %v2413 = vadd.f32 %v2393, %v2397
    %s2414 = scalar_lea.vmem %s5, 8
    %v2415 = vld [vmem:[%s2414] sm:$0xff]
    %s2416 = scalar_lea.vmem %s1, 8
    %v2417 = vld [vmem:[%s2416] sm:$0xf]
    %v2418 = vld [vmem:[%s2416 + $0x4] sm:$0xf]
    %v2419 = vpack.c.bf16 %v2399, %v2398
    %v2420 = vpack.c.bf16 %v2401, %v2400
    %v2421 = vpack.c.bf16 %v2403, %v2402
    %v2422 = vpack.c.bf16 %v2405, %v2404
    %v2423 = vpack.c.bf16 %v2407, %v2406
    %v2424 = vpack.c.bf16 %v2409, %v2408
    %v2425 = vpack.c.bf16 %v2411, %v2410
    %v2426 = vpack.c.bf16 %v2413, %v2412
    %v2427 = vlaneseq
    %v2428 = vshrl.u32 %v2427, 7
    %v2429 = vsub.s32 0, %v2428
    %v2430 = vrot.slane %v2415, %v2429
    %v2433 = vunpack.c.l.b16 %v2417
    %v2434 = vunpack.c.l.b16 %v2418
    %v2435 = vpack.c.b16 %v2434, %v2433
    %v2438 = vsel %vm74, %v2419, 0
    %v2441 = vsel %vm74, %v2420, 0
    %v2444 = vsel %vm74, %v2421, 0
    %v2447 = vsel %vm74, %v2422, 0
    %v2450 = vsel %vm74, %v2423, 0
    %v2453 = vsel %vm74, %v2424, 0
    %v2456 = vsel %vm74, %v2425, 0
    %v2459 = vsel %vm74, %v2426, 0
    %2461 = vmatprep.subr.bf16.mxu0 0
    %2462 = vmatpush1.bf16.msra.mxu0 %v2435
    %2463 = vmatprep.subr.bf16.mxu0 0
    %2464 = vmatpush1.bf16.msra.mxu0 0
    %2465 = vmatprep.subr.bf16.mxu0 0
    %2466 = vmatpush1.bf16.msra.mxu0 0
    %2467 = vmatprep.subr.bf16.mxu0 0
    %2468 = vmatpush1.bf16.msra.mxu0 0
    %2469 = vmatprep.subr.bf16.mxu0 0
    %2470 = vmatpush1.bf16.msra.mxu0 0
    %2471 = vmatprep.subr.bf16.mxu0 0
    %2472 = vmatpush1.bf16.msra.mxu0 0
    %2473 = vmatprep.subr.bf16.mxu0 0
    %2474 = vmatpush1.bf16.msra.mxu0 0
    %2475 = vmatprep.subr.bf16.mxu0 0
    %2476 = vmatpush1.bf16.msra.mxu0 0
    %2477 = vmatprep.subr.bf16.mxu0 0
    %2478 = vmatpush1.bf16.msra.mxu0 0
    %2479 = vmatprep.subr.bf16.mxu0 0
    %2480 = vmatpush1.bf16.msra.mxu0 0
    %2481 = vmatprep.subr.bf16.mxu0 0
    %2482 = vmatpush1.bf16.msra.mxu0 0
    %2483 = vmatprep.subr.bf16.mxu0 0
    %2484 = vmatpush1.bf16.msra.mxu0 0
    %2485 = vmatprep.subr.bf16.mxu0 0
    %2486 = vmatpush1.bf16.msra.mxu0 0
    %2487 = vmatprep.subr.bf16.mxu0 0
    %2488 = vmatpush1.bf16.msra.mxu0 0
    %2489 = vmatprep.subr.bf16.mxu0 0
    %2490 = vmatpush1.bf16.msra.mxu0 0
    %2491 = vmatprep.subr.bf16.mxu0 0
    %2492 = vmatpush1.bf16.msra.mxu0 0
    %2493 = vmatprep.mubr.bf16.mxu0 0
    %2494 = vmatmul.mubr.bf16.gmra.mrb[0].mxu0 %v2438
    %v2495 = vpop.f32.mrb[0].mxu0
    %v2496 = vadd.f32 %v2430, %v2495
    %v2497 = vpop.f32.mrb[0].mxu0
    %v2498 = vpop.f32.mrb[0].mxu0
    %v2499 = vadd.f32 %v2430, %v2498
    %v2500 = vpop.f32.mrb[0].mxu0
    %2501 = vmatprep.mubr.bf16.mxu0 0
    %2502 = vmatmul.mubr.bf16.gmra.mrb[0].mxu0 %v2441
    %v2503 = vpop.f32.mrb[0].mxu0
    %v2504 = vadd.f32 %v2430, %v2503
    %v2505 = vpop.f32.mrb[0].mxu0
    %v2506 = vpop.f32.mrb[0].mxu0
    %v2507 = vadd.f32 %v2430, %v2506
    %v2508 = vpop.f32.mrb[0].mxu0
    %2509 = vmatprep.mubr.bf16.mxu0 0
    %2510 = vmatmul.mubr.bf16.gmra.mrb[0].mxu0 %v2444
    %v2511 = vpop.f32.mrb[0].mxu0
    %v2512 = vadd.f32 %v2430, %v2511
    %v2513 = vpop.f32.mrb[0].mxu0
    %v2514 = vpop.f32.mrb[0].mxu0
    %v2515 = vadd.f32 %v2430, %v2514
    %v2516 = vpop.f32.mrb[0].mxu0
    %2517 = vmatprep.mubr.bf16.mxu0 0
    %2518 = vmatmul.mubr.bf16.gmra.mrb[0].mxu0 %v2447
    %v2519 = vpop.f32.mrb[0].mxu0
    %v2520 = vadd.f32 %v2430, %v2519
    %v2521 = vpop.f32.mrb[0].mxu0
    %v2522 = vpop.f32.mrb[0].mxu0
    %v2523 = vadd.f32 %v2430, %v2522
    %v2524 = vpop.f32.mrb[0].mxu0
    %2525 = vmatprep.mubr.bf16.mxu0 0
    %2526 = vmatmul.mubr.bf16.gmra.mrb[0].mxu0 %v2450
    %v2527 = vpop.f32.mrb[0].mxu0
    %v2528 = vadd.f32 %v2430, %v2527
    %v2529 = vpop.f32.mrb[0].mxu0
    %v2530 = vpop.f32.mrb[0].mxu0
    %v2531 = vadd.f32 %v2430, %v2530
    %v2532 = vpop.f32.mrb[0].mxu0
    %2533 = vmatprep.mubr.bf16.mxu0 0
    %2534 = vmatmul.mubr.bf16.gmra.mrb[0].mxu0 %v2453
    %v2535 = vpop.f32.mrb[0].mxu0
    %v2536 = vadd.f32 %v2430, %v2535
    %v2537 = vpop.f32.mrb[0].mxu0
    %v2538 = vpop.f32.mrb[0].mxu0
    %v2539 = vadd.f32 %v2430, %v2538
    %v2540 = vpop.f32.mrb[0].mxu0
    %2541 = vmatprep.mubr.bf16.mxu0 0
    %2542 = vmatmul.mubr.bf16.gmra.mrb[0].mxu0 %v2456
    %v2543 = vpop.f32.mrb[0].mxu0
    %v2544 = vadd.f32 %v2430, %v2543
    %v2545 = vpop.f32.mrb[0].mxu0
    %v2546 = vpop.f32.mrb[0].mxu0
    %v2547 = vadd.f32 %v2430, %v2546
    %v2548 = vpop.f32.mrb[0].mxu0
    %2549 = vmatprep.mubr.bf16.mxu0 0
    %2550 = vmatmul.mubr.bf16.gmra.mrb[0].mxu0 %v2459
    %v2551 = vpop.f32.mrb[0].mxu0
    %v2552 = vadd.f32 %v2430, %v2551
    %v2553 = vpop.f32.mrb[0].mxu0
    %v2554 = vpop.f32.mrb[0].mxu0
    %v2555 = vadd.f32 %v2430, %v2554
    %v2556 = vpop.f32.mrb[0].mxu0
    %2557 = vdwg.mxu0
    %v2558 = vpack.c.bf16 %v2499, %v2496
    %v2559 = vpack.c.bf16 %v2507, %v2504
    %v2560 = vpack.c.bf16 %v2515, %v2512
    %v2561 = vpack.c.bf16 %v2523, %v2520
    %2566 = vrot.lane.b32.xlu0 %v2558, 112
    %v2567 = vpop.permute.xlu0 %2566
    %2568 = vrot.lane.b32.xlu0 %v2559, 112
    %v2569 = vpop.permute.xlu0 %2568
    %2570 = vrot.lane.b32.xlu0 %v2560, 112
    %v2571 = vpop.permute.xlu0 %2570
    %2572 = vrot.lane.b32.xlu0 %v2561, 112
    %v2573 = vpop.permute.xlu0 %2572
    %v2575 = vsel %vm212, %v2558, 0
    %v2578 = vsel %vm212, %v2559, 0
    %v2581 = vsel %vm212, %v2560, 0
    %v2584 = vsel %vm212, %v2561, 0
    %v2587 = vsel %vm212, %v2567, 0
    %v2590 = vsel %vm212, %v2569, 0
    %v2593 = vsel %vm212, %v2571, 0
    %v2596 = vsel %vm212, %v2573, 0
    %2598 = vmatprep.subr.bf16.mxu0 0
    %2599 = vmatpush1.bf16.xpose.msra.mxu0 %v2587
    %2600 = vmatprep.subr.bf16.mxu0 0
    %2601 = vmatpush1.bf16.xpose.msra.mxu0 %v2590
    %2602 = vmatprep.subr.bf16.mxu0 0
    %2603 = vmatpush1.bf16.xpose.msra.mxu0 %v2593
    %2604 = vmatprep.subr.bf16.mxu0 0
    %2605 = vmatpush1.bf16.xpose.msra.mxu0 %v2596
    %2606 = vmatprep.subr.bf16.mxu0 0
    %2607 = vmatpush1.bf16.xpose.msra.mxu0 0
    %2608 = vmatprep.subr.bf16.mxu0 0
    %2609 = vmatpush1.bf16.xpose.msra.mxu0 0
    %2610 = vmatprep.subr.bf16.mxu0 0
    %2611 = vmatpush1.bf16.xpose.msra.mxu0 0
    %2612 = vmatprep.subr.bf16.mxu0 0
    %2613 = vmatpush1.bf16.xpose.msra.mxu0 0
    %2614 = vmatprep.subr.bf16.mxu0 0
    %2615 = vmatpush1.bf16.xpose.msra.mxu0 0
    %2616 = vmatprep.subr.bf16.mxu0 0
    %2617 = vmatpush1.bf16.xpose.msra.mxu0 0
    %2618 = vmatprep.subr.bf16.mxu0 0
    %2619 = vmatpush1.bf16.xpose.msra.mxu0 0
    %2620 = vmatprep.subr.bf16.mxu0 0
    %2621 = vmatpush1.bf16.xpose.msra.mxu0 0
    %2622 = vmatprep.subr.bf16.mxu0 0
    %2623 = vmatpush1.bf16.xpose.msra.mxu0 0
    %2624 = vmatprep.subr.bf16.mxu0 0
    %2625 = vmatpush1.bf16.xpose.msra.mxu0 0
    %2626 = vmatprep.subr.bf16.mxu0 0
    %2627 = vmatpush1.bf16.xpose.msra.mxu0 0
    %2628 = vmatprep.subr.bf16.mxu0 0
    %2629 = vmatpush1.bf16.xpose.msra.mxu0 0
    %2630 = vmatprep.mubr.bf16.mxu0 0
    %2631 = vmatmul.mubr.bf16.gmra.mrb[0].mxu0 %v2575
    %v2632 = vpop.f32.mrb[0].mxu0
    %v2633 = vadd.f32 0.0, %v2632
    %v2634 = vpop.f32.mrb[0].mxu0
    %v2635 = vpop.f32.mrb[0].mxu0
    %v2636 = vadd.f32 0.0, %v2635
    %v2637 = vpop.f32.mrb[0].mxu0
    %2638 = vmatprep.mubr.bf16.mxu0 0
    %2639 = vmatmul.mubr.bf16.gmra.mrb[0].mxu0 %v2578
    %v2640 = vpop.f32.mrb[0].mxu0
    %v2641 = vadd.f32 0.0, %v2640
    %v2642 = vpop.f32.mrb[0].mxu0
    %v2643 = vpop.f32.mrb[0].mxu0
    %v2644 = vadd.f32 0.0, %v2643
    %v2645 = vpop.f32.mrb[0].mxu0
    %2646 = vmatprep.mubr.bf16.mxu0 0
    %2647 = vmatmul.mubr.bf16.gmra.mrb[0].mxu0 %v2581
    %v2648 = vpop.f32.mrb[0].mxu0
    %v2649 = vadd.f32 0.0, %v2648
    %v2650 = vpop.f32.mrb[0].mxu0
    %v2651 = vpop.f32.mrb[0].mxu0
    %v2652 = vadd.f32 0.0, %v2651
    %v2653 = vpop.f32.mrb[0].mxu0
    %2654 = vmatprep.mubr.bf16.mxu0 0
    %2655 = vmatmul.mubr.bf16.gmra.mrb[0].mxu0 %v2584
    %v2656 = vpop.f32.mrb[0].mxu0
    %v2657 = vadd.f32 0.0, %v2656
    %v2658 = vpop.f32.mrb[0].mxu0
    %v2659 = vpop.f32.mrb[0].mxu0
    %v2660 = vadd.f32 0.0, %v2659
    %v2661 = vpop.f32.mrb[0].mxu0
    %2662 = vdwg.mxu0
    %v2663 = vsel %vm302, %v2633, -inf
    %2664 = vmax.xlane.f32.xlu0 %v2663
    %v2665 = vpop.xlane.xlu0 %2664
    %v2666 = vsel %vm302, %v2636, -inf
    %2667 = vmax.xlane.f32.xlu0 %v2666
    %v2668 = vpop.xlane.xlu0 %2667
    %v2669 = vsel %vm302, %v2641, -inf
    %2670 = vmax.xlane.f32.xlu0 %v2669
    %v2671 = vpop.xlane.xlu0 %2670
    %v2672 = vsel %vm302, %v2644, -inf
    %2673 = vmax.xlane.f32.xlu0 %v2672
    %v2674 = vpop.xlane.xlu0 %2673
    %v2675 = vsel %vm302, %v2649, -inf
    %2676 = vmax.xlane.f32.xlu0 %v2675
    %v2677 = vpop.xlane.xlu0 %2676
    %v2678 = vsel %vm302, %v2652, -inf
    %2679 = vmax.xlane.f32.xlu0 %v2678
    %v2680 = vpop.xlane.xlu0 %2679
    %v2681 = vsel %vm302, %v2657, -inf
    %2682 = vmax.xlane.f32.xlu0 %v2681
    %v2683 = vpop.xlane.xlu0 %2682
    %v2684 = vsel %vm302, %v2660, -inf
    %2685 = vmax.xlane.f32.xlu0 %v2684
    %v2686 = vpop.xlane.xlu0 %2685
    %v2687 = vsub.f32 %v2633, %v2665
    %v2688 = vsub.f32 %v2636, %v2668
    %v2689 = vsub.f32 %v2641, %v2671
    %v2690 = vsub.f32 %v2644, %v2674
    %v2691 = vsub.f32 %v2649, %v2677
    %v2692 = vsub.f32 %v2652, %v2680
    %v2693 = vsub.f32 %v2657, %v2683
    %v2694 = vsub.f32 %v2660, %v2686
    %v2695 = vmul.f32 %v2687, 1.442695
    %v2696 = vpow.pop %v2695
    %v2697 = vmul.f32 %v2688, 1.442695
    %v2698 = vpow.pop %v2697
    %v2699 = vmul.f32 %v2689, 1.442695
    %v2700 = vpow.pop %v2699
    %v2701 = vmul.f32 %v2690, 1.442695
    %v2702 = vpow.pop %v2701
    %v2703 = vmul.f32 %v2691, 1.442695
    %v2704 = vpow.pop %v2703
    %v2705 = vmul.f32 %v2692, 1.442695
    %v2706 = vpow.pop %v2705
    %v2707 = vmul.f32 %v2693, 1.442695
    %v2708 = vpow.pop %v2707
    %v2709 = vmul.f32 %v2694, 1.442695
    %v2710 = vpow.pop %v2709
    %v2711 = vsel %vm302, %v2696, 0.0
    %2712 = vadd.xlane.f32.xlu0 %v2711
    %v2713 = vpop.xlane.xlu0 %2712
    %v2714 = vsel %vm302, %v2698, 0.0
    %2715 = vadd.xlane.f32.xlu0 %v2714
    %v2716 = vpop.xlane.xlu0 %2715
    %v2717 = vsel %vm302, %v2700, 0.0
    %2718 = vadd.xlane.f32.xlu0 %v2717
    %v2719 = vpop.xlane.xlu0 %2718
    %v2720 = vsel %vm302, %v2702, 0.0
    %2721 = vadd.xlane.f32.xlu0 %v2720
    %v2722 = vpop.xlane.xlu0 %2721
    %v2723 = vsel %vm302, %v2704, 0.0
    %2724 = vadd.xlane.f32.xlu0 %v2723
    %v2725 = vpop.xlane.xlu0 %2724
    %v2726 = vsel %vm302, %v2706, 0.0
    %2727 = vadd.xlane.f32.xlu0 %v2726
    %v2728 = vpop.xlane.xlu0 %2727
    %v2729 = vsel %vm302, %v2708, 0.0
    %2730 = vadd.xlane.f32.xlu0 %v2729
    %v2731 = vpop.xlane.xlu0 %2730
    %v2732 = vsel %vm302, %v2710, 0.0
    %2733 = vadd.xlane.f32.xlu0 %v2732
    %v2734 = vpop.xlane.xlu0 %2733
    %v2735 = vrcp.pop %v2713
    %v2736 = vrcp.pop %v2716
    %v2737 = vrcp.pop %v2719
    %v2738 = vrcp.pop %v2722
    %v2739 = vrcp.pop %v2725
    %v2740 = vrcp.pop %v2728
    %v2741 = vrcp.pop %v2731
    %v2742 = vrcp.pop %v2734
    %v2743 = vmul.f32 %v2696, %v2735
    %v2744 = vmul.f32 %v2698, %v2736
    %v2745 = vmul.f32 %v2700, %v2737
    %v2746 = vmul.f32 %v2702, %v2738
    %v2747 = vmul.f32 %v2704, %v2739
    %v2748 = vmul.f32 %v2706, %v2740
    %v2749 = vmul.f32 %v2708, %v2741
    %v2750 = vmul.f32 %v2710, %v2742
    %v2751 = vpack.c.bf16 %v2744, %v2743
    %v2752 = vpack.c.bf16 %v2746, %v2745
    %v2753 = vpack.c.bf16 %v2748, %v2747
    %v2754 = vpack.c.bf16 %v2750, %v2749
    %2755 = vrot.lane.b32.xlu0 %v2558, 96
    %v2756 = vpop.permute.xlu0 %2755
    %2757 = vrot.lane.b32.xlu0 %v2559, 96
    %v2758 = vpop.permute.xlu0 %2757
    %2759 = vrot.lane.b32.xlu0 %v2560, 96
    %v2760 = vpop.permute.xlu0 %2759
    %2761 = vrot.lane.b32.xlu0 %v2561, 96
    %v2762 = vpop.permute.xlu0 %2761
    %v2768 = vsel %vm302, %v2751, 0
    %v2771 = vsel %vm302, %v2752, 0
    %v2774 = vsel %vm302, %v2753, 0
    %v2777 = vsel %vm302, %v2754, 0
    %2779 = vmatprep.subr.bf16.mxu0 0
    %2780 = vmatpush1.bf16.msra.mxu0 %v2756
    %2781 = vmatprep.subr.bf16.mxu0 0
    %2782 = vmatpush1.bf16.msra.mxu0 %v2758
    %2783 = vmatprep.subr.bf16.mxu0 0
    %2784 = vmatpush1.bf16.msra.mxu0 %v2760
    %2785 = vmatprep.subr.bf16.mxu0 0
    %2786 = vmatpush1.bf16.msra.mxu0 %v2762
    %2787 = vmatprep.subr.bf16.mxu0 0
    %2788 = vmatpush1.bf16.msra.mxu0 0
    %2789 = vmatprep.subr.bf16.mxu0 0
    %2790 = vmatpush1.bf16.msra.mxu0 0
    %2791 = vmatprep.subr.bf16.mxu0 0
    %2792 = vmatpush1.bf16.msra.mxu0 0
    %2793 = vmatprep.subr.bf16.mxu0 0
    %2794 = vmatpush1.bf16.msra.mxu0 0
    %2795 = vmatprep.subr.bf16.mxu0 0
    %2796 = vmatpush1.bf16.msra.mxu0 0
    %2797 = vmatprep.subr.bf16.mxu0 0
    %2798 = vmatpush1.bf16.msra.mxu0 0
    %2799 = vmatprep.subr.bf16.mxu0 0
    %2800 = vmatpush1.bf16.msra.mxu0 0
    %2801 = vmatprep.subr.bf16.mxu0 0
    %2802 = vmatpush1.bf16.msra.mxu0 0
    %2803 = vmatprep.subr.bf16.mxu0 0
    %2804 = vmatpush1.bf16.msra.mxu0 0
    %2805 = vmatprep.subr.bf16.mxu0 0
    %2806 = vmatpush1.bf16.msra.mxu0 0
    %2807 = vmatprep.subr.bf16.mxu0 0
    %2808 = vmatpush1.bf16.msra.mxu0 0
    %2809 = vmatprep.subr.bf16.mxu0 0
    %2810 = vmatpush1.bf16.msra.mxu0 0
    %2811 = vmatprep.mubr.bf16.mxu0 0
    %2812 = vmatmul.mubr.bf16.gmra.mrb[0].mxu0 %v2768
    %v2813 = vpop.f32.mrb[0].mxu0
    %v2814 = vadd.f32 0.0, %v2813
    %v2815 = vpop.f32.mrb[0].mxu0
    %v2816 = vpop.f32.mrb[0].mxu0
    %v2817 = vadd.f32 0.0, %v2816
    %v2818 = vpop.f32.mrb[0].mxu0
    %2819 = vmatprep.mubr.bf16.mxu0 0
    %2820 = vmatmul.mubr.bf16.gmra.mrb[0].mxu0 %v2771
    %v2821 = vpop.f32.mrb[0].mxu0
    %v2822 = vadd.f32 0.0, %v2821
    %v2823 = vpop.f32.mrb[0].mxu0
    %v2824 = vpop.f32.mrb[0].mxu0
    %v2825 = vadd.f32 0.0, %v2824
    %v2826 = vpop.f32.mrb[0].mxu0
    %2827 = vmatprep.mubr.bf16.mxu0 0
    %2828 = vmatmul.mubr.bf16.gmra.mrb[0].mxu0 %v2774
    %v2829 = vpop.f32.mrb[0].mxu0
    %v2830 = vadd.f32 0.0, %v2829
    %v2831 = vpop.f32.mrb[0].mxu0
    %v2832 = vpop.f32.mrb[0].mxu0
    %v2833 = vadd.f32 0.0, %v2832
    %v2834 = vpop.f32.mrb[0].mxu0
    %2835 = vmatprep.mubr.bf16.mxu0 0
    %2836 = vmatmul.mubr.bf16.gmra.mrb[0].mxu0 %v2777
    %v2837 = vpop.f32.mrb[0].mxu0
    %v2838 = vadd.f32 0.0, %v2837
    %v2839 = vpop.f32.mrb[0].mxu0
    %v2840 = vpop.f32.mrb[0].mxu0
    %v2841 = vadd.f32 0.0, %v2840
    %v2842 = vpop.f32.mrb[0].mxu0
    %2843 = vdwg.mxu0
    %2844 = vrot.lane.b32.xlu0 %v2558, 120
    %v2845 = vpop.permute.xlu0 %2844
    %2846 = vrot.lane.b32.xlu0 %v2559, 120
    %v2847 = vpop.permute.xlu0 %2846
    %2848 = vrot.lane.b32.xlu0 %v2560, 120
    %v2849 = vpop.permute.xlu0 %2848
    %2850 = vrot.lane.b32.xlu0 %v2561, 120
    %v2851 = vpop.permute.xlu0 %2850
    %2852 = vrot.lane.b32.xlu0 %v2558, 104
    %v2853 = vpop.permute.xlu0 %2852
    %2854 = vrot.lane.b32.xlu0 %v2559, 104
    %v2855 = vpop.permute.xlu0 %2854
    %2856 = vrot.lane.b32.xlu0 %v2560, 104
    %v2857 = vpop.permute.xlu0 %2856
    %2858 = vrot.lane.b32.xlu0 %v2561, 104
    %v2859 = vpop.permute.xlu0 %2858
    %v2861 = vsel %vm212, %v2845, 0
    %v2864 = vsel %vm212, %v2847, 0
    %v2867 = vsel %vm212, %v2849, 0
    %v2870 = vsel %vm212, %v2851, 0
    %v2873 = vsel %vm212, %v2853, 0
    %v2876 = vsel %vm212, %v2855, 0
    %v2879 = vsel %vm212, %v2857, 0
    %v2882 = vsel %vm212, %v2859, 0
    %2884 = vmatprep.subr.bf16.mxu0 0
    %2885 = vmatpush1.bf16.xpose.msra.mxu0 %v2873
    %2886 = vmatprep.subr.bf16.mxu0 0
    %2887 = vmatpush1.bf16.xpose.msra.mxu0 %v2876
    %2888 = vmatprep.subr.bf16.mxu0 0
    %2889 = vmatpush1.bf16.xpose.msra.mxu0 %v2879
    %2890 = vmatprep.subr.bf16.mxu0 0
    %2891 = vmatpush1.bf16.xpose.msra.mxu0 %v2882
    %2892 = vmatprep.subr.bf16.mxu0 0
    %2893 = vmatpush1.bf16.xpose.msra.mxu0 0
    %2894 = vmatprep.subr.bf16.mxu0 0
    %2895 = vmatpush1.bf16.xpose.msra.mxu0 0
    %2896 = vmatprep.subr.bf16.mxu0 0
    %2897 = vmatpush1.bf16.xpose.msra.mxu0 0
    %2898 = vmatprep.subr.bf16.mxu0 0
    %2899 = vmatpush1.bf16.xpose.msra.mxu0 0
    %2900 = vmatprep.subr.bf16.mxu0 0
    %2901 = vmatpush1.bf16.xpose.msra.mxu0 0
    %2902 = vmatprep.subr.bf16.mxu0 0
    %2903 = vmatpush1.bf16.xpose.msra.mxu0 0
    %2904 = vmatprep.subr.bf16.mxu0 0
    %2905 = vmatpush1.bf16.xpose.msra.mxu0 0
    %2906 = vmatprep.subr.bf16.mxu0 0
    %2907 = vmatpush1.bf16.xpose.msra.mxu0 0
    %2908 = vmatprep.subr.bf16.mxu0 0
    %2909 = vmatpush1.bf16.xpose.msra.mxu0 0
    %2910 = vmatprep.subr.bf16.mxu0 0
    %2911 = vmatpush1.bf16.xpose.msra.mxu0 0
    %2912 = vmatprep.subr.bf16.mxu0 0
    %2913 = vmatpush1.bf16.xpose.msra.mxu0 0
    %2914 = vmatprep.subr.bf16.mxu0 0
    %2915 = vmatpush1.bf16.xpose.msra.mxu0 0
    %2916 = vmatprep.mubr.bf16.mxu0 0
    %2917 = vmatmul.mubr.bf16.gmra.mrb[0].mxu0 %v2861
    %v2918 = vpop.f32.mrb[0].mxu0
    %v2919 = vadd.f32 0.0, %v2918
    %v2920 = vpop.f32.mrb[0].mxu0
    %v2921 = vpop.f32.mrb[0].mxu0
    %v2922 = vadd.f32 0.0, %v2921
    %v2923 = vpop.f32.mrb[0].mxu0
    %2924 = vmatprep.mubr.bf16.mxu0 0
    %2925 = vmatmul.mubr.bf16.gmra.mrb[0].mxu0 %v2864
    %v2926 = vpop.f32.mrb[0].mxu0
    %v2927 = vadd.f32 0.0, %v2926
    %v2928 = vpop.f32.mrb[0].mxu0
    %v2929 = vpop.f32.mrb[0].mxu0
    %v2930 = vadd.f32 0.0, %v2929
    %v2931 = vpop.f32.mrb[0].mxu0
    %2932 = vmatprep.mubr.bf16.mxu0 0
    %2933 = vmatmul.mubr.bf16.gmra.mrb[0].mxu0 %v2867
    %v2934 = vpop.f32.mrb[0].mxu0
    %v2935 = vadd.f32 0.0, %v2934
    %v2936 = vpop.f32.mrb[0].mxu0
    %v2937 = vpop.f32.mrb[0].mxu0
    %v2938 = vadd.f32 0.0, %v2937
    %v2939 = vpop.f32.mrb[0].mxu0
    %2940 = vmatprep.mubr.bf16.mxu0 0
    %2941 = vmatmul.mubr.bf16.gmra.mrb[0].mxu0 %v2870
    %v2942 = vpop.f32.mrb[0].mxu0
    %v2943 = vadd.f32 0.0, %v2942
    %v2944 = vpop.f32.mrb[0].mxu0
    %v2945 = vpop.f32.mrb[0].mxu0
    %v2946 = vadd.f32 0.0, %v2945
    %v2947 = vpop.f32.mrb[0].mxu0
    %2948 = vdwg.mxu0
    %v2949 = vsel %vm302, %v2919, -inf
    %2950 = vmax.xlane.f32.xlu0 %v2949
    %v2951 = vpop.xlane.xlu0 %2950
    %v2952 = vsel %vm302, %v2922, -inf
    %2953 = vmax.xlane.f32.xlu0 %v2952
    %v2954 = vpop.xlane.xlu0 %2953
    %v2955 = vsel %vm302, %v2927, -inf
    %2956 = vmax.xlane.f32.xlu0 %v2955
    %v2957 = vpop.xlane.xlu0 %2956
    %v2958 = vsel %vm302, %v2930, -inf
    %2959 = vmax.xlane.f32.xlu0 %v2958
    %v2960 = vpop.xlane.xlu0 %2959
    %v2961 = vsel %vm302, %v2935, -inf
    %2962 = vmax.xlane.f32.xlu0 %v2961
    %v2963 = vpop.xlane.xlu0 %2962
    %v2964 = vsel %vm302, %v2938, -inf
    %2965 = vmax.xlane.f32.xlu0 %v2964
    %v2966 = vpop.xlane.xlu0 %2965
    %v2967 = vsel %vm302, %v2943, -inf
    %2968 = vmax.xlane.f32.xlu0 %v2967
    %v2969 = vpop.xlane.xlu0 %2968
    %v2970 = vsel %vm302, %v2946, -inf
    %2971 = vmax.xlane.f32.xlu0 %v2970
    %v2972 = vpop.xlane.xlu0 %2971
    %v2973 = vsub.f32 %v2919, %v2951
    %v2974 = vsub.f32 %v2922, %v2954
    %v2975 = vsub.f32 %v2927, %v2957
    %v2976 = vsub.f32 %v2930, %v2960
    %v2977 = vsub.f32 %v2935, %v2963
    %v2978 = vsub.f32 %v2938, %v2966
    %v2979 = vsub.f32 %v2943, %v2969
    %v2980 = vsub.f32 %v2946, %v2972
    %v2981 = vmul.f32 %v2973, 1.442695
    %v2982 = vpow.pop %v2981
    %v2983 = vmul.f32 %v2974, 1.442695
    %v2984 = vpow.pop %v2983
    %v2985 = vmul.f32 %v2975, 1.442695
    %v2986 = vpow.pop %v2985
    %v2987 = vmul.f32 %v2976, 1.442695
    %v2988 = vpow.pop %v2987
    %v2989 = vmul.f32 %v2977, 1.442695
    %v2990 = vpow.pop %v2989
    %v2991 = vmul.f32 %v2978, 1.442695
    %v2992 = vpow.pop %v2991
    %v2993 = vmul.f32 %v2979, 1.442695
    %v2994 = vpow.pop %v2993
    %v2995 = vmul.f32 %v2980, 1.442695
    %v2996 = vpow.pop %v2995
    %v2997 = vsel %vm302, %v2982, 0.0
    %2998 = vadd.xlane.f32.xlu0 %v2997
    %v2999 = vpop.xlane.xlu0 %2998
    %v3000 = vsel %vm302, %v2984, 0.0
    %3001 = vadd.xlane.f32.xlu0 %v3000
    %v3002 = vpop.xlane.xlu0 %3001
    %v3003 = vsel %vm302, %v2986, 0.0
    %3004 = vadd.xlane.f32.xlu0 %v3003
    %v3005 = vpop.xlane.xlu0 %3004
    %v3006 = vsel %vm302, %v2988, 0.0
    %3007 = vadd.xlane.f32.xlu0 %v3006
    %v3008 = vpop.xlane.xlu0 %3007
    %v3009 = vsel %vm302, %v2990, 0.0
    %3010 = vadd.xlane.f32.xlu0 %v3009
    %v3011 = vpop.xlane.xlu0 %3010
    %v3012 = vsel %vm302, %v2992, 0.0
    %3013 = vadd.xlane.f32.xlu0 %v3012
    %v3014 = vpop.xlane.xlu0 %3013
    %v3015 = vsel %vm302, %v2994, 0.0
    %3016 = vadd.xlane.f32.xlu0 %v3015
    %v3017 = vpop.xlane.xlu0 %3016
    %v3018 = vsel %vm302, %v2996, 0.0
    %3019 = vadd.xlane.f32.xlu0 %v3018
    %v3020 = vpop.xlane.xlu0 %3019
    %v3021 = vrcp.pop %v2999
    %v3022 = vrcp.pop %v3002
    %v3023 = vrcp.pop %v3005
    %v3024 = vrcp.pop %v3008
    %v3025 = vrcp.pop %v3011
    %v3026 = vrcp.pop %v3014
    %v3027 = vrcp.pop %v3017
    %v3028 = vrcp.pop %v3020
    %v3029 = vmul.f32 %v2982, %v3021
    %v3030 = vmul.f32 %v2984, %v3022
    %v3031 = vmul.f32 %v2986, %v3023
    %v3032 = vmul.f32 %v2988, %v3024
    %v3033 = vmul.f32 %v2990, %v3025
    %v3034 = vmul.f32 %v2992, %v3026
    %v3035 = vmul.f32 %v2994, %v3027
    %v3036 = vmul.f32 %v2996, %v3028
    %v3037 = vpack.c.bf16 %v3030, %v3029
    %v3038 = vpack.c.bf16 %v3032, %v3031
    %v3039 = vpack.c.bf16 %v3034, %v3033
    %v3040 = vpack.c.bf16 %v3036, %v3035
    %3041 = vrot.lane.b32.xlu0 %v2558, 88
    %v3042 = vpop.permute.xlu0 %3041
    %3043 = vrot.lane.b32.xlu0 %v2559, 88
    %v3044 = vpop.permute.xlu0 %3043
    %3045 = vrot.lane.b32.xlu0 %v2560, 88
    %v3046 = vpop.permute.xlu0 %3045
    %3047 = vrot.lane.b32.xlu0 %v2561, 88
    %v3048 = vpop.permute.xlu0 %3047
    %v3054 = vsel %vm302, %v3037, 0
    %v3057 = vsel %vm302, %v3038, 0
    %v3060 = vsel %vm302, %v3039, 0
    %v3063 = vsel %vm302, %v3040, 0
    %3065 = vmatprep.subr.bf16.mxu0 0
    %3066 = vmatpush1.bf16.msra.mxu0 %v3042
    %3067 = vmatprep.subr.bf16.mxu0 0
    %3068 = vmatpush1.bf16.msra.mxu0 %v3044
    %3069 = vmatprep.subr.bf16.mxu0 0
    %3070 = vmatpush1.bf16.msra.mxu0 %v3046
    %3071 = vmatprep.subr.bf16.mxu0 0
    %3072 = vmatpush1.bf16.msra.mxu0 %v3048
    %3073 = vmatprep.subr.bf16.mxu0 0
    %3074 = vmatpush1.bf16.msra.mxu0 0
    %3075 = vmatprep.subr.bf16.mxu0 0
    %3076 = vmatpush1.bf16.msra.mxu0 0
    %3077 = vmatprep.subr.bf16.mxu0 0
    %3078 = vmatpush1.bf16.msra.mxu0 0
    %3079 = vmatprep.subr.bf16.mxu0 0
    %3080 = vmatpush1.bf16.msra.mxu0 0
    %3081 = vmatprep.subr.bf16.mxu0 0
    %3082 = vmatpush1.bf16.msra.mxu0 0
    %3083 = vmatprep.subr.bf16.mxu0 0
    %3084 = vmatpush1.bf16.msra.mxu0 0
    %3085 = vmatprep.subr.bf16.mxu0 0
    %3086 = vmatpush1.bf16.msra.mxu0 0
    %3087 = vmatprep.subr.bf16.mxu0 0
    %3088 = vmatpush1.bf16.msra.mxu0 0
    %3089 = vmatprep.subr.bf16.mxu0 0
    %3090 = vmatpush1.bf16.msra.mxu0 0
    %3091 = vmatprep.subr.bf16.mxu0 0
    %3092 = vmatpush1.bf16.msra.mxu0 0
    %3093 = vmatprep.subr.bf16.mxu0 0
    %3094 = vmatpush1.bf16.msra.mxu0 0
    %3095 = vmatprep.subr.bf16.mxu0 0
    %3096 = vmatpush1.bf16.msra.mxu0 0
    %3097 = vmatprep.mubr.bf16.mxu0 0
    %3098 = vmatmul.mubr.bf16.gmra.mrb[0].mxu0 %v3054
    %v3099 = vpop.f32.mrb[0].mxu0
    %v3100 = vadd.f32 0.0, %v3099
    %v3101 = vpop.f32.mrb[0].mxu0
    %v3102 = vpop.f32.mrb[0].mxu0
    %v3103 = vadd.f32 0.0, %v3102
    %v3104 = vpop.f32.mrb[0].mxu0
    %3105 = vmatprep.mubr.bf16.mxu0 0
    %3106 = vmatmul.mubr.bf16.gmra.mrb[0].mxu0 %v3057
    %v3107 = vpop.f32.mrb[0].mxu0
    %v3108 = vadd.f32 0.0, %v3107
    %v3109 = vpop.f32.mrb[0].mxu0
    %v3110 = vpop.f32.mrb[0].mxu0
    %v3111 = vadd.f32 0.0, %v3110
    %v3112 = vpop.f32.mrb[0].mxu0
    %3113 = vmatprep.mubr.bf16.mxu0 0
    %3114 = vmatmul.mubr.bf16.gmra.mrb[0].mxu0 %v3060
    %v3115 = vpop.f32.mrb[0].mxu0
    %v3116 = vadd.f32 0.0, %v3115
    %v3117 = vpop.f32.mrb[0].mxu0
    %v3118 = vpop.f32.mrb[0].mxu0
    %v3119 = vadd.f32 0.0, %v3118
    %v3120 = vpop.f32.mrb[0].mxu0
    %3121 = vmatprep.mubr.bf16.mxu0 0
    %3122 = vmatmul.mubr.bf16.gmra.mrb[0].mxu0 %v3063
    %v3123 = vpop.f32.mrb[0].mxu0
    %v3124 = vadd.f32 0.0, %v3123
    %v3125 = vpop.f32.mrb[0].mxu0
    %v3126 = vpop.f32.mrb[0].mxu0
    %v3127 = vadd.f32 0.0, %v3126
    %v3128 = vpop.f32.mrb[0].mxu0
    %3129 = vdwg.mxu0
    %3138 = vrot.lane.b32.xlu0 %v3100, 8
    %v3139 = vpop.permute.xlu0 %3138
    %3140 = vrot.lane.b32.xlu0 %v3103, 8
    %v3141 = vpop.permute.xlu0 %3140
    %3142 = vrot.lane.b32.xlu0 %v3108, 8
    %v3143 = vpop.permute.xlu0 %3142
    %3144 = vrot.lane.b32.xlu0 %v3111, 8
    %v3145 = vpop.permute.xlu0 %3144
    %3146 = vrot.lane.b32.xlu0 %v3116, 8
    %v3147 = vpop.permute.xlu0 %3146
    %3148 = vrot.lane.b32.xlu0 %v3119, 8
    %v3149 = vpop.permute.xlu0 %3148
    %3150 = vrot.lane.b32.xlu0 %v3124, 8
    %v3151 = vpop.permute.xlu0 %3150
    %3152 = vrot.lane.b32.xlu0 %v3127, 8
    %v3153 = vpop.permute.xlu0 %3152
    %v3162 = vsel %vm212, %v2814, %v3139
    %v3163 = vsel %vm212, %v2817, %v3141
    %v3164 = vsel %vm212, %v2822, %v3143
    %v3165 = vsel %vm212, %v2825, %v3145
    %v3166 = vsel %vm212, %v2830, %v3147
    %v3167 = vsel %vm212, %v2833, %v3149
    %v3168 = vsel %vm212, %v2838, %v3151
    %v3169 = vsel %vm212, %v2841, %v3153
    %v3170 = vpack.c.bf16 %v2531, %v2528
    %v3171 = vpack.c.bf16 %v2539, %v2536
    %v3172 = vpack.c.bf16 %v2547, %v2544
    %v3173 = vpack.c.bf16 %v2555, %v2552
    %3178 = vrot.lane.b32.xlu0 %v3170, 112
    %v3179 = vpop.permute.xlu0 %3178
    %3180 = vrot.lane.b32.xlu0 %v3171, 112
    %v3181 = vpop.permute.xlu0 %3180
    %3182 = vrot.lane.b32.xlu0 %v3172, 112
    %v3183 = vpop.permute.xlu0 %3182
    %3184 = vrot.lane.b32.xlu0 %v3173, 112
    %v3185 = vpop.permute.xlu0 %3184
    %v3187 = vsel %vm212, %v3170, 0
    %v3190 = vsel %vm212, %v3171, 0
    %v3193 = vsel %vm212, %v3172, 0
    %v3196 = vsel %vm212, %v3173, 0
    %v3199 = vsel %vm212, %v3179, 0
    %v3202 = vsel %vm212, %v3181, 0
    %v3205 = vsel %vm212, %v3183, 0
    %v3208 = vsel %vm212, %v3185, 0
    %3210 = vmatprep.subr.bf16.mxu0 0
    %3211 = vmatpush1.bf16.xpose.msra.mxu0 %v3199
    %3212 = vmatprep.subr.bf16.mxu0 0
    %3213 = vmatpush1.bf16.xpose.msra.mxu0 %v3202
    %3214 = vmatprep.subr.bf16.mxu0 0
    %3215 = vmatpush1.bf16.xpose.msra.mxu0 %v3205
    %3216 = vmatprep.subr.bf16.mxu0 0
    %3217 = vmatpush1.bf16.xpose.msra.mxu0 %v3208
    %3218 = vmatprep.subr.bf16.mxu0 0
    %3219 = vmatpush1.bf16.xpose.msra.mxu0 0
    %3220 = vmatprep.subr.bf16.mxu0 0
    %3221 = vmatpush1.bf16.xpose.msra.mxu0 0
    %3222 = vmatprep.subr.bf16.mxu0 0
    %3223 = vmatpush1.bf16.xpose.msra.mxu0 0
    %3224 = vmatprep.subr.bf16.mxu0 0
    %3225 = vmatpush1.bf16.xpose.msra.mxu0 0
    %3226 = vmatprep.subr.bf16.mxu0 0
    %3227 = vmatpush1.bf16.xpose.msra.mxu0 0
    %3228 = vmatprep.subr.bf16.mxu0 0
    %3229 = vmatpush1.bf16.xpose.msra.mxu0 0
    %3230 = vmatprep.subr.bf16.mxu0 0
    %3231 = vmatpush1.bf16.xpose.msra.mxu0 0
    %3232 = vmatprep.subr.bf16.mxu0 0
    %3233 = vmatpush1.bf16.xpose.msra.mxu0 0
    %3234 = vmatprep.subr.bf16.mxu0 0
    %3235 = vmatpush1.bf16.xpose.msra.mxu0 0
    %3236 = vmatprep.subr.bf16.mxu0 0
    %3237 = vmatpush1.bf16.xpose.msra.mxu0 0
    %3238 = vmatprep.subr.bf16.mxu0 0
    %3239 = vmatpush1.bf16.xpose.msra.mxu0 0
    %3240 = vmatprep.subr.bf16.mxu0 0
    %3241 = vmatpush1.bf16.xpose.msra.mxu0 0
    %3242 = vmatprep.mubr.bf16.mxu0 0
    %3243 = vmatmul.mubr.bf16.gmra.mrb[0].mxu0 %v3187
    %v3244 = vpop.f32.mrb[0].mxu0
    %v3245 = vadd.f32 0.0, %v3244
    %v3246 = vpop.f32.mrb[0].mxu0
    %v3247 = vpop.f32.mrb[0].mxu0
    %v3248 = vadd.f32 0.0, %v3247
    %v3249 = vpop.f32.mrb[0].mxu0
    %3250 = vmatprep.mubr.bf16.mxu0 0
    %3251 = vmatmul.mubr.bf16.gmra.mrb[0].mxu0 %v3190
    %v3252 = vpop.f32.mrb[0].mxu0
    %v3253 = vadd.f32 0.0, %v3252
    %v3254 = vpop.f32.mrb[0].mxu0
    %v3255 = vpop.f32.mrb[0].mxu0
    %v3256 = vadd.f32 0.0, %v3255
    %v3257 = vpop.f32.mrb[0].mxu0
    %3258 = vmatprep.mubr.bf16.mxu0 0
    %3259 = vmatmul.mubr.bf16.gmra.mrb[0].mxu0 %v3193
    %v3260 = vpop.f32.mrb[0].mxu0
    %v3261 = vadd.f32 0.0, %v3260
    %v3262 = vpop.f32.mrb[0].mxu0
    %v3263 = vpop.f32.mrb[0].mxu0
    %v3264 = vadd.f32 0.0, %v3263
    %v3265 = vpop.f32.mrb[0].mxu0
    %3266 = vmatprep.mubr.bf16.mxu0 0
    %3267 = vmatmul.mubr.bf16.gmra.mrb[0].mxu0 %v3196
    %v3268 = vpop.f32.mrb[0].mxu0
    %v3269 = vadd.f32 0.0, %v3268
    %v3270 = vpop.f32.mrb[0].mxu0
    %v3271 = vpop.f32.mrb[0].mxu0
    %v3272 = vadd.f32 0.0, %v3271
    %v3273 = vpop.f32.mrb[0].mxu0
    %3274 = vdwg.mxu0
    %v3275 = vsel %vm302, %v3245, -inf
    %3276 = vmax.xlane.f32.xlu0 %v3275
    %v3277 = vpop.xlane.xlu0 %3276
    %v3278 = vsel %vm302, %v3248, -inf
    %3279 = vmax.xlane.f32.xlu0 %v3278
    %v3280 = vpop.xlane.xlu0 %3279
    %v3281 = vsel %vm302, %v3253, -inf
    %3282 = vmax.xlane.f32.xlu0 %v3281
    %v3283 = vpop.xlane.xlu0 %3282
    %v3284 = vsel %vm302, %v3256, -inf
    %3285 = vmax.xlane.f32.xlu0 %v3284
    %v3286 = vpop.xlane.xlu0 %3285
    %v3287 = vsel %vm302, %v3261, -inf
    %3288 = vmax.xlane.f32.xlu0 %v3287
    %v3289 = vpop.xlane.xlu0 %3288
    %v3290 = vsel %vm302, %v3264, -inf
    %3291 = vmax.xlane.f32.xlu0 %v3290
    %v3292 = vpop.xlane.xlu0 %3291
    %v3293 = vsel %vm302, %v3269, -inf
    %3294 = vmax.xlane.f32.xlu0 %v3293
    %v3295 = vpop.xlane.xlu0 %3294
    %v3296 = vsel %vm302, %v3272, -inf
    %3297 = vmax.xlane.f32.xlu0 %v3296
    %v3298 = vpop.xlane.xlu0 %3297
    %v3299 = vsub.f32 %v3245, %v3277
    %v3300 = vsub.f32 %v3248, %v3280
    %v3301 = vsub.f32 %v3253, %v3283
    %v3302 = vsub.f32 %v3256, %v3286
    %v3303 = vsub.f32 %v3261, %v3289
    %v3304 = vsub.f32 %v3264, %v3292
    %v3305 = vsub.f32 %v3269, %v3295
    %v3306 = vsub.f32 %v3272, %v3298
    %v3307 = vmul.f32 %v3299, 1.442695
    %v3308 = vpow.pop %v3307
    %v3309 = vmul.f32 %v3300, 1.442695
    %v3310 = vpow.pop %v3309
    %v3311 = vmul.f32 %v3301, 1.442695
    %v3312 = vpow.pop %v3311
    %v3313 = vmul.f32 %v3302, 1.442695
    %v3314 = vpow.pop %v3313
    %v3315 = vmul.f32 %v3303, 1.442695
    %v3316 = vpow.pop %v3315
    %v3317 = vmul.f32 %v3304, 1.442695
    %v3318 = vpow.pop %v3317
    %v3319 = vmul.f32 %v3305, 1.442695
    %v3320 = vpow.pop %v3319
    %v3321 = vmul.f32 %v3306, 1.442695
    %v3322 = vpow.pop %v3321
    %v3323 = vsel %vm302, %v3308, 0.0
    %3324 = vadd.xlane.f32.xlu0 %v3323
    %v3325 = vpop.xlane.xlu0 %3324
    %v3326 = vsel %vm302, %v3310, 0.0
    %3327 = vadd.xlane.f32.xlu0 %v3326
    %v3328 = vpop.xlane.xlu0 %3327
    %v3329 = vsel %vm302, %v3312, 0.0
    %3330 = vadd.xlane.f32.xlu0 %v3329
    %v3331 = vpop.xlane.xlu0 %3330
    %v3332 = vsel %vm302, %v3314, 0.0
    %3333 = vadd.xlane.f32.xlu0 %v3332
    %v3334 = vpop.xlane.xlu0 %3333
    %v3335 = vsel %vm302, %v3316, 0.0
    %3336 = vadd.xlane.f32.xlu0 %v3335
    %v3337 = vpop.xlane.xlu0 %3336
    %v3338 = vsel %vm302, %v3318, 0.0
    %3339 = vadd.xlane.f32.xlu0 %v3338
    %v3340 = vpop.xlane.xlu0 %3339
    %v3341 = vsel %vm302, %v3320, 0.0
    %3342 = vadd.xlane.f32.xlu0 %v3341
    %v3343 = vpop.xlane.xlu0 %3342
    %v3344 = vsel %vm302, %v3322, 0.0
    %3345 = vadd.xlane.f32.xlu0 %v3344
    %v3346 = vpop.xlane.xlu0 %3345
    %v3347 = vrcp.pop %v3325
    %v3348 = vrcp.pop %v3328
    %v3349 = vrcp.pop %v3331
    %v3350 = vrcp.pop %v3334
    %v3351 = vrcp.pop %v3337
    %v3352 = vrcp.pop %v3340
    %v3353 = vrcp.pop %v3343
    %v3354 = vrcp.pop %v3346
    %v3355 = vmul.f32 %v3308, %v3347
    %v3356 = vmul.f32 %v3310, %v3348
    %v3357 = vmul.f32 %v3312, %v3349
    %v3358 = vmul.f32 %v3314, %v3350
    %v3359 = vmul.f32 %v3316, %v3351
    %v3360 = vmul.f32 %v3318, %v3352
    %v3361 = vmul.f32 %v3320, %v3353
    %v3362 = vmul.f32 %v3322, %v3354
    %v3363 = vpack.c.bf16 %v3356, %v3355
    %v3364 = vpack.c.bf16 %v3358, %v3357
    %v3365 = vpack.c.bf16 %v3360, %v3359
    %v3366 = vpack.c.bf16 %v3362, %v3361
    %3367 = vrot.lane.b32.xlu0 %v3170, 96
    %v3368 = vpop.permute.xlu0 %3367
    %3369 = vrot.lane.b32.xlu0 %v3171, 96
    %v3370 = vpop.permute.xlu0 %3369
    %3371 = vrot.lane.b32.xlu0 %v3172, 96
    %v3372 = vpop.permute.xlu0 %3371
    %3373 = vrot.lane.b32.xlu0 %v3173, 96
    %v3374 = vpop.permute.xlu0 %3373
    %v3380 = vsel %vm302, %v3363, 0
    %v3383 = vsel %vm302, %v3364, 0
    %v3386 = vsel %vm302, %v3365, 0
    %v3389 = vsel %vm302, %v3366, 0
    %3391 = vmatprep.subr.bf16.mxu0 0
    %3392 = vmatpush1.bf16.msra.mxu0 %v3368
    %3393 = vmatprep.subr.bf16.mxu0 0
    %3394 = vmatpush1.bf16.msra.mxu0 %v3370
    %3395 = vmatprep.subr.bf16.mxu0 0
    %3396 = vmatpush1.bf16.msra.mxu0 %v3372
    %3397 = vmatprep.subr.bf16.mxu0 0
    %3398 = vmatpush1.bf16.msra.mxu0 %v3374
    %3399 = vmatprep.subr.bf16.mxu0 0
    %3400 = vmatpush1.bf16.msra.mxu0 0
    %3401 = vmatprep.subr.bf16.mxu0 0
    %3402 = vmatpush1.bf16.msra.mxu0 0
    %3403 = vmatprep.subr.bf16.mxu0 0
    %3404 = vmatpush1.bf16.msra.mxu0 0
    %3405 = vmatprep.subr.bf16.mxu0 0
    %3406 = vmatpush1.bf16.msra.mxu0 0
    %3407 = vmatprep.subr.bf16.mxu0 0
    %3408 = vmatpush1.bf16.msra.mxu0 0
    %3409 = vmatprep.subr.bf16.mxu0 0
    %3410 = vmatpush1.bf16.msra.mxu0 0
    %3411 = vmatprep.subr.bf16.mxu0 0
    %3412 = vmatpush1.bf16.msra.mxu0 0
    %3413 = vmatprep.subr.bf16.mxu0 0
    %3414 = vmatpush1.bf16.msra.mxu0 0
    %3415 = vmatprep.subr.bf16.mxu0 0
    %3416 = vmatpush1.bf16.msra.mxu0 0
    %3417 = vmatprep.subr.bf16.mxu0 0
    %3418 = vmatpush1.bf16.msra.mxu0 0
    %3419 = vmatprep.subr.bf16.mxu0 0
    %3420 = vmatpush1.bf16.msra.mxu0 0
    %3421 = vmatprep.subr.bf16.mxu0 0
    %3422 = vmatpush1.bf16.msra.mxu0 0
    %3423 = vmatprep.mubr.bf16.mxu0 0
    %3424 = vmatmul.mubr.bf16.gmra.mrb[0].mxu0 %v3380
    %v3425 = vpop.f32.mrb[0].mxu0
    %v3426 = vadd.f32 0.0, %v3425
    %v3427 = vpop.f32.mrb[0].mxu0
    %v3428 = vpop.f32.mrb[0].mxu0
    %v3429 = vadd.f32 0.0, %v3428
    %v3430 = vpop.f32.mrb[0].mxu0
    %3431 = vmatprep.mubr.bf16.mxu0 0
    %3432 = vmatmul.mubr.bf16.gmra.mrb[0].mxu0 %v3383
    %v3433 = vpop.f32.mrb[0].mxu0
    %v3434 = vadd.f32 0.0, %v3433
    %v3435 = vpop.f32.mrb[0].mxu0
    %v3436 = vpop.f32.mrb[0].mxu0
    %v3437 = vadd.f32 0.0, %v3436
    %v3438 = vpop.f32.mrb[0].mxu0
    %3439 = vmatprep.mubr.bf16.mxu0 0
    %3440 = vmatmul.mubr.bf16.gmra.mrb[0].mxu0 %v3386
    %v3441 = vpop.f32.mrb[0].mxu0
    %v3442 = vadd.f32 0.0, %v3441
    %v3443 = vpop.f32.mrb[0].mxu0
    %v3444 = vpop.f32.mrb[0].mxu0
    %v3445 = vadd.f32 0.0, %v3444
    %v3446 = vpop.f32.mrb[0].mxu0
    %3447 = vmatprep.mubr.bf16.mxu0 0
    %3448 = vmatmul.mubr.bf16.gmra.mrb[0].mxu0 %v3389
    %v3449 = vpop.f32.mrb[0].mxu0
    %v3450 = vadd.f32 0.0, %v3449
    %v3451 = vpop.f32.mrb[0].mxu0
    %v3452 = vpop.f32.mrb[0].mxu0
    %v3453 = vadd.f32 0.0, %v3452
    %v3454 = vpop.f32.mrb[0].mxu0
    %3455 = vdwg.mxu0
    %3456 = vrot.lane.b32.xlu0 %v3170, 120
    %v3457 = vpop.permute.xlu0 %3456
    %3458 = vrot.lane.b32.xlu0 %v3171, 120
    %v3459 = vpop.permute.xlu0 %3458
    %3460 = vrot.lane.b32.xlu0 %v3172, 120
    %v3461 = vpop.permute.xlu0 %3460
    %3462 = vrot.lane.b32.xlu0 %v3173, 120
    %v3463 = vpop.permute.xlu0 %3462
    %3464 = vrot.lane.b32.xlu0 %v3170, 104
    %v3465 = vpop.permute.xlu0 %3464
    %3466 = vrot.lane.b32.xlu0 %v3171, 104
    %v3467 = vpop.permute.xlu0 %3466
    %3468 = vrot.lane.b32.xlu0 %v3172, 104
    %v3469 = vpop.permute.xlu0 %3468
    %3470 = vrot.lane.b32.xlu0 %v3173, 104
    %v3471 = vpop.permute.xlu0 %3470
    %v3473 = vsel %vm212, %v3457, 0
    %v3476 = vsel %vm212, %v3459, 0
    %v3479 = vsel %vm212, %v3461, 0
    %v3482 = vsel %vm212, %v3463, 0
    %v3485 = vsel %vm212, %v3465, 0
    %v3488 = vsel %vm212, %v3467, 0
    %v3491 = vsel %vm212, %v3469, 0
    %v3494 = vsel %vm212, %v3471, 0
    %3496 = vmatprep.subr.bf16.mxu0 0
    %3497 = vmatpush1.bf16.xpose.msra.mxu0 %v3485
    %3498 = vmatprep.subr.bf16.mxu0 0
    %3499 = vmatpush1.bf16.xpose.msra.mxu0 %v3488
    %3500 = vmatprep.subr.bf16.mxu0 0
    %3501 = vmatpush1.bf16.xpose.msra.mxu0 %v3491
    %3502 = vmatprep.subr.bf16.mxu0 0
    %3503 = vmatpush1.bf16.xpose.msra.mxu0 %v3494
    %3504 = vmatprep.subr.bf16.mxu0 0
    %3505 = vmatpush1.bf16.xpose.msra.mxu0 0
    %3506 = vmatprep.subr.bf16.mxu0 0
    %3507 = vmatpush1.bf16.xpose.msra.mxu0 0
    %3508 = vmatprep.subr.bf16.mxu0 0
    %3509 = vmatpush1.bf16.xpose.msra.mxu0 0
    %3510 = vmatprep.subr.bf16.mxu0 0
    %3511 = vmatpush1.bf16.xpose.msra.mxu0 0
    %3512 = vmatprep.subr.bf16.mxu0 0
    %3513 = vmatpush1.bf16.xpose.msra.mxu0 0
    %3514 = vmatprep.subr.bf16.mxu0 0
    %3515 = vmatpush1.bf16.xpose.msra.mxu0 0
    %3516 = vmatprep.subr.bf16.mxu0 0
    %3517 = vmatpush1.bf16.xpose.msra.mxu0 0
    %3518 = vmatprep.subr.bf16.mxu0 0
    %3519 = vmatpush1.bf16.xpose.msra.mxu0 0
    %3520 = vmatprep.subr.bf16.mxu0 0
    %3521 = vmatpush1.bf16.xpose.msra.mxu0 0
    %3522 = vmatprep.subr.bf16.mxu0 0
    %3523 = vmatpush1.bf16.xpose.msra.mxu0 0
    %3524 = vmatprep.subr.bf16.mxu0 0
    %3525 = vmatpush1.bf16.xpose.msra.mxu0 0
    %3526 = vmatprep.subr.bf16.mxu0 0
    %3527 = vmatpush1.bf16.xpose.msra.mxu0 0
    %3528 = vmatprep.mubr.bf16.mxu0 0
    %3529 = vmatmul.mubr.bf16.gmra.mrb[0].mxu0 %v3473
    %v3530 = vpop.f32.mrb[0].mxu0
    %v3531 = vadd.f32 0.0, %v3530
    %v3532 = vpop.f32.mrb[0].mxu0
    %v3533 = vpop.f32.mrb[0].mxu0
    %v3534 = vadd.f32 0.0, %v3533
    %v3535 = vpop.f32.mrb[0].mxu0
    %3536 = vmatprep.mubr.bf16.mxu0 0
    %3537 = vmatmul.mubr.bf16.gmra.mrb[0].mxu0 %v3476
    %v3538 = vpop.f32.mrb[0].mxu0
    %v3539 = vadd.f32 0.0, %v3538
    %v3540 = vpop.f32.mrb[0].mxu0
    %v3541 = vpop.f32.mrb[0].mxu0
    %v3542 = vadd.f32 0.0, %v3541
    %v3543 = vpop.f32.mrb[0].mxu0
    %3544 = vmatprep.mubr.bf16.mxu0 0
    %3545 = vmatmul.mubr.bf16.gmra.mrb[0].mxu0 %v3479
    %v3546 = vpop.f32.mrb[0].mxu0
    %v3547 = vadd.f32 0.0, %v3546
    %v3548 = vpop.f32.mrb[0].mxu0
    %v3549 = vpop.f32.mrb[0].mxu0
    %v3550 = vadd.f32 0.0, %v3549
    %v3551 = vpop.f32.mrb[0].mxu0
    %3552 = vmatprep.mubr.bf16.mxu0 0
    %3553 = vmatmul.mubr.bf16.gmra.mrb[0].mxu0 %v3482
    %v3554 = vpop.f32.mrb[0].mxu0
    %v3555 = vadd.f32 0.0, %v3554
    %v3556 = vpop.f32.mrb[0].mxu0
    %v3557 = vpop.f32.mrb[0].mxu0
    %v3558 = vadd.f32 0.0, %v3557
    %v3559 = vpop.f32.mrb[0].mxu0
    %3560 = vdwg.mxu0
    %v3561 = vsel %vm302, %v3531, -inf
    %3562 = vmax.xlane.f32.xlu0 %v3561
    %v3563 = vpop.xlane.xlu0 %3562
    %v3564 = vsel %vm302, %v3534, -inf
    %3565 = vmax.xlane.f32.xlu0 %v3564
    %v3566 = vpop.xlane.xlu0 %3565
    %v3567 = vsel %vm302, %v3539, -inf
    %3568 = vmax.xlane.f32.xlu0 %v3567
    %v3569 = vpop.xlane.xlu0 %3568
    %v3570 = vsel %vm302, %v3542, -inf
    %3571 = vmax.xlane.f32.xlu0 %v3570
    %v3572 = vpop.xlane.xlu0 %3571
    %v3573 = vsel %vm302, %v3547, -inf
    %3574 = vmax.xlane.f32.xlu0 %v3573
    %v3575 = vpop.xlane.xlu0 %3574
    %v3576 = vsel %vm302, %v3550, -inf
    %3577 = vmax.xlane.f32.xlu0 %v3576
    %v3578 = vpop.xlane.xlu0 %3577
    %v3579 = vsel %vm302, %v3555, -inf
    %3580 = vmax.xlane.f32.xlu0 %v3579
    %v3581 = vpop.xlane.xlu0 %3580
    %v3582 = vsel %vm302, %v3558, -inf
    %3583 = vmax.xlane.f32.xlu0 %v3582
    %v3584 = vpop.xlane.xlu0 %3583
    %v3585 = vsub.f32 %v3531, %v3563
    %v3586 = vsub.f32 %v3534, %v3566
    %v3587 = vsub.f32 %v3539, %v3569
    %v3588 = vsub.f32 %v3542, %v3572
    %v3589 = vsub.f32 %v3547, %v3575
    %v3590 = vsub.f32 %v3550, %v3578
    %v3591 = vsub.f32 %v3555, %v3581
    %v3592 = vsub.f32 %v3558, %v3584
    %v3593 = vmul.f32 %v3585, 1.442695
    %v3594 = vpow.pop %v3593
    %v3595 = vmul.f32 %v3586, 1.442695
    %v3596 = vpow.pop %v3595
    %v3597 = vmul.f32 %v3587, 1.442695
    %v3598 = vpow.pop %v3597
    %v3599 = vmul.f32 %v3588, 1.442695
    %v3600 = vpow.pop %v3599
    %v3601 = vmul.f32 %v3589, 1.442695
    %v3602 = vpow.pop %v3601
    %v3603 = vmul.f32 %v3590, 1.442695
    %v3604 = vpow.pop %v3603
    %v3605 = vmul.f32 %v3591, 1.442695
    %v3606 = vpow.pop %v3605
    %v3607 = vmul.f32 %v3592, 1.442695
    %v3608 = vpow.pop %v3607
    %v3609 = vsel %vm302, %v3594, 0.0
    %3610 = vadd.xlane.f32.xlu0 %v3609
    %v3611 = vpop.xlane.xlu0 %3610
    %v3612 = vsel %vm302, %v3596, 0.0
    %3613 = vadd.xlane.f32.xlu0 %v3612
    %v3614 = vpop.xlane.xlu0 %3613
    %v3615 = vsel %vm302, %v3598, 0.0
    %3616 = vadd.xlane.f32.xlu0 %v3615
    %v3617 = vpop.xlane.xlu0 %3616
    %v3618 = vsel %vm302, %v3600, 0.0
    %3619 = vadd.xlane.f32.xlu0 %v3618
    %v3620 = vpop.xlane.xlu0 %3619
    %v3621 = vsel %vm302, %v3602, 0.0
    %3622 = vadd.xlane.f32.xlu0 %v3621
    %v3623 = vpop.xlane.xlu0 %3622
    %v3624 = vsel %vm302, %v3604, 0.0
    %3625 = vadd.xlane.f32.xlu0 %v3624
    %v3626 = vpop.xlane.xlu0 %3625
    %v3627 = vsel %vm302, %v3606, 0.0
    %3628 = vadd.xlane.f32.xlu0 %v3627
    %v3629 = vpop.xlane.xlu0 %3628
    %v3630 = vsel %vm302, %v3608, 0.0
    %3631 = vadd.xlane.f32.xlu0 %v3630
    %v3632 = vpop.xlane.xlu0 %3631
    %v3633 = vrcp.pop %v3611
    %v3634 = vrcp.pop %v3614
    %v3635 = vrcp.pop %v3617
    %v3636 = vrcp.pop %v3620
    %v3637 = vrcp.pop %v3623
    %v3638 = vrcp.pop %v3626
    %v3639 = vrcp.pop %v3629
    %v3640 = vrcp.pop %v3632
    %v3641 = vmul.f32 %v3594, %v3633
    %v3642 = vmul.f32 %v3596, %v3634
    %v3643 = vmul.f32 %v3598, %v3635
    %v3644 = vmul.f32 %v3600, %v3636
    %v3645 = vmul.f32 %v3602, %v3637
    %v3646 = vmul.f32 %v3604, %v3638
    %v3647 = vmul.f32 %v3606, %v3639
    %v3648 = vmul.f32 %v3608, %v3640
    %v3649 = vpack.c.bf16 %v3642, %v3641
    %v3650 = vpack.c.bf16 %v3644, %v3643
    %v3651 = vpack.c.bf16 %v3646, %v3645
    %v3652 = vpack.c.bf16 %v3648, %v3647
    %3653 = vrot.lane.b32.xlu0 %v3170, 88
    %v3654 = vpop.permute.xlu0 %3653
    %3655 = vrot.lane.b32.xlu0 %v3171, 88
    %v3656 = vpop.permute.xlu0 %3655
    %3657 = vrot.lane.b32.xlu0 %v3172, 88
    %v3658 = vpop.permute.xlu0 %3657
    %3659 = vrot.lane.b32.xlu0 %v3173, 88
    %v3660 = vpop.permute.xlu0 %3659
    %v3666 = vsel %vm302, %v3649, 0
    %v3669 = vsel %vm302, %v3650, 0
    %v3672 = vsel %vm302, %v3651, 0
    %v3675 = vsel %vm302, %v3652, 0
    %3677 = vmatprep.subr.bf16.mxu0 0
    %3678 = vmatpush1.bf16.msra.mxu0 %v3654
    %3679 = vmatprep.subr.bf16.mxu0 0
    %3680 = vmatpush1.bf16.msra.mxu0 %v3656
    %3681 = vmatprep.subr.bf16.mxu0 0
    %3682 = vmatpush1.bf16.msra.mxu0 %v3658
    %3683 = vmatprep.subr.bf16.mxu0 0
    %3684 = vmatpush1.bf16.msra.mxu0 %v3660
    %3685 = vmatprep.subr.bf16.mxu0 0
    %3686 = vmatpush1.bf16.msra.mxu0 0
    %3687 = vmatprep.subr.bf16.mxu0 0
    %3688 = vmatpush1.bf16.msra.mxu0 0
    %3689 = vmatprep.subr.bf16.mxu0 0
    %3690 = vmatpush1.bf16.msra.mxu0 0
    %3691 = vmatprep.subr.bf16.mxu0 0
    %3692 = vmatpush1.bf16.msra.mxu0 0
    %3693 = vmatprep.subr.bf16.mxu0 0
    %3694 = vmatpush1.bf16.msra.mxu0 0
    %3695 = vmatprep.subr.bf16.mxu0 0
    %3696 = vmatpush1.bf16.msra.mxu0 0
    %3697 = vmatprep.subr.bf16.mxu0 0
    %3698 = vmatpush1.bf16.msra.mxu0 0
    %3699 = vmatprep.subr.bf16.mxu0 0
    %3700 = vmatpush1.bf16.msra.mxu0 0
    %3701 = vmatprep.subr.bf16.mxu0 0
    %3702 = vmatpush1.bf16.msra.mxu0 0
    %3703 = vmatprep.subr.bf16.mxu0 0
    %3704 = vmatpush1.bf16.msra.mxu0 0
    %3705 = vmatprep.subr.bf16.mxu0 0
    %3706 = vmatpush1.bf16.msra.mxu0 0
    %3707 = vmatprep.subr.bf16.mxu0 0
    %3708 = vmatpush1.bf16.msra.mxu0 0
    %3709 = vmatprep.mubr.bf16.mxu0 0
    %3710 = vmatmul.mubr.bf16.gmra.mrb[0].mxu0 %v3666
    %v3711 = vpop.f32.mrb[0].mxu0
    %v3712 = vadd.f32 0.0, %v3711
    %v3713 = vpop.f32.mrb[0].mxu0
    %v3714 = vpop.f32.mrb[0].mxu0
    %v3715 = vadd.f32 0.0, %v3714
    %v3716 = vpop.f32.mrb[0].mxu0
    %3717 = vmatprep.mubr.bf16.mxu0 0
    %3718 = vmatmul.mubr.bf16.gmra.mrb[0].mxu0 %v3669
    %v3719 = vpop.f32.mrb[0].mxu0
    %v3720 = vadd.f32 0.0, %v3719
    %v3721 = vpop.f32.mrb[0].mxu0
    %v3722 = vpop.f32.mrb[0].mxu0
    %v3723 = vadd.f32 0.0, %v3722
    %v3724 = vpop.f32.mrb[0].mxu0
    %3725 = vmatprep.mubr.bf16.mxu0 0
    %3726 = vmatmul.mubr.bf16.gmra.mrb[0].mxu0 %v3672
    %v3727 = vpop.f32.mrb[0].mxu0
    %v3728 = vadd.f32 0.0, %v3727
    %v3729 = vpop.f32.mrb[0].mxu0
    %v3730 = vpop.f32.mrb[0].mxu0
    %v3731 = vadd.f32 0.0, %v3730
    %v3732 = vpop.f32.mrb[0].mxu0
    %3733 = vmatprep.mubr.bf16.mxu0 0
    %3734 = vmatmul.mubr.bf16.gmra.mrb[0].mxu0 %v3675
    %v3735 = vpop.f32.mrb[0].mxu0
    %v3736 = vadd.f32 0.0, %v3735
    %v3737 = vpop.f32.mrb[0].mxu0
    %v3738 = vpop.f32.mrb[0].mxu0
    %v3739 = vadd.f32 0.0, %v3738
    %v3740 = vpop.f32.mrb[0].mxu0
    %3741 = vdwg.mxu0
    %3750 = vrot.lane.b32.xlu0 %v3712, 8
    %v3751 = vpop.permute.xlu0 %3750
    %3752 = vrot.lane.b32.xlu0 %v3715, 8
    %v3753 = vpop.permute.xlu0 %3752
    %3754 = vrot.lane.b32.xlu0 %v3720, 8
    %v3755 = vpop.permute.xlu0 %3754
    %3756 = vrot.lane.b32.xlu0 %v3723, 8
    %v3757 = vpop.permute.xlu0 %3756
    %3758 = vrot.lane.b32.xlu0 %v3728, 8
    %v3759 = vpop.permute.xlu0 %3758
    %3760 = vrot.lane.b32.xlu0 %v3731, 8
    %v3761 = vpop.permute.xlu0 %3760
    %3762 = vrot.lane.b32.xlu0 %v3736, 8
    %v3763 = vpop.permute.xlu0 %3762
    %3764 = vrot.lane.b32.xlu0 %v3739, 8
    %v3765 = vpop.permute.xlu0 %3764
    %v3774 = vsel %vm212, %v3426, %v3751
    %v3775 = vsel %vm212, %v3429, %v3753
    %v3776 = vsel %vm212, %v3434, %v3755
    %v3777 = vsel %vm212, %v3437, %v3757
    %v3778 = vsel %vm212, %v3442, %v3759
    %v3779 = vsel %vm212, %v3445, %v3761
    %v3780 = vsel %vm212, %v3450, %v3763
    %v3781 = vsel %vm212, %v3453, %v3765
    %s3782 = scalar_lea.vmem %s2, 8
    %v3783 = vld [vmem:[%s3782] sm:$0xf]
    %v3784 = vld [vmem:[%s3782 + $0x4] sm:$0xf]
    %v3785 = vpack.c.bf16 %v3163, %v3162
    %v3786 = vpack.c.bf16 %v3165, %v3164
    %v3787 = vpack.c.bf16 %v3167, %v3166
    %v3788 = vpack.c.bf16 %v3169, %v3168
    %v3789 = vpack.c.bf16 %v3775, %v3774
    %v3790 = vpack.c.bf16 %v3777, %v3776
    %v3791 = vpack.c.bf16 %v3779, %v3778
    %v3792 = vpack.c.bf16 %v3781, %v3780
    %v3793 = vlaneseq
    %v3794 = vshrl.u32 %v3793, 7
    %v3795 = vsub.s32 1, %v3794
    %v3796 = vrot.slane %v2415, %v3795
    %v3799 = vunpack.c.l.b16 %v3783
    %v3800 = vunpack.c.l.b16 %v3784
    %v3801 = vpack.c.b16 %v3800, %v3799
    %v3804 = vsel %vm74, %v3785, 0
    %v3807 = vsel %vm74, %v3786, 0
    %v3810 = vsel %vm74, %v3787, 0
    %v3813 = vsel %vm74, %v3788, 0
    %v3816 = vsel %vm74, %v3789, 0
    %v3819 = vsel %vm74, %v3790, 0
    %v3822 = vsel %vm74, %v3791, 0
    %v3825 = vsel %vm74, %v3792, 0
    %3827 = vmatprep.subr.bf16.mxu0 0
    %3828 = vmatpush1.bf16.msra.mxu0 %v3801
    %3829 = vmatprep.subr.bf16.mxu0 0
    %3830 = vmatpush1.bf16.msra.mxu0 0
    %3831 = vmatprep.subr.bf16.mxu0 0
    %3832 = vmatpush1.bf16.msra.mxu0 0
    %3833 = vmatprep.subr.bf16.mxu0 0
    %3834 = vmatpush1.bf16.msra.mxu0 0
    %3835 = vmatprep.subr.bf16.mxu0 0
    %3836 = vmatpush1.bf16.msra.mxu0 0
    %3837 = vmatprep.subr.bf16.mxu0 0
    %3838 = vmatpush1.bf16.msra.mxu0 0
    %3839 = vmatprep.subr.bf16.mxu0 0
    %3840 = vmatpush1.bf16.msra.mxu0 0
    %3841 = vmatprep.subr.bf16.mxu0 0
    %3842 = vmatpush1.bf16.msra.mxu0 0
    %3843 = vmatprep.subr.bf16.mxu0 0
    %3844 = vmatpush1.bf16.msra.mxu0 0
    %3845 = vmatprep.subr.bf16.mxu0 0
    %3846 = vmatpush1.bf16.msra.mxu0 0
    %3847 = vmatprep.subr.bf16.mxu0 0
    %3848 = vmatpush1.bf16.msra.mxu0 0
    %3849 = vmatprep.subr.bf16.mxu0 0
    %3850 = vmatpush1.bf16.msra.mxu0 0
    %3851 = vmatprep.subr.bf16.mxu0 0
    %3852 = vmatpush1.bf16.msra.mxu0 0
    %3853 = vmatprep.subr.bf16.mxu0 0
    %3854 = vmatpush1.bf16.msra.mxu0 0
    %3855 = vmatprep.subr.bf16.mxu0 0
    %3856 = vmatpush1.bf16.msra.mxu0 0
    %3857 = vmatprep.subr.bf16.mxu0 0
    %3858 = vmatpush1.bf16.msra.mxu0 0
    %3859 = vmatprep.mubr.bf16.mxu0 0
    %3860 = vmatmul.mubr.bf16.gmra.mrb[0].mxu0 %v3804
    %v3861 = vpop.f32.mrb[0].mxu0
    %v3862 = vadd.f32 %v3796, %v3861
    %v3863 = vpop.f32.mrb[0].mxu0
    %v3864 = vpop.f32.mrb[0].mxu0
    %v3865 = vadd.f32 %v3796, %v3864
    %v3866 = vpop.f32.mrb[0].mxu0
    %3867 = vmatprep.mubr.bf16.mxu0 0
    %3868 = vmatmul.mubr.bf16.gmra.mrb[0].mxu0 %v3807
    %v3869 = vpop.f32.mrb[0].mxu0
    %v3870 = vadd.f32 %v3796, %v3869
    %v3871 = vpop.f32.mrb[0].mxu0
    %v3872 = vpop.f32.mrb[0].mxu0
    %v3873 = vadd.f32 %v3796, %v3872
    %v3874 = vpop.f32.mrb[0].mxu0
    %3875 = vmatprep.mubr.bf16.mxu0 0
    %3876 = vmatmul.mubr.bf16.gmra.mrb[0].mxu0 %v3810
    %v3877 = vpop.f32.mrb[0].mxu0
    %v3878 = vadd.f32 %v3796, %v3877
    %v3879 = vpop.f32.mrb[0].mxu0
    %v3880 = vpop.f32.mrb[0].mxu0
    %v3881 = vadd.f32 %v3796, %v3880
    %v3882 = vpop.f32.mrb[0].mxu0
    %3883 = vmatprep.mubr.bf16.mxu0 0
    %3884 = vmatmul.mubr.bf16.gmra.mrb[0].mxu0 %v3813
    %v3885 = vpop.f32.mrb[0].mxu0
    %v3886 = vadd.f32 %v3796, %v3885
    %v3887 = vpop.f32.mrb[0].mxu0
    %v3888 = vpop.f32.mrb[0].mxu0
    %v3889 = vadd.f32 %v3796, %v3888
    %v3890 = vpop.f32.mrb[0].mxu0
    %3891 = vmatprep.mubr.bf16.mxu0 0
    %3892 = vmatmul.mubr.bf16.gmra.mrb[0].mxu0 %v3816
    %v3893 = vpop.f32.mrb[0].mxu0
    %v3894 = vadd.f32 %v3796, %v3893
    %v3895 = vpop.f32.mrb[0].mxu0
    %v3896 = vpop.f32.mrb[0].mxu0
    %v3897 = vadd.f32 %v3796, %v3896
    %v3898 = vpop.f32.mrb[0].mxu0
    %3899 = vmatprep.mubr.bf16.mxu0 0
    %3900 = vmatmul.mubr.bf16.gmra.mrb[0].mxu0 %v3819
    %v3901 = vpop.f32.mrb[0].mxu0
    %v3902 = vadd.f32 %v3796, %v3901
    %v3903 = vpop.f32.mrb[0].mxu0
    %v3904 = vpop.f32.mrb[0].mxu0
    %v3905 = vadd.f32 %v3796, %v3904
    %v3906 = vpop.f32.mrb[0].mxu0
    %3907 = vmatprep.mubr.bf16.mxu0 0
    %3908 = vmatmul.mubr.bf16.gmra.mrb[0].mxu0 %v3822
    %v3909 = vpop.f32.mrb[0].mxu0
    %v3910 = vadd.f32 %v3796, %v3909
    %v3911 = vpop.f32.mrb[0].mxu0
    %v3912 = vpop.f32.mrb[0].mxu0
    %v3913 = vadd.f32 %v3796, %v3912
    %v3914 = vpop.f32.mrb[0].mxu0
    %3915 = vmatprep.mubr.bf16.mxu0 0
    %3916 = vmatmul.mubr.bf16.gmra.mrb[0].mxu0 %v3825
    %v3917 = vpop.f32.mrb[0].mxu0
    %v3918 = vadd.f32 %v3796, %v3917
    %v3919 = vpop.f32.mrb[0].mxu0
    %v3920 = vpop.f32.mrb[0].mxu0
    %v3921 = vadd.f32 %v3796, %v3920
    %v3922 = vpop.f32.mrb[0].mxu0
    %3923 = vdwg.mxu0
    %v3924 = vadd.f32 %v2398, %v3862
    %v3925 = vadd.f32 %v2399, %v3865
    %v3926 = vadd.f32 %v2400, %v3870
    %v3927 = vadd.f32 %v2401, %v3873
    %v3928 = vadd.f32 %v2402, %v3878
    %v3929 = vadd.f32 %v2403, %v3881
    %v3930 = vadd.f32 %v2404, %v3886
    %v3931 = vadd.f32 %v2405, %v3889
    %v3932 = vadd.f32 %v2406, %v3894
    %v3933 = vadd.f32 %v2407, %v3897
    %v3934 = vadd.f32 %v2408, %v3902
    %v3935 = vadd.f32 %v2409, %v3905
    %v3936 = vadd.f32 %v2410, %v3910
    %v3937 = vadd.f32 %v2411, %v3913
    %v3938 = vadd.f32 %v2412, %v3918
    %v3939 = vadd.f32 %v2413, %v3921
    %v3940 = vsel %vm74, %v3924, 0.0
    %3941 = vadd.xlane.f32.xlu0 %v3940
    %v3942 = vpop.xlane.xlu0 %3941
    %v3943 = vsel %vm74, %v3925, 0.0
    %3944 = vadd.xlane.f32.xlu0 %v3943
    %v3945 = vpop.xlane.xlu0 %3944
    %v3946 = vsel %vm74, %v3926, 0.0
    %3947 = vadd.xlane.f32.xlu0 %v3946
    %v3948 = vpop.xlane.xlu0 %3947
    %v3949 = vsel %vm74, %v3927, 0.0
    %3950 = vadd.xlane.f32.xlu0 %v3949
    %v3951 = vpop.xlane.xlu0 %3950
    %v3952 = vsel %vm74, %v3928, 0.0
    %3953 = vadd.xlane.f32.xlu0 %v3952
    %v3954 = vpop.xlane.xlu0 %3953
    %v3955 = vsel %vm74, %v3929, 0.0
    %3956 = vadd.xlane.f32.xlu0 %v3955
    %v3957 = vpop.xlane.xlu0 %3956
    %v3958 = vsel %vm74, %v3930, 0.0
    %3959 = vadd.xlane.f32.xlu0 %v3958
    %v3960 = vpop.xlane.xlu0 %3959
    %v3961 = vsel %vm74, %v3931, 0.0
    %3962 = vadd.xlane.f32.xlu0 %v3961
    %v3963 = vpop.xlane.xlu0 %3962
    %v3964 = vsel %vm74, %v3932, 0.0
    %3965 = vadd.xlane.f32.xlu0 %v3964
    %v3966 = vpop.xlane.xlu0 %3965
    %v3967 = vsel %vm74, %v3933, 0.0
    %3968 = vadd.xlane.f32.xlu0 %v3967
    %v3969 = vpop.xlane.xlu0 %3968
    %v3970 = vsel %vm74, %v3934, 0.0
    %3971 = vadd.xlane.f32.xlu0 %v3970
    %v3972 = vpop.xlane.xlu0 %3971
    %v3973 = vsel %vm74, %v3935, 0.0
    %3974 = vadd.xlane.f32.xlu0 %v3973
    %v3975 = vpop.xlane.xlu0 %3974
    %v3976 = vsel %vm74, %v3936, 0.0
    %3977 = vadd.xlane.f32.xlu0 %v3976
    %v3978 = vpop.xlane.xlu0 %3977
    %v3979 = vsel %vm74, %v3937, 0.0
    %3980 = vadd.xlane.f32.xlu0 %v3979
    %v3981 = vpop.xlane.xlu0 %3980
    %v3982 = vsel %vm74, %v3938, 0.0
    %3983 = vadd.xlane.f32.xlu0 %v3982
    %v3984 = vpop.xlane.xlu0 %3983
    %v3985 = vsel %vm74, %v3939, 0.0
    %3986 = vadd.xlane.f32.xlu0 %v3985
    %v3987 = vpop.xlane.xlu0 %3986
    %v3988 = vmul.f32 %v3942, %v1627
    %v3989 = vmul.f32 %v3945, %v1627
    %v3990 = vmul.f32 %v3948, %v1627
    %v3991 = vmul.f32 %v3951, %v1627
    %v3992 = vmul.f32 %v3954, %v1627
    %v3993 = vmul.f32 %v3957, %v1627
    %v3994 = vmul.f32 %v3960, %v1627
    %v3995 = vmul.f32 %v3963, %v1627
    %v3996 = vmul.f32 %v3966, %v1627
    %v3997 = vmul.f32 %v3969, %v1627
    %v3998 = vmul.f32 %v3972, %v1627
    %v3999 = vmul.f32 %v3975, %v1627
    %v4000 = vmul.f32 %v3978, %v1627
    %v4001 = vmul.f32 %v3981, %v1627
    %v4002 = vmul.f32 %v3984, %v1627
    %v4003 = vmul.f32 %v3987, %v1627
    %v4004 = vsub.f32 %v3924, %v3988
    %v4005 = vsub.f32 %v3925, %v3989
    %v4006 = vsub.f32 %v3926, %v3990
    %v4007 = vsub.f32 %v3927, %v3991
    %v4008 = vsub.f32 %v3928, %v3992
    %v4009 = vsub.f32 %v3929, %v3993
    %v4010 = vsub.f32 %v3930, %v3994
    %v4011 = vsub.f32 %v3931, %v3995
    %v4012 = vsub.f32 %v3932, %v3996
    %v4013 = vsub.f32 %v3933, %v3997
    %v4014 = vsub.f32 %v3934, %v3998
    %v4015 = vsub.f32 %v3935, %v3999
    %v4016 = vsub.f32 %v3936, %v4000
    %v4017 = vsub.f32 %v3937, %v4001
    %v4018 = vsub.f32 %v3938, %v4002
    %v4019 = vsub.f32 %v3939, %v4003
    %v4020 = vmul.f32 %v4004, %v4004
    %v4021 = vmul.f32 %v4005, %v4005
    %v4022 = vmul.f32 %v4006, %v4006
    %v4023 = vmul.f32 %v4007, %v4007
    %v4024 = vmul.f32 %v4008, %v4008
    %v4025 = vmul.f32 %v4009, %v4009
    %v4026 = vmul.f32 %v4010, %v4010
    %v4027 = vmul.f32 %v4011, %v4011
    %v4028 = vmul.f32 %v4012, %v4012
    %v4029 = vmul.f32 %v4013, %v4013
    %v4030 = vmul.f32 %v4014, %v4014
    %v4031 = vmul.f32 %v4015, %v4015
    %v4032 = vmul.f32 %v4016, %v4016
    %v4033 = vmul.f32 %v4017, %v4017
    %v4034 = vmul.f32 %v4018, %v4018
    %v4035 = vmul.f32 %v4019, %v4019
    %v4036 = vsel %vm74, %v4020, 0.0
    %4037 = vadd.xlane.f32.xlu0 %v4036
    %v4038 = vpop.xlane.xlu0 %4037
    %v4039 = vsel %vm74, %v4021, 0.0
    %4040 = vadd.xlane.f32.xlu0 %v4039
    %v4041 = vpop.xlane.xlu0 %4040
    %v4042 = vsel %vm74, %v4022, 0.0
    %4043 = vadd.xlane.f32.xlu0 %v4042
    %v4044 = vpop.xlane.xlu0 %4043
    %v4045 = vsel %vm74, %v4023, 0.0
    %4046 = vadd.xlane.f32.xlu0 %v4045
    %v4047 = vpop.xlane.xlu0 %4046
    %v4048 = vsel %vm74, %v4024, 0.0
    %4049 = vadd.xlane.f32.xlu0 %v4048
    %v4050 = vpop.xlane.xlu0 %4049
    %v4051 = vsel %vm74, %v4025, 0.0
    %4052 = vadd.xlane.f32.xlu0 %v4051
    %v4053 = vpop.xlane.xlu0 %4052
    %v4054 = vsel %vm74, %v4026, 0.0
    %4055 = vadd.xlane.f32.xlu0 %v4054
    %v4056 = vpop.xlane.xlu0 %4055
    %v4057 = vsel %vm74, %v4027, 0.0
    %4058 = vadd.xlane.f32.xlu0 %v4057
    %v4059 = vpop.xlane.xlu0 %4058
    %v4060 = vsel %vm74, %v4028, 0.0
    %4061 = vadd.xlane.f32.xlu0 %v4060
    %v4062 = vpop.xlane.xlu0 %4061
    %v4063 = vsel %vm74, %v4029, 0.0
    %4064 = vadd.xlane.f32.xlu0 %v4063
    %v4065 = vpop.xlane.xlu0 %4064
    %v4066 = vsel %vm74, %v4030, 0.0
    %4067 = vadd.xlane.f32.xlu0 %v4066
    %v4068 = vpop.xlane.xlu0 %4067
    %v4069 = vsel %vm74, %v4031, 0.0
    %4070 = vadd.xlane.f32.xlu0 %v4069
    %v4071 = vpop.xlane.xlu0 %4070
    %v4072 = vsel %vm74, %v4032, 0.0
    %4073 = vadd.xlane.f32.xlu0 %v4072
    %v4074 = vpop.xlane.xlu0 %4073
    %v4075 = vsel %vm74, %v4033, 0.0
    %4076 = vadd.xlane.f32.xlu0 %v4075
    %v4077 = vpop.xlane.xlu0 %4076
    %v4078 = vsel %vm74, %v4034, 0.0
    %4079 = vadd.xlane.f32.xlu0 %v4078
    %v4080 = vpop.xlane.xlu0 %4079
    %v4081 = vsel %vm74, %v4035, 0.0
    %4082 = vadd.xlane.f32.xlu0 %v4081
    %v4083 = vpop.xlane.xlu0 %4082
    %v4084 = vmul.f32 %v4038, %v1627
    %v4085 = vmul.f32 %v4041, %v1627
    %v4086 = vmul.f32 %v4044, %v1627
    %v4087 = vmul.f32 %v4047, %v1627
    %v4088 = vmul.f32 %v4050, %v1627
    %v4089 = vmul.f32 %v4053, %v1627
    %v4090 = vmul.f32 %v4056, %v1627
    %v4091 = vmul.f32 %v4059, %v1627
    %v4092 = vmul.f32 %v4062, %v1627
    %v4093 = vmul.f32 %v4065, %v1627
    %v4094 = vmul.f32 %v4068, %v1627
    %v4095 = vmul.f32 %v4071, %v1627
    %v4096 = vmul.f32 %v4074, %v1627
    %v4097 = vmul.f32 %v4077, %v1627
    %v4098 = vmul.f32 %v4080, %v1627
    %v4099 = vmul.f32 %v4083, %v1627
    %v4100 = vadd.f32 %v4084, 1e-05
    %v4101 = vadd.f32 %v4085, 1e-05
    %v4102 = vadd.f32 %v4086, 1e-05
    %v4103 = vadd.f32 %v4087, 1e-05
    %v4104 = vadd.f32 %v4088, 1e-05
    %v4105 = vadd.f32 %v4089, 1e-05
    %v4106 = vadd.f32 %v4090, 1e-05
    %v4107 = vadd.f32 %v4091, 1e-05
    %v4108 = vadd.f32 %v4092, 1e-05
    %v4109 = vadd.f32 %v4093, 1e-05
    %v4110 = vadd.f32 %v4094, 1e-05
    %v4111 = vadd.f32 %v4095, 1e-05
    %v4112 = vadd.f32 %v4096, 1e-05
    %v4113 = vadd.f32 %v4097, 1e-05
    %v4114 = vadd.f32 %v4098, 1e-05
    %v4115 = vadd.f32 %v4099, 1e-05
    %v4116 = vrsqrt.pop %v4100
    %v4117 = vrsqrt.pop %v4101
    %v4118 = vrsqrt.pop %v4102
    %v4119 = vrsqrt.pop %v4103
    %v4120 = vrsqrt.pop %v4104
    %v4121 = vrsqrt.pop %v4105
    %v4122 = vrsqrt.pop %v4106
    %v4123 = vrsqrt.pop %v4107
    %v4124 = vrsqrt.pop %v4108
    %v4125 = vrsqrt.pop %v4109
    %v4126 = vrsqrt.pop %v4110
    %v4127 = vrsqrt.pop %v4111
    %v4128 = vrsqrt.pop %v4112
    %v4129 = vrsqrt.pop %v4113
    %v4130 = vrsqrt.pop %v4114
    %v4131 = vrsqrt.pop %v4115
    %v4132 = vmul.f32 %v4004, %v4116
    %v4133 = vmul.f32 %v4005, %v4117
    %v4134 = vmul.f32 %v4006, %v4118
    %v4135 = vmul.f32 %v4007, %v4119
    %v4136 = vmul.f32 %v4008, %v4120
    %v4137 = vmul.f32 %v4009, %v4121
    %v4138 = vmul.f32 %v4010, %v4122
    %v4139 = vmul.f32 %v4011, %v4123
    %v4140 = vmul.f32 %v4012, %v4124
    %v4141 = vmul.f32 %v4013, %v4125
    %v4142 = vmul.f32 %v4014, %v4126
    %v4143 = vmul.f32 %v4015, %v4127
    %v4144 = vmul.f32 %v4016, %v4128
    %v4145 = vmul.f32 %v4017, %v4129
    %v4146 = vmul.f32 %v4018, %v4130
    %v4147 = vmul.f32 %v4019, %v4131
    %v4148 = vlaneseq
    %v4149 = vshrl.u32 %v4148, 7
    %v4150 = vsub.s32 4, %v4149
    %v4151 = vrot.slane %v2415, %v4150
    %v4152 = vmul.f32 %v4132, %v4151
    %v4153 = vmul.f32 %v4133, %v4151
    %v4154 = vmul.f32 %v4134, %v4151
    %v4155 = vmul.f32 %v4135, %v4151
    %v4156 = vmul.f32 %v4136, %v4151
    %v4157 = vmul.f32 %v4137, %v4151
    %v4158 = vmul.f32 %v4138, %v4151
    %v4159 = vmul.f32 %v4139, %v4151
    %v4160 = vmul.f32 %v4140, %v4151
    %v4161 = vmul.f32 %v4141, %v4151
    %v4162 = vmul.f32 %v4142, %v4151
    %v4163 = vmul.f32 %v4143, %v4151
    %v4164 = vmul.f32 %v4144, %v4151
    %v4165 = vmul.f32 %v4145, %v4151
    %v4166 = vmul.f32 %v4146, %v4151
    %v4167 = vmul.f32 %v4147, %v4151
    %v4168 = vlaneseq
    %v4169 = vshrl.u32 %v4168, 7
    %v4170 = vsub.s32 5, %v4169
    %v4171 = vrot.slane %v2415, %v4170
    %v4172 = vadd.f32 %v4152, %v4171
    %v4173 = vadd.f32 %v4153, %v4171
    %v4174 = vadd.f32 %v4154, %v4171
    %v4175 = vadd.f32 %v4155, %v4171
    %v4176 = vadd.f32 %v4156, %v4171
    %v4177 = vadd.f32 %v4157, %v4171
    %v4178 = vadd.f32 %v4158, %v4171
    %v4179 = vadd.f32 %v4159, %v4171
    %v4180 = vadd.f32 %v4160, %v4171
    %v4181 = vadd.f32 %v4161, %v4171
    %v4182 = vadd.f32 %v4162, %v4171
    %v4183 = vadd.f32 %v4163, %v4171
    %v4184 = vadd.f32 %v4164, %v4171
    %v4185 = vadd.f32 %v4165, %v4171
    %v4186 = vadd.f32 %v4166, %v4171
    %v4187 = vadd.f32 %v4167, %v4171
    %s4188 = scalar_lea.vmem %s3, 8
    %v4189 = vld [vmem:[%s4188] sm:$0xf]
    %v4190 = vld [vmem:[%s4188 + $0x4] sm:$0xf]
    %v4191 = vpack.c.bf16 %v4173, %v4172
    %v4192 = vpack.c.bf16 %v4175, %v4174
    %v4193 = vpack.c.bf16 %v4177, %v4176
    %v4194 = vpack.c.bf16 %v4179, %v4178
    %v4195 = vpack.c.bf16 %v4181, %v4180
    %v4196 = vpack.c.bf16 %v4183, %v4182
    %v4197 = vpack.c.bf16 %v4185, %v4184
    %v4198 = vpack.c.bf16 %v4187, %v4186
    %v4199 = vlaneseq
    %v4200 = vshrl.u32 %v4199, 7
    %v4201 = vsub.s32 2, %v4200
    %v4202 = vrot.slane %v2415, %v4201
    %v4205 = vunpack.c.l.b16 %v4189
    %v4206 = vunpack.c.l.b16 %v4190
    %v4207 = vpack.c.b16 %v4206, %v4205
    %v4210 = vsel %vm74, %v4191, 0
    %v4213 = vsel %vm74, %v4192, 0
    %v4216 = vsel %vm74, %v4193, 0
    %v4219 = vsel %vm74, %v4194, 0
    %v4222 = vsel %vm74, %v4195, 0
    %v4225 = vsel %vm74, %v4196, 0
    %v4228 = vsel %vm74, %v4197, 0
    %v4231 = vsel %vm74, %v4198, 0
    %4233 = vmatprep.subr.bf16.mxu0 0
    %4234 = vmatpush1.bf16.msra.mxu0 %v4207
    %4235 = vmatprep.subr.bf16.mxu0 0
    %4236 = vmatpush1.bf16.msra.mxu0 0
    %4237 = vmatprep.subr.bf16.mxu0 0
    %4238 = vmatpush1.bf16.msra.mxu0 0
    %4239 = vmatprep.subr.bf16.mxu0 0
    %4240 = vmatpush1.bf16.msra.mxu0 0
    %4241 = vmatprep.subr.bf16.mxu0 0
    %4242 = vmatpush1.bf16.msra.mxu0 0
    %4243 = vmatprep.subr.bf16.mxu0 0
    %4244 = vmatpush1.bf16.msra.mxu0 0
    %4245 = vmatprep.subr.bf16.mxu0 0
    %4246 = vmatpush1.bf16.msra.mxu0 0
    %4247 = vmatprep.subr.bf16.mxu0 0
    %4248 = vmatpush1.bf16.msra.mxu0 0
    %4249 = vmatprep.subr.bf16.mxu0 0
    %4250 = vmatpush1.bf16.msra.mxu0 0
    %4251 = vmatprep.subr.bf16.mxu0 0
    %4252 = vmatpush1.bf16.msra.mxu0 0
    %4253 = vmatprep.subr.bf16.mxu0 0
    %4254 = vmatpush1.bf16.msra.mxu0 0
    %4255 = vmatprep.subr.bf16.mxu0 0
    %4256 = vmatpush1.bf16.msra.mxu0 0
    %4257 = vmatprep.subr.bf16.mxu0 0
    %4258 = vmatpush1.bf16.msra.mxu0 0
    %4259 = vmatprep.subr.bf16.mxu0 0
    %4260 = vmatpush1.bf16.msra.mxu0 0
    %4261 = vmatprep.subr.bf16.mxu0 0
    %4262 = vmatpush1.bf16.msra.mxu0 0
    %4263 = vmatprep.subr.bf16.mxu0 0
    %4264 = vmatpush1.bf16.msra.mxu0 0
    %4265 = vmatprep.mubr.bf16.mxu0 0
    %4266 = vmatmul.mubr.bf16.gmra.mrb[0].mxu0 %v4210
    %v4267 = vpop.f32.mrb[0].mxu0
    %v4268 = vadd.f32 %v4202, %v4267
    %v4269 = vpop.f32.mrb[0].mxu0
    %v4270 = vpop.f32.mrb[0].mxu0
    %v4271 = vadd.f32 %v4202, %v4270
    %v4272 = vpop.f32.mrb[0].mxu0
    %4273 = vmatprep.mubr.bf16.mxu0 0
    %4274 = vmatmul.mubr.bf16.gmra.mrb[0].mxu0 %v4213
    %v4275 = vpop.f32.mrb[0].mxu0
    %v4276 = vadd.f32 %v4202, %v4275
    %v4277 = vpop.f32.mrb[0].mxu0
    %v4278 = vpop.f32.mrb[0].mxu0
    %v4279 = vadd.f32 %v4202, %v4278
    %v4280 = vpop.f32.mrb[0].mxu0
    %4281 = vmatprep.mubr.bf16.mxu0 0
    %4282 = vmatmul.mubr.bf16.gmra.mrb[0].mxu0 %v4216
    %v4283 = vpop.f32.mrb[0].mxu0
    %v4284 = vadd.f32 %v4202, %v4283
    %v4285 = vpop.f32.mrb[0].mxu0
    %v4286 = vpop.f32.mrb[0].mxu0
    %v4287 = vadd.f32 %v4202, %v4286
    %v4288 = vpop.f32.mrb[0].mxu0
    %4289 = vmatprep.mubr.bf16.mxu0 0
    %4290 = vmatmul.mubr.bf16.gmra.mrb[0].mxu0 %v4219
    %v4291 = vpop.f32.mrb[0].mxu0
    %v4292 = vadd.f32 %v4202, %v4291
    %v4293 = vpop.f32.mrb[0].mxu0
    %v4294 = vpop.f32.mrb[0].mxu0
    %v4295 = vadd.f32 %v4202, %v4294
    %v4296 = vpop.f32.mrb[0].mxu0
    %4297 = vmatprep.mubr.bf16.mxu0 0
    %4298 = vmatmul.mubr.bf16.gmra.mrb[0].mxu0 %v4222
    %v4299 = vpop.f32.mrb[0].mxu0
    %v4300 = vadd.f32 %v4202, %v4299
    %v4301 = vpop.f32.mrb[0].mxu0
    %v4302 = vpop.f32.mrb[0].mxu0
    %v4303 = vadd.f32 %v4202, %v4302
    %v4304 = vpop.f32.mrb[0].mxu0
    %4305 = vmatprep.mubr.bf16.mxu0 0
    %4306 = vmatmul.mubr.bf16.gmra.mrb[0].mxu0 %v4225
    %v4307 = vpop.f32.mrb[0].mxu0
    %v4308 = vadd.f32 %v4202, %v4307
    %v4309 = vpop.f32.mrb[0].mxu0
    %v4310 = vpop.f32.mrb[0].mxu0
    %v4311 = vadd.f32 %v4202, %v4310
    %v4312 = vpop.f32.mrb[0].mxu0
    %4313 = vmatprep.mubr.bf16.mxu0 0
    %4314 = vmatmul.mubr.bf16.gmra.mrb[0].mxu0 %v4228
    %v4315 = vpop.f32.mrb[0].mxu0
    %v4316 = vadd.f32 %v4202, %v4315
    %v4317 = vpop.f32.mrb[0].mxu0
    %v4318 = vpop.f32.mrb[0].mxu0
    %v4319 = vadd.f32 %v4202, %v4318
    %v4320 = vpop.f32.mrb[0].mxu0
    %4321 = vmatprep.mubr.bf16.mxu0 0
    %4322 = vmatmul.mubr.bf16.gmra.mrb[0].mxu0 %v4231
    %v4323 = vpop.f32.mrb[0].mxu0
    %v4324 = vadd.f32 %v4202, %v4323
    %v4325 = vpop.f32.mrb[0].mxu0
    %v4326 = vpop.f32.mrb[0].mxu0
    %v4327 = vadd.f32 %v4202, %v4326
    %v4328 = vpop.f32.mrb[0].mxu0
    %4329 = vdwg.mxu0
    %v4330 = vmax.f32 %v4268, 0.0
    %v4331 = vmax.f32 %v4271, 0.0
    %v4332 = vmax.f32 %v4276, 0.0
    %v4333 = vmax.f32 %v4279, 0.0
    %v4334 = vmax.f32 %v4284, 0.0
    %v4335 = vmax.f32 %v4287, 0.0
    %v4336 = vmax.f32 %v4292, 0.0
    %v4337 = vmax.f32 %v4295, 0.0
    %v4338 = vmax.f32 %v4300, 0.0
    %v4339 = vmax.f32 %v4303, 0.0
    %v4340 = vmax.f32 %v4308, 0.0
    %v4341 = vmax.f32 %v4311, 0.0
    %v4342 = vmax.f32 %v4316, 0.0
    %v4343 = vmax.f32 %v4319, 0.0
    %v4344 = vmax.f32 %v4324, 0.0
    %v4345 = vmax.f32 %v4327, 0.0
    %s4346 = scalar_lea.vmem %s4, 32
    %v4347 = vld [vmem:[%s4346] sm:$0xf]
    %v4348 = vld [vmem:[%s4346 + $0x4] sm:$0xf]
    %v4349 = vld [vmem:[%s4346 + $0x8] sm:$0xf]
    %v4350 = vld [vmem:[%s4346 + $0xc] sm:$0xf]
    %v4351 = vld [vmem:[%s4346 + $0x10] sm:$0xf]
    %v4352 = vld [vmem:[%s4346 + $0x14] sm:$0xf]
    %v4353 = vld [vmem:[%s4346 + $0x18] sm:$0xf]
    %v4354 = vld [vmem:[%s4346 + $0x1c] sm:$0xf]
    %v4355 = vpack.c.bf16 %v4331, %v4330
    %v4356 = vpack.c.bf16 %v4333, %v4332
    %v4357 = vpack.c.bf16 %v4335, %v4334
    %v4358 = vpack.c.bf16 %v4337, %v4336
    %v4359 = vpack.c.bf16 %v4339, %v4338
    %v4360 = vpack.c.bf16 %v4341, %v4340
    %v4361 = vpack.c.bf16 %v4343, %v4342
    %v4362 = vpack.c.bf16 %v4345, %v4344
    %v4363 = vlaneseq
    %v4364 = vshrl.u32 %v4363, 7
    %v4365 = vsub.s32 3, %v4364
    %v4366 = vrot.slane %v2415, %v4365
    %v4375 = vunpack.c.l.b16 %v4347
    %v4376 = vunpack.c.l.b16 %v4348
    %v4377 = vunpack.c.l.b16 %v4349
    %v4378 = vunpack.c.l.b16 %v4350
    %v4379 = vunpack.c.l.b16 %v4351
    %v4380 = vunpack.c.l.b16 %v4352
    %v4381 = vunpack.c.l.b16 %v4353
    %v4382 = vunpack.c.l.b16 %v4354
    %v4383 = vpack.c.b16 %v4376, %v4375
    %v4384 = vpack.c.b16 %v4378, %v4377
    %v4385 = vpack.c.b16 %v4380, %v4379
    %v4386 = vpack.c.b16 %v4382, %v4381
    %v4392 = vsel %vm302, %v4355, 0
    %v4395 = vsel %vm302, %v4356, 0
    %v4398 = vsel %vm302, %v4357, 0
    %v4401 = vsel %vm302, %v4358, 0
    %v4404 = vsel %vm302, %v4359, 0
    %v4407 = vsel %vm302, %v4360, 0
    %v4410 = vsel %vm302, %v4361, 0
    %v4413 = vsel %vm302, %v4362, 0
    %4415 = vmatprep.subr.bf16.mxu0 0
    %4416 = vmatpush1.bf16.msra.mxu0 %v4383
    %4417 = vmatprep.subr.bf16.mxu0 0
    %4418 = vmatpush1.bf16.msra.mxu0 %v4384
    %4419 = vmatprep.subr.bf16.mxu0 0
    %4420 = vmatpush1.bf16.msra.mxu0 %v4385
    %4421 = vmatprep.subr.bf16.mxu0 0
    %4422 = vmatpush1.bf16.msra.mxu0 %v4386
    %4423 = vmatprep.subr.bf16.mxu0 0
    %4424 = vmatpush1.bf16.msra.mxu0 0
    %4425 = vmatprep.subr.bf16.mxu0 0
    %4426 = vmatpush1.bf16.msra.mxu0 0
    %4427 = vmatprep.subr.bf16.mxu0 0
    %4428 = vmatpush1.bf16.msra.mxu0 0
    %4429 = vmatprep.subr.bf16.mxu0 0
    %4430 = vmatpush1.bf16.msra.mxu0 0
    %4431 = vmatprep.subr.bf16.mxu0 0
    %4432 = vmatpush1.bf16.msra.mxu0 0
    %4433 = vmatprep.subr.bf16.mxu0 0
    %4434 = vmatpush1.bf16.msra.mxu0 0
    %4435 = vmatprep.subr.bf16.mxu0 0
    %4436 = vmatpush1.bf16.msra.mxu0 0
    %4437 = vmatprep.subr.bf16.mxu0 0
    %4438 = vmatpush1.bf16.msra.mxu0 0
    %4439 = vmatprep.subr.bf16.mxu0 0
    %4440 = vmatpush1.bf16.msra.mxu0 0
    %4441 = vmatprep.subr.bf16.mxu0 0
    %4442 = vmatpush1.bf16.msra.mxu0 0
    %4443 = vmatprep.subr.bf16.mxu0 0
    %4444 = vmatpush1.bf16.msra.mxu0 0
    %4445 = vmatprep.subr.bf16.mxu0 0
    %4446 = vmatpush1.bf16.msra.mxu0 0
    %4447 = vmatprep.mubr.bf16.mxu0 0
    %4448 = vmatmul.mubr.bf16.gmra.mrb[0].mxu0 %v4392
    %v4449 = vpop.f32.mrb[0].mxu0
    %v4450 = vadd.f32 %v4366, %v4449
    %v4451 = vpop.f32.mrb[0].mxu0
    %v4452 = vpop.f32.mrb[0].mxu0
    %v4453 = vadd.f32 %v4366, %v4452
    %v4454 = vpop.f32.mrb[0].mxu0
    %4455 = vmatprep.mubr.bf16.mxu0 0
    %4456 = vmatmul.mubr.bf16.gmra.mrb[0].mxu0 %v4395
    %v4457 = vpop.f32.mrb[0].mxu0
    %v4458 = vadd.f32 %v4366, %v4457
    %v4459 = vpop.f32.mrb[0].mxu0
    %v4460 = vpop.f32.mrb[0].mxu0
    %v4461 = vadd.f32 %v4366, %v4460
    %v4462 = vpop.f32.mrb[0].mxu0
    %4463 = vmatprep.mubr.bf16.mxu0 0
    %4464 = vmatmul.mubr.bf16.gmra.mrb[0].mxu0 %v4398
    %v4465 = vpop.f32.mrb[0].mxu0
    %v4466 = vadd.f32 %v4366, %v4465
    %v4467 = vpop.f32.mrb[0].mxu0
    %v4468 = vpop.f32.mrb[0].mxu0
    %v4469 = vadd.f32 %v4366, %v4468
    %v4470 = vpop.f32.mrb[0].mxu0
    %4471 = vmatprep.mubr.bf16.mxu0 0
    %4472 = vmatmul.mubr.bf16.gmra.mrb[0].mxu0 %v4401
    %v4473 = vpop.f32.mrb[0].mxu0
    %v4474 = vadd.f32 %v4366, %v4473
    %v4475 = vpop.f32.mrb[0].mxu0
    %v4476 = vpop.f32.mrb[0].mxu0
    %v4477 = vadd.f32 %v4366, %v4476
    %v4478 = vpop.f32.mrb[0].mxu0
    %4479 = vmatprep.mubr.bf16.mxu0 0
    %4480 = vmatmul.mubr.bf16.gmra.mrb[0].mxu0 %v4404
    %v4481 = vpop.f32.mrb[0].mxu0
    %v4482 = vadd.f32 %v4366, %v4481
    %v4483 = vpop.f32.mrb[0].mxu0
    %v4484 = vpop.f32.mrb[0].mxu0
    %v4485 = vadd.f32 %v4366, %v4484
    %v4486 = vpop.f32.mrb[0].mxu0
    %4487 = vmatprep.mubr.bf16.mxu0 0
    %4488 = vmatmul.mubr.bf16.gmra.mrb[0].mxu0 %v4407
    %v4489 = vpop.f32.mrb[0].mxu0
    %v4490 = vadd.f32 %v4366, %v4489
    %v4491 = vpop.f32.mrb[0].mxu0
    %v4492 = vpop.f32.mrb[0].mxu0
    %v4493 = vadd.f32 %v4366, %v4492
    %v4494 = vpop.f32.mrb[0].mxu0
    %4495 = vmatprep.mubr.bf16.mxu0 0
    %4496 = vmatmul.mubr.bf16.gmra.mrb[0].mxu0 %v4410
    %v4497 = vpop.f32.mrb[0].mxu0
    %v4498 = vadd.f32 %v4366, %v4497
    %v4499 = vpop.f32.mrb[0].mxu0
    %v4500 = vpop.f32.mrb[0].mxu0
    %v4501 = vadd.f32 %v4366, %v4500
    %v4502 = vpop.f32.mrb[0].mxu0
    %4503 = vmatprep.mubr.bf16.mxu0 0
    %4504 = vmatmul.mubr.bf16.gmra.mrb[0].mxu0 %v4413
    %v4505 = vpop.f32.mrb[0].mxu0
    %v4506 = vadd.f32 %v4366, %v4505
    %v4507 = vpop.f32.mrb[0].mxu0
    %v4508 = vpop.f32.mrb[0].mxu0
    %v4509 = vadd.f32 %v4366, %v4508
    %v4510 = vpop.f32.mrb[0].mxu0
    %4511 = vdwg.mxu0
    %v4512 = vadd.f32 %v4172, %v4450
    %v4513 = vadd.f32 %v4173, %v4453
    %v4514 = vadd.f32 %v4174, %v4458
    %v4515 = vadd.f32 %v4175, %v4461
    %v4516 = vadd.f32 %v4176, %v4466
    %v4517 = vadd.f32 %v4177, %v4469
    %v4518 = vadd.f32 %v4178, %v4474
    %v4519 = vadd.f32 %v4179, %v4477
    %v4520 = vadd.f32 %v4180, %v4482
    %v4521 = vadd.f32 %v4181, %v4485
    %v4522 = vadd.f32 %v4182, %v4490
    %v4523 = vadd.f32 %v4183, %v4493
    %v4524 = vadd.f32 %v4184, %v4498
    %v4525 = vadd.f32 %v4185, %v4501
    %v4526 = vadd.f32 %v4186, %v4506
    %v4527 = vadd.f32 %v4187, %v4509
    %v4528 = vsel %vm74, %v4512, 0.0
    %4529 = vadd.xlane.f32.xlu0 %v4528
    %v4530 = vpop.xlane.xlu0 %4529
    %v4531 = vsel %vm74, %v4513, 0.0
    %4532 = vadd.xlane.f32.xlu0 %v4531
    %v4533 = vpop.xlane.xlu0 %4532
    %v4534 = vsel %vm74, %v4514, 0.0
    %4535 = vadd.xlane.f32.xlu0 %v4534
    %v4536 = vpop.xlane.xlu0 %4535
    %v4537 = vsel %vm74, %v4515, 0.0
    %4538 = vadd.xlane.f32.xlu0 %v4537
    %v4539 = vpop.xlane.xlu0 %4538
    %v4540 = vsel %vm74, %v4516, 0.0
    %4541 = vadd.xlane.f32.xlu0 %v4540
    %v4542 = vpop.xlane.xlu0 %4541
    %v4543 = vsel %vm74, %v4517, 0.0
    %4544 = vadd.xlane.f32.xlu0 %v4543
    %v4545 = vpop.xlane.xlu0 %4544
    %v4546 = vsel %vm74, %v4518, 0.0
    %4547 = vadd.xlane.f32.xlu0 %v4546
    %v4548 = vpop.xlane.xlu0 %4547
    %v4549 = vsel %vm74, %v4519, 0.0
    %4550 = vadd.xlane.f32.xlu0 %v4549
    %v4551 = vpop.xlane.xlu0 %4550
    %v4552 = vsel %vm74, %v4520, 0.0
    %4553 = vadd.xlane.f32.xlu0 %v4552
    %v4554 = vpop.xlane.xlu0 %4553
    %v4555 = vsel %vm74, %v4521, 0.0
    %4556 = vadd.xlane.f32.xlu0 %v4555
    %v4557 = vpop.xlane.xlu0 %4556
    %v4558 = vsel %vm74, %v4522, 0.0
    %4559 = vadd.xlane.f32.xlu0 %v4558
    %v4560 = vpop.xlane.xlu0 %4559
    %v4561 = vsel %vm74, %v4523, 0.0
    %4562 = vadd.xlane.f32.xlu0 %v4561
    %v4563 = vpop.xlane.xlu0 %4562
    %v4564 = vsel %vm74, %v4524, 0.0
    %4565 = vadd.xlane.f32.xlu0 %v4564
    %v4566 = vpop.xlane.xlu0 %4565
    %v4567 = vsel %vm74, %v4525, 0.0
    %4568 = vadd.xlane.f32.xlu0 %v4567
    %v4569 = vpop.xlane.xlu0 %4568
    %v4570 = vsel %vm74, %v4526, 0.0
    %4571 = vadd.xlane.f32.xlu0 %v4570
    %v4572 = vpop.xlane.xlu0 %4571
    %v4573 = vsel %vm74, %v4527, 0.0
    %4574 = vadd.xlane.f32.xlu0 %v4573
    %v4575 = vpop.xlane.xlu0 %4574
    %v4576 = vmul.f32 %v4530, %v1627
    %v4577 = vmul.f32 %v4533, %v1627
    %v4578 = vmul.f32 %v4536, %v1627
    %v4579 = vmul.f32 %v4539, %v1627
    %v4580 = vmul.f32 %v4542, %v1627
    %v4581 = vmul.f32 %v4545, %v1627
    %v4582 = vmul.f32 %v4548, %v1627
    %v4583 = vmul.f32 %v4551, %v1627
    %v4584 = vmul.f32 %v4554, %v1627
    %v4585 = vmul.f32 %v4557, %v1627
    %v4586 = vmul.f32 %v4560, %v1627
    %v4587 = vmul.f32 %v4563, %v1627
    %v4588 = vmul.f32 %v4566, %v1627
    %v4589 = vmul.f32 %v4569, %v1627
    %v4590 = vmul.f32 %v4572, %v1627
    %v4591 = vmul.f32 %v4575, %v1627
    %v4592 = vsub.f32 %v4512, %v4576
    %v4593 = vsub.f32 %v4513, %v4577
    %v4594 = vsub.f32 %v4514, %v4578
    %v4595 = vsub.f32 %v4515, %v4579
    %v4596 = vsub.f32 %v4516, %v4580
    %v4597 = vsub.f32 %v4517, %v4581
    %v4598 = vsub.f32 %v4518, %v4582
    %v4599 = vsub.f32 %v4519, %v4583
    %v4600 = vsub.f32 %v4520, %v4584
    %v4601 = vsub.f32 %v4521, %v4585
    %v4602 = vsub.f32 %v4522, %v4586
    %v4603 = vsub.f32 %v4523, %v4587
    %v4604 = vsub.f32 %v4524, %v4588
    %v4605 = vsub.f32 %v4525, %v4589
    %v4606 = vsub.f32 %v4526, %v4590
    %v4607 = vsub.f32 %v4527, %v4591
    %v4608 = vmul.f32 %v4592, %v4592
    %v4609 = vmul.f32 %v4593, %v4593
    %v4610 = vmul.f32 %v4594, %v4594
    %v4611 = vmul.f32 %v4595, %v4595
    %v4612 = vmul.f32 %v4596, %v4596
    %v4613 = vmul.f32 %v4597, %v4597
    %v4614 = vmul.f32 %v4598, %v4598
    %v4615 = vmul.f32 %v4599, %v4599
    %v4616 = vmul.f32 %v4600, %v4600
    %v4617 = vmul.f32 %v4601, %v4601
    %v4618 = vmul.f32 %v4602, %v4602
    %v4619 = vmul.f32 %v4603, %v4603
    %v4620 = vmul.f32 %v4604, %v4604
    %v4621 = vmul.f32 %v4605, %v4605
    %v4622 = vmul.f32 %v4606, %v4606
    %v4623 = vmul.f32 %v4607, %v4607
    %v4624 = vsel %vm74, %v4608, 0.0
    %4625 = vadd.xlane.f32.xlu0 %v4624
    %v4626 = vpop.xlane.xlu0 %4625
    %v4627 = vsel %vm74, %v4609, 0.0
    %4628 = vadd.xlane.f32.xlu0 %v4627
    %v4629 = vpop.xlane.xlu0 %4628
    %v4630 = vsel %vm74, %v4610, 0.0
    %4631 = vadd.xlane.f32.xlu0 %v4630
    %v4632 = vpop.xlane.xlu0 %4631
    %v4633 = vsel %vm74, %v4611, 0.0
    %4634 = vadd.xlane.f32.xlu0 %v4633
    %v4635 = vpop.xlane.xlu0 %4634
    %v4636 = vsel %vm74, %v4612, 0.0
    %4637 = vadd.xlane.f32.xlu0 %v4636
    %v4638 = vpop.xlane.xlu0 %4637
    %v4639 = vsel %vm74, %v4613, 0.0
    %4640 = vadd.xlane.f32.xlu0 %v4639
    %v4641 = vpop.xlane.xlu0 %4640
    %v4642 = vsel %vm74, %v4614, 0.0
    %4643 = vadd.xlane.f32.xlu0 %v4642
    %v4644 = vpop.xlane.xlu0 %4643
    %v4645 = vsel %vm74, %v4615, 0.0
    %4646 = vadd.xlane.f32.xlu0 %v4645
    %v4647 = vpop.xlane.xlu0 %4646
    %v4648 = vsel %vm74, %v4616, 0.0
    %4649 = vadd.xlane.f32.xlu0 %v4648
    %v4650 = vpop.xlane.xlu0 %4649
    %v4651 = vsel %vm74, %v4617, 0.0
    %4652 = vadd.xlane.f32.xlu0 %v4651
    %v4653 = vpop.xlane.xlu0 %4652
    %v4654 = vsel %vm74, %v4618, 0.0
    %4655 = vadd.xlane.f32.xlu0 %v4654
    %v4656 = vpop.xlane.xlu0 %4655
    %v4657 = vsel %vm74, %v4619, 0.0
    %4658 = vadd.xlane.f32.xlu0 %v4657
    %v4659 = vpop.xlane.xlu0 %4658
    %v4660 = vsel %vm74, %v4620, 0.0
    %4661 = vadd.xlane.f32.xlu0 %v4660
    %v4662 = vpop.xlane.xlu0 %4661
    %v4663 = vsel %vm74, %v4621, 0.0
    %4664 = vadd.xlane.f32.xlu0 %v4663
    %v4665 = vpop.xlane.xlu0 %4664
    %v4666 = vsel %vm74, %v4622, 0.0
    %4667 = vadd.xlane.f32.xlu0 %v4666
    %v4668 = vpop.xlane.xlu0 %4667
    %v4669 = vsel %vm74, %v4623, 0.0
    %4670 = vadd.xlane.f32.xlu0 %v4669
    %v4671 = vpop.xlane.xlu0 %4670
    %v4672 = vmul.f32 %v4626, %v1627
    %v4673 = vmul.f32 %v4629, %v1627
    %v4674 = vmul.f32 %v4632, %v1627
    %v4675 = vmul.f32 %v4635, %v1627
    %v4676 = vmul.f32 %v4638, %v1627
    %v4677 = vmul.f32 %v4641, %v1627
    %v4678 = vmul.f32 %v4644, %v1627
    %v4679 = vmul.f32 %v4647, %v1627
    %v4680 = vmul.f32 %v4650, %v1627
    %v4681 = vmul.f32 %v4653, %v1627
    %v4682 = vmul.f32 %v4656, %v1627
    %v4683 = vmul.f32 %v4659, %v1627
    %v4684 = vmul.f32 %v4662, %v1627
    %v4685 = vmul.f32 %v4665, %v1627
    %v4686 = vmul.f32 %v4668, %v1627
    %v4687 = vmul.f32 %v4671, %v1627
    %v4688 = vadd.f32 %v4672, 1e-05
    %v4689 = vadd.f32 %v4673, 1e-05
    %v4690 = vadd.f32 %v4674, 1e-05
    %v4691 = vadd.f32 %v4675, 1e-05
    %v4692 = vadd.f32 %v4676, 1e-05
    %v4693 = vadd.f32 %v4677, 1e-05
    %v4694 = vadd.f32 %v4678, 1e-05
    %v4695 = vadd.f32 %v4679, 1e-05
    %v4696 = vadd.f32 %v4680, 1e-05
    %v4697 = vadd.f32 %v4681, 1e-05
    %v4698 = vadd.f32 %v4682, 1e-05
    %v4699 = vadd.f32 %v4683, 1e-05
    %v4700 = vadd.f32 %v4684, 1e-05
    %v4701 = vadd.f32 %v4685, 1e-05
    %v4702 = vadd.f32 %v4686, 1e-05
    %v4703 = vadd.f32 %v4687, 1e-05
    %v4704 = vrsqrt.pop %v4688
    %v4705 = vrsqrt.pop %v4689
    %v4706 = vrsqrt.pop %v4690
    %v4707 = vrsqrt.pop %v4691
    %v4708 = vrsqrt.pop %v4692
    %v4709 = vrsqrt.pop %v4693
    %v4710 = vrsqrt.pop %v4694
    %v4711 = vrsqrt.pop %v4695
    %v4712 = vrsqrt.pop %v4696
    %v4713 = vrsqrt.pop %v4697
    %v4714 = vrsqrt.pop %v4698
    %v4715 = vrsqrt.pop %v4699
    %v4716 = vrsqrt.pop %v4700
    %v4717 = vrsqrt.pop %v4701
    %v4718 = vrsqrt.pop %v4702
    %v4719 = vrsqrt.pop %v4703
    %v4720 = vmul.f32 %v4592, %v4704
    %v4721 = vmul.f32 %v4593, %v4705
    %v4722 = vmul.f32 %v4594, %v4706
    %v4723 = vmul.f32 %v4595, %v4707
    %v4724 = vmul.f32 %v4596, %v4708
    %v4725 = vmul.f32 %v4597, %v4709
    %v4726 = vmul.f32 %v4598, %v4710
    %v4727 = vmul.f32 %v4599, %v4711
    %v4728 = vmul.f32 %v4600, %v4712
    %v4729 = vmul.f32 %v4601, %v4713
    %v4730 = vmul.f32 %v4602, %v4714
    %v4731 = vmul.f32 %v4603, %v4715
    %v4732 = vmul.f32 %v4604, %v4716
    %v4733 = vmul.f32 %v4605, %v4717
    %v4734 = vmul.f32 %v4606, %v4718
    %v4735 = vmul.f32 %v4607, %v4719
    %v4736 = vlaneseq
    %v4737 = vshrl.u32 %v4736, 7
    %v4738 = vsub.s32 6, %v4737
    %v4739 = vrot.slane %v2415, %v4738
    %v4740 = vmul.f32 %v4720, %v4739
    %v4741 = vmul.f32 %v4721, %v4739
    %v4742 = vmul.f32 %v4722, %v4739
    %v4743 = vmul.f32 %v4723, %v4739
    %v4744 = vmul.f32 %v4724, %v4739
    %v4745 = vmul.f32 %v4725, %v4739
    %v4746 = vmul.f32 %v4726, %v4739
    %v4747 = vmul.f32 %v4727, %v4739
    %v4748 = vmul.f32 %v4728, %v4739
    %v4749 = vmul.f32 %v4729, %v4739
    %v4750 = vmul.f32 %v4730, %v4739
    %v4751 = vmul.f32 %v4731, %v4739
    %v4752 = vmul.f32 %v4732, %v4739
    %v4753 = vmul.f32 %v4733, %v4739
    %v4754 = vmul.f32 %v4734, %v4739
    %v4755 = vmul.f32 %v4735, %v4739
    %v4756 = vlaneseq
    %v4757 = vshrl.u32 %v4756, 7
    %v4758 = vsub.s32 7, %v4757
    %v4759 = vrot.slane %v2415, %v4758
    %v4760 = vadd.f32 %v4740, %v4759
    %v4761 = vadd.f32 %v4741, %v4759
    %v4762 = vadd.f32 %v4742, %v4759
    %v4763 = vadd.f32 %v4743, %v4759
    %v4764 = vadd.f32 %v4744, %v4759
    %v4765 = vadd.f32 %v4745, %v4759
    %v4766 = vadd.f32 %v4746, %v4759
    %v4767 = vadd.f32 %v4747, %v4759
    %v4768 = vadd.f32 %v4748, %v4759
    %v4769 = vadd.f32 %v4749, %v4759
    %v4770 = vadd.f32 %v4750, %v4759
    %v4771 = vadd.f32 %v4751, %v4759
    %v4772 = vadd.f32 %v4752, %v4759
    %v4773 = vadd.f32 %v4753, %v4759
    %v4774 = vadd.f32 %v4754, %v4759
    %v4775 = vadd.f32 %v4755, %v4759
    %v4776 = vadd.f32 %v4760, %v37
    %v4777 = vadd.f32 %v4761, %v38
    %v4778 = vadd.f32 %v4762, %v39
    %v4779 = vadd.f32 %v4763, %v40
    %v4780 = vadd.f32 %v4764, %v41
    %v4781 = vadd.f32 %v4765, %v42
    %v4782 = vadd.f32 %v4766, %v43
    %v4783 = vadd.f32 %v4767, %v44
    %v4784 = vadd.f32 %v4768, %v45
    %v4785 = vadd.f32 %v4769, %v46
    %v4786 = vadd.f32 %v4770, %v47
    %v4787 = vadd.f32 %v4771, %v48
    %v4788 = vadd.f32 %v4772, %v49
    %v4789 = vadd.f32 %v4773, %v50
    %v4790 = vadd.f32 %v4774, %v51
    %v4791 = vadd.f32 %v4775, %v52
    %v4792 = vld [vmem:[%s6] sm:$0xf]
    %v4793 = vld [vmem:[%s6 + $0x4] sm:$0xf]
    %v4794 = vld [vmem:[%s6 + $0x8] sm:$0xf]
    %v4795 = vld [vmem:[%s6 + $0xc] sm:$0xf]
    %v4796 = vld [vmem:[%s6 + $0x10] sm:$0xf]
    %v4797 = vld [vmem:[%s6 + $0x14] sm:$0xf]
    %v4798 = vld [vmem:[%s6 + $0x18] sm:$0xf]
    %v4799 = vpack.c.bf16 %v4777, %v4776
    %v4800 = vpack.c.bf16 %v4779, %v4778
    %v4801 = vpack.c.bf16 %v4781, %v4780
    %v4802 = vpack.c.bf16 %v4783, %v4782
    %v4803 = vpack.c.bf16 %v4785, %v4784
    %v4804 = vpack.c.bf16 %v4787, %v4786
    %v4805 = vpack.c.bf16 %v4789, %v4788
    %v4806 = vpack.c.bf16 %v4791, %v4790
    %v4814 = vunpack.c.l.b16 %v4792
    %v4815 = vunpack.c.l.b16 %v4793
    %v4816 = vunpack.c.l.b16 %v4794
    %v4817 = vunpack.c.l.b16 %v4795
    %v4818 = vunpack.c.l.b16 %v4796
    %v4819 = vunpack.c.l.b16 %v4797
    %v4820 = vunpack.c.l.b16 %v4798
    %v4821 = vpack.c.b16 %v4815, %v4814
    %v4822 = vpack.c.b16 %v4817, %v4816
    %v4823 = vpack.c.b16 %v4819, %v4818
    %v4824 = vpack.c.b16 %v4820, %v4820
    %4829 = vmatprep.subr.bf16.mxu0 0
    %4830 = vmatpush1.bf16.msra.mxu0 %v4799
    %4831 = vmatprep.subr.bf16.mxu0 0
    %4832 = vmatpush1.bf16.msra.mxu0 %v4800
    %4833 = vmatprep.subr.bf16.mxu0 0
    %4834 = vmatpush1.bf16.msra.mxu0 %v4801
    %4835 = vmatprep.subr.bf16.mxu0 0
    %4836 = vmatpush1.bf16.msra.mxu0 %v4802
    %4837 = vmatprep.subr.bf16.mxu0 0
    %4838 = vmatpush1.bf16.msra.mxu0 %v4803
    %4839 = vmatprep.subr.bf16.mxu0 0
    %4840 = vmatpush1.bf16.msra.mxu0 %v4804
    %4841 = vmatprep.subr.bf16.mxu0 0
    %4842 = vmatpush1.bf16.msra.mxu0 %v4805
    %4843 = vmatprep.subr.bf16.mxu0 0
    %4844 = vmatpush1.bf16.msra.mxu0 %v4806
    %4845 = vmatprep.subr.bf16.mxu0 0
    %4846 = vmatpush1.bf16.msra.mxu0 0
    %4847 = vmatprep.subr.bf16.mxu0 0
    %4848 = vmatpush1.bf16.msra.mxu0 0
    %4849 = vmatprep.subr.bf16.mxu0 0
    %4850 = vmatpush1.bf16.msra.mxu0 0
    %4851 = vmatprep.subr.bf16.mxu0 0
    %4852 = vmatpush1.bf16.msra.mxu0 0
    %4853 = vmatprep.subr.bf16.mxu0 0
    %4854 = vmatpush1.bf16.msra.mxu0 0
    %4855 = vmatprep.subr.bf16.mxu0 0
    %4856 = vmatpush1.bf16.msra.mxu0 0
    %4857 = vmatprep.subr.bf16.mxu0 0
    %4858 = vmatpush1.bf16.msra.mxu0 0
    %4859 = vmatprep.subr.bf16.mxu0 0
    %4860 = vmatpush1.bf16.msra.mxu0 0
    %4861 = vmatprep.mubr.bf16.mxu0 0
    %4862 = vmatmul.mubr.bf16.gmra.mrb[0].mxu0 %v4821
    %v4863 = vpop.f32.mrb[0].mxu0
    %v4864 = vadd.f32 0.0, %v4863
    %v4865 = vpop.f32.mrb[0].mxu0
    %v4866 = vpop.f32.mrb[0].mxu0
    %v4867 = vadd.f32 0.0, %v4866
    %v4868 = vpop.f32.mrb[0].mxu0
    %4869 = vmatprep.mubr.bf16.mxu0 0
    %4870 = vmatmul.mubr.bf16.gmra.mrb[0].mxu0 %v4822
    %v4871 = vpop.f32.mrb[0].mxu0
    %v4872 = vadd.f32 0.0, %v4871
    %v4873 = vpop.f32.mrb[0].mxu0
    %v4874 = vpop.f32.mrb[0].mxu0
    %v4875 = vadd.f32 0.0, %v4874
    %v4876 = vpop.f32.mrb[0].mxu0
    %4877 = vmatprep.mubr.bf16.mxu0 0
    %4878 = vmatmul.mubr.bf16.gmra.mrb[0].mxu0 %v4823
    %v4879 = vpop.f32.mrb[0].mxu0
    %v4880 = vadd.f32 0.0, %v4879
    %v4881 = vpop.f32.mrb[0].mxu0
    %v4882 = vpop.f32.mrb[0].mxu0
    %v4883 = vadd.f32 0.0, %v4882
    %v4884 = vpop.f32.mrb[0].mxu0
    %4885 = vmatprep.mubr.bf16.mxu0 0
    %4886 = vmatmul.mubr.bf16.gmra.mrb[0].mxu0 %v4824
    %v4887 = vpop.f32.mrb[0].mxu0
    %v4888 = vadd.f32 0.0, %v4887
    %v4889 = vpop.f32.mrb[0].mxu0
    %v4890 = vpop.f32.mrb[0].mxu0
    %v4891 = vpop.f32.mrb[0].mxu0
    %4892 = vdwg.mxu0
    %v4893 = vld [vmem:[%s9] sm:$0xff]
    %v4894 = vld [vmem:[%s7] sm:$0xf]
    %v4895 = vld [vmem:[%s7 + $0x4] sm:$0xf]
    %v4896 = vpack.c.bf16 %v4867, %v4864
    %v4897 = vpack.c.bf16 %v4875, %v4872
    %v4898 = vpack.c.bf16 %v4883, %v4880
    %v4899 = vpack.c.bf16 %v4888, %v4888
    %v4900 = vlaneseq
    %v4901 = vshrl.u32 %v4900, 7
    %v4902 = vsub.s32 0, %v4901
    %v4903 = vrot.slane %v4893, %v4902
    %v4906 = vunpack.c.l.b16 %v4894
    %v4907 = vunpack.c.l.b16 %v4895
    %v4908 = vpack.c.b16 %v4907, %v4906
    %v4911 = vsel %vm74, %v4896, 0
    %v4914 = vsel %vm74, %v4897, 0
    %v4917 = vsel %vm74, %v4898, 0
    %v4920 = vsel %vm74, %v4899, 0
    %4922 = vmatprep.subr.bf16.mxu0 0
    %4923 = vmatpush1.bf16.msra.mxu0 %v4908
    %4924 = vmatprep.subr.bf16.mxu0 0
    %4925 = vmatpush1.bf16.msra.mxu0 0
    %4926 = vmatprep.subr.bf16.mxu0 0
    %4927 = vmatpush1.bf16.msra.mxu0 0
    %4928 = vmatprep.subr.bf16.mxu0 0
    %4929 = vmatpush1.bf16.msra.mxu0 0
    %4930 = vmatprep.subr.bf16.mxu0 0
    %4931 = vmatpush1.bf16.msra.mxu0 0
    %4932 = vmatprep.subr.bf16.mxu0 0
    %4933 = vmatpush1.bf16.msra.mxu0 0
    %4934 = vmatprep.subr.bf16.mxu0 0
    %4935 = vmatpush1.bf16.msra.mxu0 0
    %4936 = vmatprep.subr.bf16.mxu0 0
    %4937 = vmatpush1.bf16.msra.mxu0 0
    %4938 = vmatprep.subr.bf16.mxu0 0
    %4939 = vmatpush1.bf16.msra.mxu0 0
    %4940 = vmatprep.subr.bf16.mxu0 0
    %4941 = vmatpush1.bf16.msra.mxu0 0
    %4942 = vmatprep.subr.bf16.mxu0 0
    %4943 = vmatpush1.bf16.msra.mxu0 0
    %4944 = vmatprep.subr.bf16.mxu0 0
    %4945 = vmatpush1.bf16.msra.mxu0 0
    %4946 = vmatprep.subr.bf16.mxu0 0
    %4947 = vmatpush1.bf16.msra.mxu0 0
    %4948 = vmatprep.subr.bf16.mxu0 0
    %4949 = vmatpush1.bf16.msra.mxu0 0
    %4950 = vmatprep.subr.bf16.mxu0 0
    %4951 = vmatpush1.bf16.msra.mxu0 0
    %4952 = vmatprep.subr.bf16.mxu0 0
    %4953 = vmatpush1.bf16.msra.mxu0 0
    %4954 = vmatprep.mubr.bf16.mxu0 0
    %4955 = vmatmul.mubr.bf16.gmra.mrb[0].mxu0 %v4911
    %v4956 = vpop.f32.mrb[0].mxu0
    %v4957 = vadd.f32 %v4903, %v4956
    %v4958 = vpop.f32.mrb[0].mxu0
    %v4959 = vpop.f32.mrb[0].mxu0
    %v4960 = vadd.f32 %v4903, %v4959
    %v4961 = vpop.f32.mrb[0].mxu0
    %4962 = vmatprep.mubr.bf16.mxu0 0
    %4963 = vmatmul.mubr.bf16.gmra.mrb[0].mxu0 %v4914
    %v4964 = vpop.f32.mrb[0].mxu0
    %v4965 = vadd.f32 %v4903, %v4964
    %v4966 = vpop.f32.mrb[0].mxu0
    %v4967 = vpop.f32.mrb[0].mxu0
    %v4968 = vadd.f32 %v4903, %v4967
    %v4969 = vpop.f32.mrb[0].mxu0
    %4970 = vmatprep.mubr.bf16.mxu0 0
    %4971 = vmatmul.mubr.bf16.gmra.mrb[0].mxu0 %v4917
    %v4972 = vpop.f32.mrb[0].mxu0
    %v4973 = vadd.f32 %v4903, %v4972
    %v4974 = vpop.f32.mrb[0].mxu0
    %v4975 = vpop.f32.mrb[0].mxu0
    %v4976 = vadd.f32 %v4903, %v4975
    %v4977 = vpop.f32.mrb[0].mxu0
    %4978 = vmatprep.mubr.bf16.mxu0 0
    %4979 = vmatmul.mubr.bf16.gmra.mrb[0].mxu0 %v4920
    %v4980 = vpop.f32.mrb[0].mxu0
    %v4981 = vadd.f32 %v4903, %v4980
    %v4982 = vpop.f32.mrb[0].mxu0
    %v4983 = vpop.f32.mrb[0].mxu0
    %v4984 = vpop.f32.mrb[0].mxu0
    %4985 = vdwg.mxu0
    %v4986 = vmax.f32 %v4957, 0.0
    %v4987 = vmax.f32 %v4960, 0.0
    %v4988 = vmax.f32 %v4965, 0.0
    %v4989 = vmax.f32 %v4968, 0.0
    %v4990 = vmax.f32 %v4973, 0.0
    %v4991 = vmax.f32 %v4976, 0.0
    %v4992 = vmax.f32 %v4981, 0.0
    %v4993 = vld [vmem:[%s8] sm:$0xf]
    %v4994 = vld [vmem:[%s8 + $0x4] sm:$0xf]
    %v4995 = vld [vmem:[%s8 + $0x8] sm:$0xf]
    %v4996 = vld [vmem:[%s8 + $0xc] sm:$0xf]
    %v4997 = vld [vmem:[%s8 + $0x10] sm:$0xf]
    %v4998 = vld [vmem:[%s8 + $0x14] sm:$0xf]
    %v4999 = vld [vmem:[%s8 + $0x18] sm:$0xf]
    %v5000 = vld [vmem:[%s8 + $0x1c] sm:$0xf]
    %v5001 = vpack.c.bf16 %v4987, %v4986
    %v5002 = vpack.c.bf16 %v4989, %v4988
    %v5003 = vpack.c.bf16 %v4991, %v4990
    %v5004 = vpack.c.bf16 %v4992, %v4992
    %v5005 = vlaneseq
    %v5006 = vshrl.u32 %v5005, 7
    %v5007 = vsub.s32 1, %v5006
    %v5008 = vrot.slane %v4893, %v5007
    %v5017 = vunpack.c.l.b16 %v4993
    %v5018 = vunpack.c.l.b16 %v4994
    %v5019 = vunpack.c.l.b16 %v4995
    %v5020 = vunpack.c.l.b16 %v4996
    %v5021 = vunpack.c.l.b16 %v4997
    %v5022 = vunpack.c.l.b16 %v4998
    %v5023 = vunpack.c.l.b16 %v4999
    %v5024 = vunpack.c.l.b16 %v5000
    %v5025 = vpack.c.b16 %v5018, %v5017
    %v5026 = vpack.c.b16 %v5020, %v5019
    %v5027 = vpack.c.b16 %v5022, %v5021
    %v5028 = vpack.c.b16 %v5024, %v5023
    %v5034 = vsel %vm302, %v5001, 0
    %v5037 = vsel %vm302, %v5002, 0
    %v5040 = vsel %vm302, %v5003, 0
    %v5043 = vsel %vm302, %v5004, 0
    %5045 = vmatprep.subr.bf16.mxu0 0
    %5046 = vmatpush1.bf16.msra.mxu0 %v5025
    %5047 = vmatprep.subr.bf16.mxu0 0
    %5048 = vmatpush1.bf16.msra.mxu0 %v5026
    %5049 = vmatprep.subr.bf16.mxu0 0
    %5050 = vmatpush1.bf16.msra.mxu0 %v5027
    %5051 = vmatprep.subr.bf16.mxu0 0
    %5052 = vmatpush1.bf16.msra.mxu0 %v5028
    %5053 = vmatprep.subr.bf16.mxu0 0
    %5054 = vmatpush1.bf16.msra.mxu0 0
    %5055 = vmatprep.subr.bf16.mxu0 0
    %5056 = vmatpush1.bf16.msra.mxu0 0
    %5057 = vmatprep.subr.bf16.mxu0 0
    %5058 = vmatpush1.bf16.msra.mxu0 0
    %5059 = vmatprep.subr.bf16.mxu0 0
    %5060 = vmatpush1.bf16.msra.mxu0 0
    %5061 = vmatprep.subr.bf16.mxu0 0
    %5062 = vmatpush1.bf16.msra.mxu0 0
    %5063 = vmatprep.subr.bf16.mxu0 0
    %5064 = vmatpush1.bf16.msra.mxu0 0
    %5065 = vmatprep.subr.bf16.mxu0 0
    %5066 = vmatpush1.bf16.msra.mxu0 0
    %5067 = vmatprep.subr.bf16.mxu0 0
    %5068 = vmatpush1.bf16.msra.mxu0 0
    %5069 = vmatprep.subr.bf16.mxu0 0
    %5070 = vmatpush1.bf16.msra.mxu0 0
    %5071 = vmatprep.subr.bf16.mxu0 0
    %5072 = vmatpush1.bf16.msra.mxu0 0
    %5073 = vmatprep.subr.bf16.mxu0 0
    %5074 = vmatpush1.bf16.msra.mxu0 0
    %5075 = vmatprep.subr.bf16.mxu0 0
    %5076 = vmatpush1.bf16.msra.mxu0 0
    %5077 = vmatprep.mubr.bf16.mxu0 0
    %5078 = vmatmul.mubr.bf16.gmra.mrb[0].mxu0 %v5034
    %v5079 = vpop.f32.mrb[0].mxu0
    %v5080 = vadd.f32 %v5008, %v5079
    %v5081 = vpop.f32.mrb[0].mxu0
    %v5082 = vpop.f32.mrb[0].mxu0
    %v5083 = vadd.f32 %v5008, %v5082
    %v5084 = vpop.f32.mrb[0].mxu0
    %5085 = vmatprep.mubr.bf16.mxu0 0
    %5086 = vmatmul.mubr.bf16.gmra.mrb[0].mxu0 %v5037
    %v5087 = vpop.f32.mrb[0].mxu0
    %v5088 = vadd.f32 %v5008, %v5087
    %v5089 = vpop.f32.mrb[0].mxu0
    %v5090 = vpop.f32.mrb[0].mxu0
    %v5091 = vadd.f32 %v5008, %v5090
    %v5092 = vpop.f32.mrb[0].mxu0
    %5093 = vmatprep.mubr.bf16.mxu0 0
    %5094 = vmatmul.mubr.bf16.gmra.mrb[0].mxu0 %v5040
    %v5095 = vpop.f32.mrb[0].mxu0
    %v5096 = vadd.f32 %v5008, %v5095
    %v5097 = vpop.f32.mrb[0].mxu0
    %v5098 = vpop.f32.mrb[0].mxu0
    %v5099 = vadd.f32 %v5008, %v5098
    %v5100 = vpop.f32.mrb[0].mxu0
    %5101 = vmatprep.mubr.bf16.mxu0 0
    %5102 = vmatmul.mubr.bf16.gmra.mrb[0].mxu0 %v5043
    %v5103 = vpop.f32.mrb[0].mxu0
    %v5104 = vadd.f32 %v5008, %v5103
    %v5105 = vpop.f32.mrb[0].mxu0
    %v5106 = vpop.f32.mrb[0].mxu0
    %v5107 = vpop.f32.mrb[0].mxu0
    %5108 = vdwg.mxu0
    %5109 = vst [vmem:[#allocation2] sm:$0xff] %v5080
    %5110 = vst [vmem:[#allocation2 + $0x8] sm:$0xff] %v5083
    %5111 = vst [vmem:[#allocation2 + $0x10] sm:$0xff] %v5088
    %5112 = vst [vmem:[#allocation2 + $0x18] sm:$0xff] %v5091
    %5113 = vst [vmem:[#allocation2 + $0x20] sm:$0xff] %v5096
    %5114 = vst [vmem:[#allocation2 + $0x28] sm:$0xff] %v5099
    %5115 = vst [vmem:[#allocation2 + $0x30] sm:$0xff] %v5104
    // Predicated region
    $region42: #{tpu_custom_call.1} parent=1 // pred_check
      _
    $region43: #{tpu_custom_call.1} parent=1 // pred_check_branch
      %5117 = sbr.rel (0) target = $region45
    $region44: #{tpu_custom_call.1} parent=1 // pred_region
      %s5119 = ssub.s32 896, 896
      %5120 = vsyncadd [#allocation3], %s5119
      %s5121 = sshll.u32 [#allocation2], 4
      %s5122 = int_to_ptr.vmem [resolvable:$true] %s5121
      %5127 = dma.vmem_to_hbm [thread:$0]  %s5122, 896, %s10, [#allocation3], 128, 128, 8
    $region45: #{tpu_custom_call.1} parent=1 // pred_fallthru
      _
    // Predicated region
    $region46: #{tpu_custom_call.1} parent=1 // pred_check
      _
    $region47: #{tpu_custom_call.1} parent=1 // pred_check_branch
      %5129 = sbr.rel (0) target = $region49
    $region48: #{tpu_custom_call.1} parent=1 // pred_region
      %5130 = dma.done [#allocation3], 896
    $region49: #{tpu_custom_call.1} parent=1 // pred_fallthru
      _
    %5131 = vsyncpa [#allocation3], 1

</llo_original>
